<compile_context>
chip_gen: v7x
topology: tpu7x:2x2x1
jax: 0.10.0
libtpu: 0.0.40
codegen_flags: <defaults>
</compile_context>

<pallas_src>
import functools

import numpy as np
import jax
import jax.numpy as jnp
from jax import lax
from jax.experimental import pallas as pl
from jax.experimental.pallas import tpu as pltpu


def _round_up(x, m):
    return (x + m - 1) // m * m


def _tpu_chip_info():
    """Best-effort chip-generation info (never raises)."""
    kind = ""
    try:
        kind = jax.devices()[0].device_kind.lower()
    except Exception:
        pass
    is_v7 = "v7" in kind
    is_v6 = "v6" in kind
    num_tc = 2 if is_v7 else 1                       # TensorCores per chip
    vmem_bytes = (64 if is_v7 else 128) * 2 ** 20    # physical VMEM per TC
    try:
        info = pltpu.get_tpu_info()
        cap = getattr(info, "vmem_capacity_bytes", None)
        if cap:
            vmem_bytes = int(cap)
    except Exception:
        pass
    return {"kind": kind, "num_tc": num_tc, "vmem_bytes": vmem_bytes,
            "mxu_256": bool(is_v6 or is_v7)}


# ----------------------------------------------------------------------------
# Pallas kernel factory: recurrent part of one TLSTM layer.
# grid = (batch_blocks, time_blocks); time is the serial recurrence axis.
# h/c live in resident output blocks carried across the time-block axis.
# ----------------------------------------------------------------------------
@functools.lru_cache(maxsize=None)
def make_tlstm_kernel(fused, t_blk, Hp, seq_len, unroll, needs_mask):

    def kernel(*refs):
        if fused:
            (xw_ref, tmap_ref, h0_ref, c0_ref, u_ref, bd_ref,
             out_ref, hn_ref, cn_ref, tm1_ref, hc_ref) = refs
        else:
            (xw_ref, tmap_ref, h0_ref, c0_ref, uh_ref, wd_ref, bd_ref,
             out_ref, hn_ref, cn_ref, tm1_ref) = refs

        s = pl.program_id(1)                       # time-block index (serial)

        @pl.when(s == 0)
        def _():
            hn_ref[...] = h0_ref[...]
            cn_ref[...] = c0_ref[...]

        # Hoisted lane-broadcast of (T - 1): once per grid step, not per t.
        tm1_ref[...] = jnp.broadcast_to(tmap_ref[...], tm1_ref.shape) - 1.0

        bd = bd_ref[...]                           # (1, Hp) f32
        if fused:
            u = u_ref[...]                         # (2Hp, 5Hp) [[Uh,0],[0,Wd]]
            w_dtype = u.dtype
            # Persistent [h | c] operand (no per-step concatenate).
            hc_ref[:, :Hp] = hn_ref[...].astype(w_dtype)
            hc_ref[:, Hp:] = cn_ref[...].astype(w_dtype)
        else:
            uh = uh_ref[...]                       # (Hp, 4Hp)
            wd = wd_ref[...]                       # (Hp, Hp)
            w_dtype = uh.dtype

        def step(t, carry):
            h, c = carry                           # (B_BLK, Hp) f32 state
            if fused:
                rec = jnp.dot(hc_ref[...], u,
                              preferred_element_type=jnp.float32)  # (B,5Hp)
                rec4 = rec[:, :4 * Hp]
                dec = rec[:, 4 * Hp:]
            else:
                rec4 = jnp.dot(h.astype(w_dtype), uh,
                               preferred_element_type=jnp.float32)  # (B,4Hp)
                dec = jnp.dot(c.astype(w_dtype), wd,
                              preferred_element_type=jnp.float32)   # (B,Hp)

            # Time-aware decomposition: c - C_ST + T*C_ST == c + (T-1)*C_ST
            c_st = jnp.tanh(dec + bd)
            c_dec = c + tm1_ref[t] * c_st

            # Fused gate pre-activations [i | f | o | g]; x-projection hoisted.
            gates = xw_ref[t].astype(jnp.float32) + rec4
            i_t = jax.nn.sigmoid(gates[:, 0 * Hp:1 * Hp])
            f_t = jax.nn.sigmoid(gates[:, 1 * Hp:2 * Hp])
            o_t = jax.nn.sigmoid(gates[:, 2 * Hp:3 * Hp])
            g_t = jnp.tanh(gates[:, 3 * Hp:4 * Hp])

            c_new = f_t * c_dec + i_t * g_t
            h_new = o_t * jnp.tanh(c_new)

            if needs_mask:
                # Padded time-tail: keep the carried state unchanged.
                valid = (s * t_blk + t) < seq_len
                h_new = jnp.where(valid, h_new, h)
                c_new = jnp.where(valid, c_new, c)

            out_ref[t] = h_new
            if fused:
                hc_ref[:, :Hp] = h_new.astype(w_dtype)
                hc_ref[:, Hp:] = c_new.astype(w_dtype)
            return (h_new, c_new)

        h, c = lax.fori_loop(0, t_blk, step, (hn_ref[...], cn_ref[...]),
                             unroll=unroll)
        hn_ref[...] = h
        cn_ref[...] = c

    return kernel


# ----------------------------------------------------------------------------
# Per-layer wrapper: hoisted projection + padding + pallas_call.
# ----------------------------------------------------------------------------
def tlstm_layer_pallas(x_sbd, tmap_sb1, h0, c0, packed, H, Hp, *, chip, fused,
                       compute_dtype, t_blk=None):
    S, B, _ = x_sbd.shape
    Bp = _round_up(B, 8)

    # Hoisted input projection over the whole sequence (MXU-friendly, no
    # recurrence dependence).  Stored in compute_dtype (bf16 halves HBM/VMEM).
    xw = jnp.einsum("sbd,dg->sbg", x_sbd.astype(compute_dtype), packed["wx"],
                    preferred_element_type=jnp.float32) + packed["bx"]
    xw = xw.astype(compute_dtype)                    # (S, B, 4Hp)

    # --- time blocking (pad + mask the tail instead of the t_blk=1 cliff) ---
    if t_blk is None:
        if S <= 64:
            t_blk = S
        else:
            t_blk = 64
            for cand in range(64, 7, -1):
                if S % cand == 0:
                    t_blk = cand
                    break
    t_blk = max(1, int(t_blk))
    Sp = -(-S // t_blk) * t_blk
    needs_mask = Sp != S

    pad_t, pad_b = Sp - S, Bp - B
    tmap = tmap_sb1
    if pad_t or pad_b:
        xw = jnp.pad(xw, ((0, pad_t), (0, pad_b), (0, 0)))
        tmap = jnp.pad(tmap, ((0, pad_t), (0, pad_b), (0, 0)),
                       constant_values=1.0)          # T=1 -> (T-1)=0, inert
    h0p = jnp.pad(h0.astype(jnp.float32), ((0, pad_b), (0, Hp - H)))
    c0p = jnp.pad(c0.astype(jnp.float32), ((0, pad_b), (0, Hp - H)))

    # --- batch blocking: only split when the chip has >1 TensorCore ---------
    split = chip["num_tc"] >= 2 and Bp >= 16 and Bp % 16 == 0
    b_blk = Bp // 2 if split else Bp
    grid = (Bp // b_blk, Sp // t_blk)

    # --- generation-aware VMEM budget ----------------------------------------
    f32b = 4
    wb = jnp.dtype(compute_dtype).itemsize
    est = (2 * t_blk * b_blk * 4 * Hp * wb           # xw (double-buffered)
           + 2 * t_blk * b_blk * 1 * f32b            # tmap
           + 2 * 2 * b_blk * Hp * f32b               # h0, c0
           + 2 * t_blk * b_blk * Hp * f32b           # out
           + 2 * 2 * b_blk * Hp * f32b               # carried h_n, c_n
           + t_blk * b_blk * Hp * f32b               # (T-1) scratch
           + b_blk * 2 * Hp * wb                     # hc scratch
           + 2 * Hp * f32b)                          # bd
    est += (2 * (2 * Hp) * (5 * Hp) * wb) if fused else (2 * 5 * Hp * Hp * wb)
    vmem_cap = max(int(0.75 * chip["vmem_bytes"]), 16 * 2 ** 20)
    vmem_limit = int(min(max(2 * est, 32 * 2 ** 20), vmem_cap))

    unroll = max(1, min(t_blk, 8))
    kernel = make_tlstm_kernel(bool(fused), int(t_blk), int(Hp), int(S),
                               int(unroll), bool(needs_mask))

    w_args = (packed["u"],) if fused else (packed["uh"], packed["wd"])
    operands = (xw, tmap, h0p, c0p) + w_args + (packed["bd"],)

    def run(single_buffer_weights, core_parallel):
        # Grid-invariant weight operands: one pipeline buffer (saves VMEM).
        inv_kw = ({"pipeline_mode": pl.Buffered(1)}
                  if single_buffer_weights else {})

        in_specs = [
            pl.BlockSpec((t_blk, b_blk, 4 * Hp), lambda b, s: (s, b, 0)),  # xw
            pl.BlockSpec((t_blk, b_blk, 1), lambda b, s: (s, b, 0)),       # T
            pl.BlockSpec((b_blk, Hp), lambda b, s: (b, 0)),                # h0
            pl.BlockSpec((b_blk, Hp), lambda b, s: (b, 0)),                # c0
        ]
        if fused:
            in_specs.append(pl.BlockSpec((2 * Hp, 5 * Hp),
                                         lambda b, s: (0, 0), **inv_kw))   # U
        else:
            in_specs.append(pl.BlockSpec((Hp, 4 * Hp),
                                         lambda b, s: (0, 0), **inv_kw))   # Uh
            in_specs.append(pl.BlockSpec((Hp, Hp),
                                         lambda b, s: (0, 0), **inv_kw))   # Wd
        in_specs.append(pl.BlockSpec((1, Hp), lambda b, s: (0, 0), **inv_kw))

        out_specs = [
            pl.BlockSpec((t_blk, b_blk, Hp), lambda b, s: (s, b, 0)),      # out
            pl.BlockSpec((b_blk, Hp), lambda b, s: (b, 0)),                # h_n
            pl.BlockSpec((b_blk, Hp), lambda b, s: (b, 0)),                # c_n
        ]

        scratch = [pltpu.VMEM((t_blk, b_blk, Hp), jnp.float32)]            # T-1
        if fused:
            scratch.append(pltpu.VMEM((b_blk, 2 * Hp), compute_dtype))     # [h|c]

        if split and core_parallel:
            sem = (pltpu.CORE_PARALLEL, pltpu.ARBITRARY)
        elif split:
            sem = ("parallel", "arbitrary")
        else:
            sem = ("arbitrary", "arbitrary")

        return pl.pallas_call(
            kernel,
            out_shape=(
                jax.ShapeDtypeStruct((Sp, Bp, Hp), jnp.float32),
                jax.ShapeDtypeStruct((Bp, Hp), jnp.float32),
                jax.ShapeDtypeStruct((Bp, Hp), jnp.float32),
            ),
            grid_spec=pltpu.PrefetchScalarGridSpec(
                num_scalar_prefetch=0, grid=grid,
                in_specs=in_specs, out_specs=out_specs,
                scratch_shapes=scratch),
            compiler_params=pltpu.CompilerParams(
                dimension_semantics=sem, vmem_limit_bytes=vmem_limit),
        )(*operands)

    # Preferred config first, then progressively safer fallbacks.
    attempts = ([(True, True), (True, False), (False, False)] if split
                else [(True, False), (False, False)])
    result, last_err = None, None
    for sb, cpar in attempts:
        try:
            cand = run(sb, cpar)
            jax.block_until_ready(cand)
            result = cand
            break
        except Exception as err:   # unsupported feature -> safer fallback
            last_err = err
    if result is None:
        raise last_err

    out, h_n, c_n = result
    return out[:S, :B, :H], h_n[:B, :H], c_n[:B, :H]


# ----------------------------------------------------------------------------
# Parameter construction & packing.
# ----------------------------------------------------------------------------
def init_linear(key, in_f, out_f, bias=True):
    k = 1.0 / np.sqrt(in_f)
    kw, kb = jax.random.split(key)
    W = jax.random.uniform(kw, (out_f, in_f), jnp.float32, -k, k)
    b = (jax.random.uniform(kb, (out_f,), jnp.float32, -k, k) if bias else None)
    return W, b


def init_tlstm_layer(key, input_size, hidden_size):
    keys = jax.random.split(key, 9)
    Wi, bi = init_linear(keys[0], input_size, hidden_size, True)
    Ui, _ = init_linear(keys[1], hidden_size, hidden_size, False)
    Wf, bf = init_linear(keys[2], input_size, hidden_size, True)
    Uf, _ = init_linear(keys[3], hidden_size, hidden_size, False)
    Wo, bo = init_linear(keys[4], input_size, hidden_size, True)
    Uo, _ = init_linear(keys[5], hidden_size, hidden_size, False)
    Wc, bc = init_linear(keys[6], input_size, hidden_size, True)
    Uc, _ = init_linear(keys[7], hidden_size, hidden_size, False)
    Wd, bd = init_linear(keys[8], hidden_size, hidden_size, True)
    # TODO(synk): W_t / b_t exist in the PyTorch module but are unused in forward().

    wx = jnp.concatenate([Wi.T, Wf.T, Wo.T, Wc.T], axis=1)      # (D, 4H)
    bx = jnp.concatenate([bi, bf, bo, bc], axis=0)[None, :]     # (1, 4H)
    uh = jnp.concatenate([Ui.T, Uf.T, Uo.T, Uc.T], axis=1)      # (H, 4H)
    wd = Wd.T                                                   # (H, H)
    bdr = bd[None, :]                                           # (1, H)
    return (wx, bx, uh, wd, bdr)


def pack_layer_params(raw, H, Hp, compute_dtype, fused):
    """Pad each gate block of columns H -> Hp (lane-aligned).  If `fused`,
    also build the block-diagonal recurrent operand [[Uh, 0], [0, Wd]]."""
    wx, bx, uh, wd, bd = raw
    padH = Hp - H

    def pad_gate_cols(m):
        parts = [jnp.pad(m[:, g * H:(g + 1) * H], ((0, 0), (0, padH)))
                 for g in range(4)]
        return jnp.concatenate(parts, axis=1)

    wx_p = pad_gate_cols(wx)                                    # (D, 4Hp)
    bx_p = pad_gate_cols(bx)                                    # (1, 4Hp)
    uh_p = jnp.pad(pad_gate_cols(uh), ((0, padH), (0, 0)))      # (Hp, 4Hp)
    wd_p = jnp.pad(wd, ((0, padH), (0, padH)))                  # (Hp, Hp)
    bd_p = jnp.pad(bd, ((0, 0), (0, padH)))                     # (1, Hp)

    packed = {
        "wx": wx_p.astype(compute_dtype),
        "bx": bx_p.astype(jnp.float32),
        "bd": bd_p.astype(jnp.float32),
    }
    if fused:
        u_fused = jnp.concatenate([
            jnp.concatenate([uh_p, jnp.zeros((Hp, Hp), jnp.float32)], axis=1),
            jnp.concatenate([jnp.zeros((Hp, 4 * Hp), jnp.float32), wd_p],
                            axis=1),
        ], axis=0)                                              # (2Hp, 5Hp)
        packed["u"] = u_fused.astype(compute_dtype)
    else:
        packed["uh"] = uh_p.astype(compute_dtype)
        packed["wd"] = wd_p.astype(compute_dtype)
    return packed


# ----------------------------------------------------------------------------
# StackedTLSTM wrapper (PyTorch (B,S,*) convention outside).
# ----------------------------------------------------------------------------
def stacked_tlstm_forward(inputs_bsd, timestamps_bs, layer_params, hidden_size,
                          hx=None, *, compute_dtype=jnp.bfloat16, t_blk=None,
                          fused=None):
    B, S, _ = inputs_bsd.shape
    num_layers = len(layer_params)
    H = hidden_size
    Hp = _round_up(H, 128)

    chip = _tpu_chip_info()
    if fused is None:
        # Fused [h|c] @ blockdiag only pays off when K = 2*Hp exactly fills a
        # 256-deep MXU (v6e/v7x, Hp == 128); otherwise use two separate dots.
        fused = bool(chip["mxu_256"] and Hp == 128)

    if hx is None:
        h0 = jnp.zeros((num_layers, B, H), jnp.float32)
        c0 = jnp.zeros((num_layers, B, H), jnp.float32)
    else:
        h0, c0 = hx

    x_sbd = jnp.transpose(inputs_bsd, (1, 0, 2)).astype(jnp.float32)
    # Hoisted elapse-time map (shared by every layer).
    ts = jnp.transpose(timestamps_bs, (1, 0)).astype(jnp.float32)[:, :, None]
    tmap = 1.0 / jnp.log(ts + 2.7183 + 1e-06)                   # (S, B, 1)

    layer_input = x_sbd
    hs, cs = [], []
    for i, raw in enumerate(layer_params):
        packed = pack_layer_params(raw, H, Hp, compute_dtype, fused)
        out, h_i, c_i = tlstm_layer_pallas(
            layer_input, tmap, h0[i], c0[i], packed, H, Hp, chip=chip,
            fused=fused, compute_dtype=compute_dtype, t_blk=t_blk)
        layer_input = out
        hs.append(h_i)
        cs.append(c_i)

    output = jnp.transpose(layer_input, (1, 0, 2))              # (B, S, H)
    return output, (jnp.stack(hs, 0), jnp.stack(cs, 0))


# ----------------------------------------------------------------------------
# Pure-JAX reference (mirrors the PyTorch forward) for validation.
# ----------------------------------------------------------------------------
def stacked_tlstm_reference(inputs_bsd, timestamps_bs, layer_params,
                            hidden_size, compute_dtype=jnp.float32):
    B, S, _ = inputs_bsd.shape
    H = hidden_size
    layer_input = inputs_bsd.astype(jnp.float32)
    hs, cs = [], []
    for raw in layer_params:
        wx, bx, uh, wd, bd = raw
        wx_c, uh_c, wd_c = (wx.astype(compute_dtype), uh.astype(compute_dtype),
                            wd.astype(compute_dtype))
        h = jnp.zeros((B, H), jnp.float32)
        c = jnp.zeros((B, H), jnp.float32)
        outs = []
        for t in range(S):
            x_t = layer_input[:, t, :]
            time_t = timestamps_bs[:, t][:, None].astype(jnp.float32)
            T = 1.0 / jnp.log(time_t + 2.7183 + 1e-06)
            c_st = jnp.tanh(jnp.dot(c.astype(compute_dtype), wd_c,
                                    preferred_element_type=jnp.float32) + bd)
            c = c - c_st + T * c_st
            gates = (jnp.dot(x_t.astype(compute_dtype), wx_c,
                             preferred_element_type=jnp.float32) + bx
                     + jnp.dot(h.astype(compute_dtype), uh_c,
                               preferred_element_type=jnp.float32))
            i_t = jax.nn.sigmoid(gates[:, 0 * H:1 * H])
            f_t = jax.nn.sigmoid(gates[:, 1 * H:2 * H])
            o_t = jax.nn.sigmoid(gates[:, 2 * H:3 * H])
            g_t = jnp.tanh(gates[:, 3 * H:4 * H])
            c = f_t * c + i_t * g_t
            h = o_t * jnp.tanh(c)
            outs.append(h[:, None, :])
        layer_input = jnp.concatenate(outs, axis=1)
        hs.append(h)
        cs.append(c)
    return layer_input, (jnp.stack(hs, 0), jnp.stack(cs, 0))


if __name__ == "__main__":
    batch, seq_len = 2, 8
    input_size, hidden_size, num_layers = 16, 32, 2

    root = jax.random.PRNGKey(0)
    k_in, k_ts, *k_layers = jax.random.split(root, 2 + num_layers)

    inputs = jax.random.normal(k_in, (batch, seq_len, input_size), jnp.float32)
    # elapsed times > 0 (as expected by map_elapse_time)
    timestamps = jax.random.uniform(k_ts, (batch, seq_len), jnp.float32,
                                    0.1, 5.0)

    layer_params = []
    for i in range(num_layers):
        lin = input_size if i == 0 else hidden_size
        layer_params.append(init_tlstm_layer(k_layers[i], lin, hidden_size))

    ref_out, (ref_h, ref_c) = stacked_tlstm_reference(
        inputs, timestamps, layer_params, hidden_size)

    # ---- f32, split (two-dot) recurrence path: strict validation -----------
    out_s, (h_s, c_s) = stacked_tlstm_forward(
        inputs, timestamps, layer_params, hidden_size,
        compute_dtype=jnp.float32, fused=False)
    jax.block_until_ready((out_s, h_s, c_s))
    np.testing.assert_allclose(np.asarray(out_s), np.asarray(ref_out),
                               rtol=1e-5, atol=1e-5)
    np.testing.assert_allclose(np.asarray(h_s), np.asarray(ref_h),
                               rtol=1e-5, atol=1e-5)
    np.testing.assert_allclose(np.asarray(c_s), np.asarray(ref_c),
                               rtol=1e-5, atol=1e-5)

    # ---- f32, fused block-diagonal recurrence path: strict validation ------
    out_f, (h_f, c_f) = stacked_tlstm_forward(
        inputs, timestamps, layer_params, hidden_size,
        compute_dtype=jnp.float32, fused=True)
    jax.block_until_ready((out_f, h_f, c_f))
    np.testing.assert_allclose(np.asarray(out_f), np.asarray(ref_out),
                               rtol=1e-5, atol=1e-5)
    np.testing.assert_allclose(np.asarray(h_f), np.asarray(ref_h),
                               rtol=1e-5, atol=1e-5)
    np.testing.assert_allclose(np.asarray(c_f), np.asarray(ref_c),
                               rtol=1e-5, atol=1e-5)

    assert out_s.shape == (batch, seq_len, hidden_size)
    assert h_s.shape == (num_layers, batch, hidden_size)
    assert c_s.shape == (num_layers, batch, hidden_size)

    # ---- awkward sequence length: exercises the padded/masked time tail ----
    seq_odd = 12
    k_in2, k_ts2 = jax.random.split(jax.random.PRNGKey(1))
    inputs2 = jax.random.normal(k_in2, (batch, seq_odd, input_size),
                                jnp.float32)
    timestamps2 = jax.random.uniform(k_ts2, (batch, seq_odd), jnp.float32,
                                     0.1, 5.0)
    ref_out2, (ref_h2, ref_c2) = stacked_tlstm_reference(
        inputs2, timestamps2, layer_params, hidden_size)
    out2, (h2, c2) = stacked_tlstm_forward(
        inputs2, timestamps2, layer_params, hidden_size,
        compute_dtype=jnp.float32, fused=False, t_blk=8)
    jax.block_until_ready((out2, h2, c2))
    np.testing.assert_allclose(np.asarray(out2), np.asarray(ref_out2),
                               rtol=1e-5, atol=1e-5)
    np.testing.assert_allclose(np.asarray(h2), np.asarray(ref_h2),
                               rtol=1e-5, atol=1e-5)
    np.testing.assert_allclose(np.asarray(c2), np.asarray(ref_c2),
                               rtol=1e-5, atol=1e-5)

    # ---- default path (bf16 weights/xw, f32 accumulation & state): loose ---
    out_bf, (h_bf, c_bf) = stacked_tlstm_forward(
        inputs, timestamps, layer_params, hidden_size)
    jax.block_until_ready((out_bf, h_bf, c_bf))
    ref_bf, _ = stacked_tlstm_reference(
        inputs, timestamps, layer_params, hidden_size,
        compute_dtype=jnp.bfloat16)
    np.testing.assert_allclose(np.asarray(out_bf), np.asarray(ref_bf),
                               rtol=5e-2, atol=5e-2)

    print("KERNEL_OK")
</pallas_src>

<mosaic_0001>
module attributes {stable_mosaic.version = 11 : i64} {
  func.func @kernel(%arg0: i32, %arg1: i32, %arg2: memref<8x8x512xf32, #tpu.memory_space<vmem>>, %arg3: memref<8x8x1xf32, #tpu.memory_space<vmem>>, %arg4: memref<8x128xf32, #tpu.memory_space<vmem>>, %arg5: memref<8x128xf32, #tpu.memory_space<vmem>>, %arg6: memref<128x512xf32, #tpu.memory_space<vmem>>, %arg7: memref<128x128xf32, #tpu.memory_space<vmem>>, %arg8: memref<1x128xf32, #tpu.memory_space<vmem>>, %arg9: memref<8x8x128xf32, #tpu.memory_space<vmem>>, %arg10: memref<8x128xf32, #tpu.memory_space<vmem>>, %arg11: memref<8x128xf32, #tpu.memory_space<vmem>>, %arg12: memref<8x8x128xf32, #tpu.memory_space<vmem>>) attributes {dimension_semantics = [#tpu.dimension_semantics<arbitrary>, #tpu.dimension_semantics<arbitrary>], iteration_bounds = array<i64: 1, 1>, scalar_prefetch = 0 : i64, scratch_operands = 1 : i64, tpu.core_type = #tpu.core_type<tc>, window_params = [{transform_indices = @transform_0, window_bounds = array<i64: 8, 8, 512>}, {transform_indices = @transform_1, window_bounds = array<i64: 8, 8, 1>}, {transform_indices = @transform_2, window_bounds = array<i64: 8, 128>}, {transform_indices = @transform_3, window_bounds = array<i64: 8, 128>}, {pipeline_mode = #tpu.pipeline_mode<synchronous>, transform_indices = @transform_4, window_bounds = array<i64: 128, 512>}, {pipeline_mode = #tpu.pipeline_mode<synchronous>, transform_indices = @transform_5, window_bounds = array<i64: 128, 128>}, {pipeline_mode = #tpu.pipeline_mode<synchronous>, transform_indices = @transform_6, window_bounds = array<i64: 1, 128>}, {transform_indices = @transform_7, window_bounds = array<i64: 8, 8, 128>}, {transform_indices = @transform_8, window_bounds = array<i64: 8, 128>}, {transform_indices = @transform_9, window_bounds = array<i64: 8, 128>}]} {
    %c0_i32 = arith.constant 0 : i32
    %0 = arith.cmpi eq, %arg1, %c0_i32 : i32
    %1 = arith.extui %0 : i1 to i32
    %c0_i32_0 = arith.constant 0 : i32
    %2 = arith.cmpi ne, %1, %c0_i32_0 : i32
    scf.if %2 {
      %c0_109 = arith.constant 0 : index
      %c0_110 = arith.constant 0 : index
      %360 = vector.load %arg4[%c0_109, %c0_110] : memref<8x128xf32, #tpu.memory_space<vmem>>, vector<8x128xf32>
      %c0_111 = arith.constant 0 : index
      %c0_112 = arith.constant 0 : index
      %361 = vector.load %arg10[%c0_111, %c0_112] : memref<8x128xf32, #tpu.memory_space<vmem>>, vector<8x128xf32>
      tpu.vector_store %arg10[%c0_111, %c0_112], %360 {strides = array<i32>} : memref<8x128xf32, #tpu.memory_space<vmem>>, vector<8x128xf32>,
      %c0_113 = arith.constant 0 : index
      %c0_114 = arith.constant 0 : index
      %362 = vector.load %arg5[%c0_113, %c0_114] : memref<8x128xf32, #tpu.memory_space<vmem>>, vector<8x128xf32>
      %c0_115 = arith.constant 0 : index
      %c0_116 = arith.constant 0 : index
      %363 = vector.load %arg11[%c0_115, %c0_116] : memref<8x128xf32, #tpu.memory_space<vmem>>, vector<8x128xf32>
      tpu.vector_store %arg11[%c0_115, %c0_116], %362 {strides = array<i32>} : memref<8x128xf32, #tpu.memory_space<vmem>>, vector<8x128xf32>,
    } else {
    }
    %c0 = arith.constant 0 : index
    %c0_1 = arith.constant 0 : index
    %c0_2 = arith.constant 0 : index
    %3 = vector.load %arg3[%c0, %c0_1, %c0_2] : memref<8x8x1xf32, #tpu.memory_space<vmem>>, vector<8x8x1xf32>
    %4 = vector.shape_cast %3 : vector<8x8x1xf32> to vector<8x8x1xf32>
    %5 = vector.broadcast %4 : vector<8x8x1xf32> to vector<8x8x128xf32>
    %cst = arith.constant 1.000000e+00 : f32
    %6 = vector.broadcast %cst : f32 to vector<8x8x128xf32>
    %7 = arith.subf %5, %6 : vector<8x8x128xf32>
    %c0_3 = arith.constant 0 : index
    %c0_4 = arith.constant 0 : index
    %c0_5 = arith.constant 0 : index
    %8 = vector.load %arg12[%c0_3, %c0_4, %c0_5] : memref<8x8x128xf32, #tpu.memory_space<vmem>>, vector<8x8x128xf32>
    tpu.vector_store %arg12[%c0_3, %c0_4, %c0_5], %7 {strides = array<i32>} : memref<8x8x128xf32, #tpu.memory_space<vmem>>, vector<8x8x128xf32>,
    %c0_6 = arith.constant 0 : index
    %c0_7 = arith.constant 0 : index
    %9 = vector.load %arg8[%c0_6, %c0_7] : memref<1x128xf32, #tpu.memory_space<vmem>>, vector<1x128xf32>
    %c0_8 = arith.constant 0 : index
    %c0_9 = arith.constant 0 : index
    %10 = vector.load %arg6[%c0_8, %c0_9] : memref<128x512xf32, #tpu.memory_space<vmem>>, vector<128x512xf32>
    %c0_10 = arith.constant 0 : index
    %c0_11 = arith.constant 0 : index
    %11 = vector.load %arg7[%c0_10, %c0_11] : memref<128x128xf32, #tpu.memory_space<vmem>>, vector<128x128xf32>
    %c0_12 = arith.constant 0 : index
    %c0_13 = arith.constant 0 : index
    %12 = vector.load %arg10[%c0_12, %c0_13] : memref<8x128xf32, #tpu.memory_space<vmem>>, vector<8x128xf32>
    %c0_14 = arith.constant 0 : index
    %c0_15 = arith.constant 0 : index
    %13 = vector.load %arg11[%c0_14, %c0_15] : memref<8x128xf32, #tpu.memory_space<vmem>>, vector<8x128xf32>
    %c0_i32_16 = arith.constant 0 : i32
    %cst_17 = arith.constant dense<0.000000e+00> : vector<8x512xf32>
    %14 = tpu.matmul %12, %10, %cst_17 {dimension_numbers = #tpu.dot_dimension_numbers<[1], [0], [0], [1], [0, 0, 1, 1], [], []>} : vector<8x128xf32>, vector<128x512xf32>, vector<8x512xf32> -> vector<8x512xf32>
    %cst_18 = arith.constant dense<0.000000e+00> : vector<8x128xf32>
    %15 = tpu.matmul %13, %11, %cst_18 {dimension_numbers = #tpu.dot_dimension_numbers<[1], [0], [0], [1], [0, 0, 1, 1], [], []>} : vector<8x128xf32>, vector<128x128xf32>, vector<8x128xf32> -> vector<8x128xf32>
    %16 = vector.broadcast %9 : vector<1x128xf32> to vector<8x128xf32>
    %17 = arith.addf %15, %16 : vector<8x128xf32>
    %18 = math.tanh %17 : vector<8x128xf32>
    %19 = arith.index_cast %c0_i32_16 : i32 to index
    %c0_19 = arith.constant 0 : index
    %c0_20 = arith.constant 0 : index
    %20 = vector.load %arg12[%19, %c0_19, %c0_20] : memref<8x8x128xf32, #tpu.memory_space<vmem>>, vector<1x8x128xf32>
    %21 = vector.shape_cast %20 : vector<1x8x128xf32> to vector<8x128xf32>
    %22 = arith.mulf %21, %18 : vector<8x128xf32>
    %23 = arith.addf %13, %22 : vector<8x128xf32>
    %24 = arith.index_cast %c0_i32_16 : i32 to index
    %c0_21 = arith.constant 0 : index
    %c0_22 = arith.constant 0 : index
    %25 = vector.load %arg2[%24, %c0_21, %c0_22] : memref<8x8x512xf32, #tpu.memory_space<vmem>>, vector<1x8x512xf32>
    %26 = vector.shape_cast %25 : vector<1x8x512xf32> to vector<8x512xf32>
    %27 = arith.addf %26, %14 : vector<8x512xf32>
    %28 = vector.extract_strided_slice %27 {offsets = [0, 0], sizes = [8, 128], strides = [1, 1]} : vector<8x512xf32> to vector<8x128xf32>
    %29 = arith.negf %28 : vector<8x128xf32>
    %30 = math.exp %29 : vector<8x128xf32>
    %cst_23 = arith.constant 1.000000e+00 : f32
    %31 = vector.broadcast %cst_23 : f32 to vector<8x128xf32>
    %32 = arith.addf %31, %30 : vector<8x128xf32>
    %33 = arith.divf %31, %32 : vector<8x128xf32>
    %34 = vector.extract_strided_slice %27 {offsets = [0, 128], sizes = [8, 128], strides = [1, 1]} : vector<8x512xf32> to vector<8x128xf32>
    %35 = arith.negf %34 : vector<8x128xf32>
    %36 = math.exp %35 : vector<8x128xf32>
    %cst_24 = arith.constant 1.000000e+00 : f32
    %37 = vector.broadcast %cst_24 : f32 to vector<8x128xf32>
    %38 = arith.addf %37, %36 : vector<8x128xf32>
    %39 = arith.divf %37, %38 : vector<8x128xf32>
    %40 = vector.extract_strided_slice %27 {offsets = [0, 256], sizes = [8, 128], strides = [1, 1]} : vector<8x512xf32> to vector<8x128xf32>
    %41 = arith.negf %40 : vector<8x128xf32>
    %42 = math.exp %41 : vector<8x128xf32>
    %cst_25 = arith.constant 1.000000e+00 : f32
    %43 = vector.broadcast %cst_25 : f32 to vector<8x128xf32>
    %44 = arith.addf %43, %42 : vector<8x128xf32>
    %45 = arith.divf %43, %44 : vector<8x128xf32>
    %46 = vector.extract_strided_slice %27 {offsets = [0, 384], sizes = [8, 128], strides = [1, 1]} : vector<8x512xf32> to vector<8x128xf32>
    %47 = math.tanh %46 : vector<8x128xf32>
    %48 = arith.mulf %39, %23 : vector<8x128xf32>
    %49 = arith.mulf %33, %47 : vector<8x128xf32>
    %50 = arith.addf %48, %49 : vector<8x128xf32>
    %51 = math.tanh %50 : vector<8x128xf32>
    %52 = arith.mulf %45, %51 : vector<8x128xf32>
    %53 = arith.index_cast %c0_i32_16 : i32 to index
    %c0_26 = arith.constant 0 : index
    %c0_27 = arith.constant 0 : index
    %54 = vector.load %arg9[%53, %c0_26, %c0_27] : memref<8x8x128xf32, #tpu.memory_space<vmem>>, vector<1x8x128xf32>
    %55 = vector.shape_cast %54 : vector<1x8x128xf32> to vector<8x128xf32>
    %56 = vector.shape_cast %52 : vector<8x128xf32> to vector<1x8x128xf32>
    tpu.vector_store %arg9[%53, %c0_26, %c0_27], %56 {strides = array<i32>} : memref<8x8x128xf32, #tpu.memory_space<vmem>>, vector<1x8x128xf32>,
    %c1_i32 = arith.constant 1 : i32
    %cst_28 = arith.constant dense<0.000000e+00> : vector<8x512xf32>
    %57 = tpu.matmul %52, %10, %cst_28 {dimension_numbers = #tpu.dot_dimension_numbers<[1], [0], [0], [1], [0, 0, 1, 1], [], []>} : vector<8x128xf32>, vector<128x512xf32>, vector<8x512xf32> -> vector<8x512xf32>
    %cst_29 = arith.constant dense<0.000000e+00> : vector<8x128xf32>
    %58 = tpu.matmul %50, %11, %cst_29 {dimension_numbers = #tpu.dot_dimension_numbers<[1], [0], [0], [1], [0, 0, 1, 1], [], []>} : vector<8x128xf32>, vector<128x128xf32>, vector<8x128xf32> -> vector<8x128xf32>
    %59 = vector.broadcast %9 : vector<1x128xf32> to vector<8x128xf32>
    %60 = arith.addf %58, %59 : vector<8x128xf32>
    %61 = math.tanh %60 : vector<8x128xf32>
    %62 = arith.index_cast %c1_i32 : i32 to index
    %c0_30 = arith.constant 0 : index
    %c0_31 = arith.constant 0 : index
    %63 = vector.load %arg12[%62, %c0_30, %c0_31] : memref<8x8x128xf32, #tpu.memory_space<vmem>>, vector<1x8x128xf32>
    %64 = vector.shape_cast %63 : vector<1x8x128xf32> to vector<8x128xf32>
    %65 = arith.mulf %64, %61 : vector<8x128xf32>
    %66 = arith.addf %50, %65 : vector<8x128xf32>
    %67 = arith.index_cast %c1_i32 : i32 to index
    %c0_32 = arith.constant 0 : index
    %c0_33 = arith.constant 0 : index
    %68 = vector.load %arg2[%67, %c0_32, %c0_33] : memref<8x8x512xf32, #tpu.memory_space<vmem>>, vector<1x8x512xf32>
    %69 = vector.shape_cast %68 : vector<1x8x512xf32> to vector<8x512xf32>
    %70 = arith.addf %69, %57 : vector<8x512xf32>
    %71 = vector.extract_strided_slice %70 {offsets = [0, 0], sizes = [8, 128], strides = [1, 1]} : vector<8x512xf32> to vector<8x128xf32>
    %72 = arith.negf %71 : vector<8x128xf32>
    %73 = math.exp %72 : vector<8x128xf32>
    %cst_34 = arith.constant 1.000000e+00 : f32
    %74 = vector.broadcast %cst_34 : f32 to vector<8x128xf32>
    %75 = arith.addf %74, %73 : vector<8x128xf32>
    %76 = arith.divf %74, %75 : vector<8x128xf32>
    %77 = vector.extract_strided_slice %70 {offsets = [0, 128], sizes = [8, 128], strides = [1, 1]} : vector<8x512xf32> to vector<8x128xf32>
    %78 = arith.negf %77 : vector<8x128xf32>
    %79 = math.exp %78 : vector<8x128xf32>
    %cst_35 = arith.constant 1.000000e+00 : f32
    %80 = vector.broadcast %cst_35 : f32 to vector<8x128xf32>
    %81 = arith.addf %80, %79 : vector<8x128xf32>
    %82 = arith.divf %80, %81 : vector<8x128xf32>
    %83 = vector.extract_strided_slice %70 {offsets = [0, 256], sizes = [8, 128], strides = [1, 1]} : vector<8x512xf32> to vector<8x128xf32>
    %84 = arith.negf %83 : vector<8x128xf32>
    %85 = math.exp %84 : vector<8x128xf32>
    %cst_36 = arith.constant 1.000000e+00 : f32
    %86 = vector.broadcast %cst_36 : f32 to vector<8x128xf32>
    %87 = arith.addf %86, %85 : vector<8x128xf32>
    %88 = arith.divf %86, %87 : vector<8x128xf32>
    %89 = vector.extract_strided_slice %70 {offsets = [0, 384], sizes = [8, 128], strides = [1, 1]} : vector<8x512xf32> to vector<8x128xf32>
    %90 = math.tanh %89 : vector<8x128xf32>
    %91 = arith.mulf %82, %66 : vector<8x128xf32>
    %92 = arith.mulf %76, %90 : vector<8x128xf32>
    %93 = arith.addf %91, %92 : vector<8x128xf32>
    %94 = math.tanh %93 : vector<8x128xf32>
    %95 = arith.mulf %88, %94 : vector<8x128xf32>
    %96 = arith.index_cast %c1_i32 : i32 to index
    %c0_37 = arith.constant 0 : index
    %c0_38 = arith.constant 0 : index
    %97 = vector.load %arg9[%96, %c0_37, %c0_38] : memref<8x8x128xf32, #tpu.memory_space<vmem>>, vector<1x8x128xf32>
    %98 = vector.shape_cast %97 : vector<1x8x128xf32> to vector<8x128xf32>
    %99 = vector.shape_cast %95 : vector<8x128xf32> to vector<1x8x128xf32>
    tpu.vector_store %arg9[%96, %c0_37, %c0_38], %99 {strides = array<i32>} : memref<8x8x128xf32, #tpu.memory_space<vmem>>, vector<1x8x128xf32>,
    %c2_i32 = arith.constant 2 : i32
    %cst_39 = arith.constant dense<0.000000e+00> : vector<8x512xf32>
    %100 = tpu.matmul %95, %10, %cst_39 {dimension_numbers = #tpu.dot_dimension_numbers<[1], [0], [0], [1], [0, 0, 1, 1], [], []>} : vector<8x128xf32>, vector<128x512xf32>, vector<8x512xf32> -> vector<8x512xf32>
    %cst_40 = arith.constant dense<0.000000e+00> : vector<8x128xf32>
    %101 = tpu.matmul %93, %11, %cst_40 {dimension_numbers = #tpu.dot_dimension_numbers<[1], [0], [0], [1], [0, 0, 1, 1], [], []>} : vector<8x128xf32>, vector<128x128xf32>, vector<8x128xf32> -> vector<8x128xf32>
    %102 = vector.broadcast %9 : vector<1x128xf32> to vector<8x128xf32>
    %103 = arith.addf %101, %102 : vector<8x128xf32>
    %104 = math.tanh %103 : vector<8x128xf32>
    %105 = arith.index_cast %c2_i32 : i32 to index
    %c0_41 = arith.constant 0 : index
    %c0_42 = arith.constant 0 : index
    %106 = vector.load %arg12[%105, %c0_41, %c0_42] : memref<8x8x128xf32, #tpu.memory_space<vmem>>, vector<1x8x128xf32>
    %107 = vector.shape_cast %106 : vector<1x8x128xf32> to vector<8x128xf32>
    %108 = arith.mulf %107, %104 : vector<8x128xf32>
    %109 = arith.addf %93, %108 : vector<8x128xf32>
    %110 = arith.index_cast %c2_i32 : i32 to index
    %c0_43 = arith.constant 0 : index
    %c0_44 = arith.constant 0 : index
    %111 = vector.load %arg2[%110, %c0_43, %c0_44] : memref<8x8x512xf32, #tpu.memory_space<vmem>>, vector<1x8x512xf32>
    %112 = vector.shape_cast %111 : vector<1x8x512xf32> to vector<8x512xf32>
    %113 = arith.addf %112, %100 : vector<8x512xf32>
    %114 = vector.extract_strided_slice %113 {offsets = [0, 0], sizes = [8, 128], strides = [1, 1]} : vector<8x512xf32> to vector<8x128xf32>
    %115 = arith.negf %114 : vector<8x128xf32>
    %116 = math.exp %115 : vector<8x128xf32>
    %cst_45 = arith.constant 1.000000e+00 : f32
    %117 = vector.broadcast %cst_45 : f32 to vector<8x128xf32>
    %118 = arith.addf %117, %116 : vector<8x128xf32>
    %119 = arith.divf %117, %118 : vector<8x128xf32>
    %120 = vector.extract_strided_slice %113 {offsets = [0, 128], sizes = [8, 128], strides = [1, 1]} : vector<8x512xf32> to vector<8x128xf32>
    %121 = arith.negf %120 : vector<8x128xf32>
    %122 = math.exp %121 : vector<8x128xf32>
    %cst_46 = arith.constant 1.000000e+00 : f32
    %123 = vector.broadcast %cst_46 : f32 to vector<8x128xf32>
    %124 = arith.addf %123, %122 : vector<8x128xf32>
    %125 = arith.divf %123, %124 : vector<8x128xf32>
    %126 = vector.extract_strided_slice %113 {offsets = [0, 256], sizes = [8, 128], strides = [1, 1]} : vector<8x512xf32> to vector<8x128xf32>
    %127 = arith.negf %126 : vector<8x128xf32>
    %128 = math.exp %127 : vector<8x128xf32>
    %cst_47 = arith.constant 1.000000e+00 : f32
    %129 = vector.broadcast %cst_47 : f32 to vector<8x128xf32>
    %130 = arith.addf %129, %128 : vector<8x128xf32>
    %131 = arith.divf %129, %130 : vector<8x128xf32>
    %132 = vector.extract_strided_slice %113 {offsets = [0, 384], sizes = [8, 128], strides = [1, 1]} : vector<8x512xf32> to vector<8x128xf32>
    %133 = math.tanh %132 : vector<8x128xf32>
    %134 = arith.mulf %125, %109 : vector<8x128xf32>
    %135 = arith.mulf %119, %133 : vector<8x128xf32>
    %136 = arith.addf %134, %135 : vector<8x128xf32>
    %137 = math.tanh %136 : vector<8x128xf32>
    %138 = arith.mulf %131, %137 : vector<8x128xf32>
    %139 = arith.index_cast %c2_i32 : i32 to index
    %c0_48 = arith.constant 0 : index
    %c0_49 = arith.constant 0 : index
    %140 = vector.load %arg9[%139, %c0_48, %c0_49] : memref<8x8x128xf32, #tpu.memory_space<vmem>>, vector<1x8x128xf32>
    %141 = vector.shape_cast %140 : vector<1x8x128xf32> to vector<8x128xf32>
    %142 = vector.shape_cast %138 : vector<8x128xf32> to vector<1x8x128xf32>
    tpu.vector_store %arg9[%139, %c0_48, %c0_49], %142 {strides = array<i32>} : memref<8x8x128xf32, #tpu.memory_space<vmem>>, vector<1x8x128xf32>,
    %c3_i32 = arith.constant 3 : i32
    %cst_50 = arith.constant dense<0.000000e+00> : vector<8x512xf32>
    %143 = tpu.matmul %138, %10, %cst_50 {dimension_numbers = #tpu.dot_dimension_numbers<[1], [0], [0], [1], [0, 0, 1, 1], [], []>} : vector<8x128xf32>, vector<128x512xf32>, vector<8x512xf32> -> vector<8x512xf32>
    %cst_51 = arith.constant dense<0.000000e+00> : vector<8x128xf32>
    %144 = tpu.matmul %136, %11, %cst_51 {dimension_numbers = #tpu.dot_dimension_numbers<[1], [0], [0], [1], [0, 0, 1, 1], [], []>} : vector<8x128xf32>, vector<128x128xf32>, vector<8x128xf32> -> vector<8x128xf32>
    %145 = vector.broadcast %9 : vector<1x128xf32> to vector<8x128xf32>
    %146 = arith.addf %144, %145 : vector<8x128xf32>
    %147 = math.tanh %146 : vector<8x128xf32>
    %148 = arith.index_cast %c3_i32 : i32 to index
    %c0_52 = arith.constant 0 : index
    %c0_53 = arith.constant 0 : index
    %149 = vector.load %arg12[%148, %c0_52, %c0_53] : memref<8x8x128xf32, #tpu.memory_space<vmem>>, vector<1x8x128xf32>
    %150 = vector.shape_cast %149 : vector<1x8x128xf32> to vector<8x128xf32>
    %151 = arith.mulf %150, %147 : vector<8x128xf32>
    %152 = arith.addf %136, %151 : vector<8x128xf32>
    %153 = arith.index_cast %c3_i32 : i32 to index
    %c0_54 = arith.constant 0 : index
    %c0_55 = arith.constant 0 : index
    %154 = vector.load %arg2[%153, %c0_54, %c0_55] : memref<8x8x512xf32, #tpu.memory_space<vmem>>, vector<1x8x512xf32>
    %155 = vector.shape_cast %154 : vector<1x8x512xf32> to vector<8x512xf32>
    %156 = arith.addf %155, %143 : vector<8x512xf32>
    %157 = vector.extract_strided_slice %156 {offsets = [0, 0], sizes = [8, 128], strides = [1, 1]} : vector<8x512xf32> to vector<8x128xf32>
    %158 = arith.negf %157 : vector<8x128xf32>
    %159 = math.exp %158 : vector<8x128xf32>
    %cst_56 = arith.constant 1.000000e+00 : f32
    %160 = vector.broadcast %cst_56 : f32 to vector<8x128xf32>
    %161 = arith.addf %160, %159 : vector<8x128xf32>
    %162 = arith.divf %160, %161 : vector<8x128xf32>
    %163 = vector.extract_strided_slice %156 {offsets = [0, 128], sizes = [8, 128], strides = [1, 1]} : vector<8x512xf32> to vector<8x128xf32>
    %164 = arith.negf %163 : vector<8x128xf32>
    %165 = math.exp %164 : vector<8x128xf32>
    %cst_57 = arith.constant 1.000000e+00 : f32
    %166 = vector.broadcast %cst_57 : f32 to vector<8x128xf32>
    %167 = arith.addf %166, %165 : vector<8x128xf32>
    %168 = arith.divf %166, %167 : vector<8x128xf32>
    %169 = vector.extract_strided_slice %156 {offsets = [0, 256], sizes = [8, 128], strides = [1, 1]} : vector<8x512xf32> to vector<8x128xf32>
    %170 = arith.negf %169 : vector<8x128xf32>
    %171 = math.exp %170 : vector<8x128xf32>
    %cst_58 = arith.constant 1.000000e+00 : f32
    %172 = vector.broadcast %cst_58 : f32 to vector<8x128xf32>
    %173 = arith.addf %172, %171 : vector<8x128xf32>
    %174 = arith.divf %172, %173 : vector<8x128xf32>
    %175 = vector.extract_strided_slice %156 {offsets = [0, 384], sizes = [8, 128], strides = [1, 1]} : vector<8x512xf32> to vector<8x128xf32>
    %176 = math.tanh %175 : vector<8x128xf32>
    %177 = arith.mulf %168, %152 : vector<8x128xf32>
    %178 = arith.mulf %162, %176 : vector<8x128xf32>
    %179 = arith.addf %177, %178 : vector<8x128xf32>
    %180 = math.tanh %179 : vector<8x128xf32>
    %181 = arith.mulf %174, %180 : vector<8x128xf32>
    %182 = arith.index_cast %c3_i32 : i32 to index
    %c0_59 = arith.constant 0 : index
    %c0_60 = arith.constant 0 : index
    %183 = vector.load %arg9[%182, %c0_59, %c0_60] : memref<8x8x128xf32, #tpu.memory_space<vmem>>, vector<1x8x128xf32>
    %184 = vector.shape_cast %183 : vector<1x8x128xf32> to vector<8x128xf32>
    %185 = vector.shape_cast %181 : vector<8x128xf32> to vector<1x8x128xf32>
    tpu.vector_store %arg9[%182, %c0_59, %c0_60], %185 {strides = array<i32>} : memref<8x8x128xf32, #tpu.memory_space<vmem>>, vector<1x8x128xf32>,
    %c4_i32 = arith.constant 4 : i32
    %cst_61 = arith.constant dense<0.000000e+00> : vector<8x512xf32>
    %186 = tpu.matmul %181, %10, %cst_61 {dimension_numbers = #tpu.dot_dimension_numbers<[1], [0], [0], [1], [0, 0, 1, 1], [], []>} : vector<8x128xf32>, vector<128x512xf32>, vector<8x512xf32> -> vector<8x512xf32>
    %cst_62 = arith.constant dense<0.000000e+00> : vector<8x128xf32>
    %187 = tpu.matmul %179, %11, %cst_62 {dimension_numbers = #tpu.dot_dimension_numbers<[1], [0], [0], [1], [0, 0, 1, 1], [], []>} : vector<8x128xf32>, vector<128x128xf32>, vector<8x128xf32> -> vector<8x128xf32>
    %188 = vector.broadcast %9 : vector<1x128xf32> to vector<8x128xf32>
    %189 = arith.addf %187, %188 : vector<8x128xf32>
    %190 = math.tanh %189 : vector<8x128xf32>
    %191 = arith.index_cast %c4_i32 : i32 to index
    %c0_63 = arith.constant 0 : index
    %c0_64 = arith.constant 0 : index
    %192 = vector.load %arg12[%191, %c0_63, %c0_64] : memref<8x8x128xf32, #tpu.memory_space<vmem>>, vector<1x8x128xf32>
    %193 = vector.shape_cast %192 : vector<1x8x128xf32> to vector<8x128xf32>
    %194 = arith.mulf %193, %190 : vector<8x128xf32>
    %195 = arith.addf %179, %194 : vector<8x128xf32>
    %196 = arith.index_cast %c4_i32 : i32 to index
    %c0_65 = arith.constant 0 : index
    %c0_66 = arith.constant 0 : index
    %197 = vector.load %arg2[%196, %c0_65, %c0_66] : memref<8x8x512xf32, #tpu.memory_space<vmem>>, vector<1x8x512xf32>
    %198 = vector.shape_cast %197 : vector<1x8x512xf32> to vector<8x512xf32>
    %199 = arith.addf %198, %186 : vector<8x512xf32>
    %200 = vector.extract_strided_slice %199 {offsets = [0, 0], sizes = [8, 128], strides = [1, 1]} : vector<8x512xf32> to vector<8x128xf32>
    %201 = arith.negf %200 : vector<8x128xf32>
    %202 = math.exp %201 : vector<8x128xf32>
    %cst_67 = arith.constant 1.000000e+00 : f32
    %203 = vector.broadcast %cst_67 : f32 to vector<8x128xf32>
    %204 = arith.addf %203, %202 : vector<8x128xf32>
    %205 = arith.divf %203, %204 : vector<8x128xf32>
    %206 = vector.extract_strided_slice %199 {offsets = [0, 128], sizes = [8, 128], strides = [1, 1]} : vector<8x512xf32> to vector<8x128xf32>
    %207 = arith.negf %206 : vector<8x128xf32>
    %208 = math.exp %207 : vector<8x128xf32>
    %cst_68 = arith.constant 1.000000e+00 : f32
    %209 = vector.broadcast %cst_68 : f32 to vector<8x128xf32>
    %210 = arith.addf %209, %208 : vector<8x128xf32>
    %211 = arith.divf %209, %210 : vector<8x128xf32>
    %212 = vector.extract_strided_slice %199 {offsets = [0, 256], sizes = [8, 128], strides = [1, 1]} : vector<8x512xf32> to vector<8x128xf32>
    %213 = arith.negf %212 : vector<8x128xf32>
    %214 = math.exp %213 : vector<8x128xf32>
    %cst_69 = arith.constant 1.000000e+00 : f32
    %215 = vector.broadcast %cst_69 : f32 to vector<8x128xf32>
    %216 = arith.addf %215, %214 : vector<8x128xf32>
    %217 = arith.divf %215, %216 : vector<8x128xf32>
    %218 = vector.extract_strided_slice %199 {offsets = [0, 384], sizes = [8, 128], strides = [1, 1]} : vector<8x512xf32> to vector<8x128xf32>
    %219 = math.tanh %218 : vector<8x128xf32>
    %220 = arith.mulf %211, %195 : vector<8x128xf32>
    %221 = arith.mulf %205, %219 : vector<8x128xf32>
    %222 = arith.addf %220, %221 : vector<8x128xf32>
    %223 = math.tanh %222 : vector<8x128xf32>
    %224 = arith.mulf %217, %223 : vector<8x128xf32>
    %225 = arith.index_cast %c4_i32 : i32 to index
    %c0_70 = arith.constant 0 : index
    %c0_71 = arith.constant 0 : index
    %226 = vector.load %arg9[%225, %c0_70, %c0_71] : memref<8x8x128xf32, #tpu.memory_space<vmem>>, vector<1x8x128xf32>
    %227 = vector.shape_cast %226 : vector<1x8x128xf32> to vector<8x128xf32>
    %228 = vector.shape_cast %224 : vector<8x128xf32> to vector<1x8x128xf32>
    tpu.vector_store %arg9[%225, %c0_70, %c0_71], %228 {strides = array<i32>} : memref<8x8x128xf32, #tpu.memory_space<vmem>>, vector<1x8x128xf32>,
    %c5_i32 = arith.constant 5 : i32
    %cst_72 = arith.constant dense<0.000000e+00> : vector<8x512xf32>
    %229 = tpu.matmul %224, %10, %cst_72 {dimension_numbers = #tpu.dot_dimension_numbers<[1], [0], [0], [1], [0, 0, 1, 1], [], []>} : vector<8x128xf32>, vector<128x512xf32>, vector<8x512xf32> -> vector<8x512xf32>
    %cst_73 = arith.constant dense<0.000000e+00> : vector<8x128xf32>
    %230 = tpu.matmul %222, %11, %cst_73 {dimension_numbers = #tpu.dot_dimension_numbers<[1], [0], [0], [1], [0, 0, 1, 1], [], []>} : vector<8x128xf32>, vector<128x128xf32>, vector<8x128xf32> -> vector<8x128xf32>
    %231 = vector.broadcast %9 : vector<1x128xf32> to vector<8x128xf32>
    %232 = arith.addf %230, %231 : vector<8x128xf32>
    %233 = math.tanh %232 : vector<8x128xf32>
    %234 = arith.index_cast %c5_i32 : i32 to index
    %c0_74 = arith.constant 0 : index
    %c0_75 = arith.constant 0 : index
    %235 = vector.load %arg12[%234, %c0_74, %c0_75] : memref<8x8x128xf32, #tpu.memory_space<vmem>>, vector<1x8x128xf32>
    %236 = vector.shape_cast %235 : vector<1x8x128xf32> to vector<8x128xf32>
    %237 = arith.mulf %236, %233 : vector<8x128xf32>
    %238 = arith.addf %222, %237 : vector<8x128xf32>
    %239 = arith.index_cast %c5_i32 : i32 to index
    %c0_76 = arith.constant 0 : index
    %c0_77 = arith.constant 0 : index
    %240 = vector.load %arg2[%239, %c0_76, %c0_77] : memref<8x8x512xf32, #tpu.memory_space<vmem>>, vector<1x8x512xf32>
    %241 = vector.shape_cast %240 : vector<1x8x512xf32> to vector<8x512xf32>
    %242 = arith.addf %241, %229 : vector<8x512xf32>
    %243 = vector.extract_strided_slice %242 {offsets = [0, 0], sizes = [8, 128], strides = [1, 1]} : vector<8x512xf32> to vector<8x128xf32>
    %244 = arith.negf %243 : vector<8x128xf32>
    %245 = math.exp %244 : vector<8x128xf32>
    %cst_78 = arith.constant 1.000000e+00 : f32
    %246 = vector.broadcast %cst_78 : f32 to vector<8x128xf32>
    %247 = arith.addf %246, %245 : vector<8x128xf32>
    %248 = arith.divf %246, %247 : vector<8x128xf32>
    %249 = vector.extract_strided_slice %242 {offsets = [0, 128], sizes = [8, 128], strides = [1, 1]} : vector<8x512xf32> to vector<8x128xf32>
    %250 = arith.negf %249 : vector<8x128xf32>
    %251 = math.exp %250 : vector<8x128xf32>
    %cst_79 = arith.constant 1.000000e+00 : f32
    %252 = vector.broadcast %cst_79 : f32 to vector<8x128xf32>
    %253 = arith.addf %252, %251 : vector<8x128xf32>
    %254 = arith.divf %252, %253 : vector<8x128xf32>
    %255 = vector.extract_strided_slice %242 {offsets = [0, 256], sizes = [8, 128], strides = [1, 1]} : vector<8x512xf32> to vector<8x128xf32>
    %256 = arith.negf %255 : vector<8x128xf32>
    %257 = math.exp %256 : vector<8x128xf32>
    %cst_80 = arith.constant 1.000000e+00 : f32
    %258 = vector.broadcast %cst_80 : f32 to vector<8x128xf32>
    %259 = arith.addf %258, %257 : vector<8x128xf32>
    %260 = arith.divf %258, %259 : vector<8x128xf32>
    %261 = vector.extract_strided_slice %242 {offsets = [0, 384], sizes = [8, 128], strides = [1, 1]} : vector<8x512xf32> to vector<8x128xf32>
    %262 = math.tanh %261 : vector<8x128xf32>
    %263 = arith.mulf %254, %238 : vector<8x128xf32>
    %264 = arith.mulf %248, %262 : vector<8x128xf32>
    %265 = arith.addf %263, %264 : vector<8x128xf32>
    %266 = math.tanh %265 : vector<8x128xf32>
    %267 = arith.mulf %260, %266 : vector<8x128xf32>
    %268 = arith.index_cast %c5_i32 : i32 to index
    %c0_81 = arith.constant 0 : index
    %c0_82 = arith.constant 0 : index
    %269 = vector.load %arg9[%268, %c0_81, %c0_82] : memref<8x8x128xf32, #tpu.memory_space<vmem>>, vector<1x8x128xf32>
    %270 = vector.shape_cast %269 : vector<1x8x128xf32> to vector<8x128xf32>
    %271 = vector.shape_cast %267 : vector<8x128xf32> to vector<1x8x128xf32>
    tpu.vector_store %arg9[%268, %c0_81, %c0_82], %271 {strides = array<i32>} : memref<8x8x128xf32, #tpu.memory_space<vmem>>, vector<1x8x128xf32>,
    %c6_i32 = arith.constant 6 : i32
    %cst_83 = arith.constant dense<0.000000e+00> : vector<8x512xf32>
    %272 = tpu.matmul %267, %10, %cst_83 {dimension_numbers = #tpu.dot_dimension_numbers<[1], [0], [0], [1], [0, 0, 1, 1], [], []>} : vector<8x128xf32>, vector<128x512xf32>, vector<8x512xf32> -> vector<8x512xf32>
    %cst_84 = arith.constant dense<0.000000e+00> : vector<8x128xf32>
    %273 = tpu.matmul %265, %11, %cst_84 {dimension_numbers = #tpu.dot_dimension_numbers<[1], [0], [0], [1], [0, 0, 1, 1], [], []>} : vector<8x128xf32>, vector<128x128xf32>, vector<8x128xf32> -> vector<8x128xf32>
    %274 = vector.broadcast %9 : vector<1x128xf32> to vector<8x128xf32>
    %275 = arith.addf %273, %274 : vector<8x128xf32>
    %276 = math.tanh %275 : vector<8x128xf32>
    %277 = arith.index_cast %c6_i32 : i32 to index
    %c0_85 = arith.constant 0 : index
    %c0_86 = arith.constant 0 : index
    %278 = vector.load %arg12[%277, %c0_85, %c0_86] : memref<8x8x128xf32, #tpu.memory_space<vmem>>, vector<1x8x128xf32>
    %279 = vector.shape_cast %278 : vector<1x8x128xf32> to vector<8x128xf32>
    %280 = arith.mulf %279, %276 : vector<8x128xf32>
    %281 = arith.addf %265, %280 : vector<8x128xf32>
    %282 = arith.index_cast %c6_i32 : i32 to index
    %c0_87 = arith.constant 0 : index
    %c0_88 = arith.constant 0 : index
    %283 = vector.load %arg2[%282, %c0_87, %c0_88] : memref<8x8x512xf32, #tpu.memory_space<vmem>>, vector<1x8x512xf32>
    %284 = vector.shape_cast %283 : vector<1x8x512xf32> to vector<8x512xf32>
    %285 = arith.addf %284, %272 : vector<8x512xf32>
    %286 = vector.extract_strided_slice %285 {offsets = [0, 0], sizes = [8, 128], strides = [1, 1]} : vector<8x512xf32> to vector<8x128xf32>
    %287 = arith.negf %286 : vector<8x128xf32>
    %288 = math.exp %287 : vector<8x128xf32>
    %cst_89 = arith.constant 1.000000e+00 : f32
    %289 = vector.broadcast %cst_89 : f32 to vector<8x128xf32>
    %290 = arith.addf %289, %288 : vector<8x128xf32>
    %291 = arith.divf %289, %290 : vector<8x128xf32>
    %292 = vector.extract_strided_slice %285 {offsets = [0, 128], sizes = [8, 128], strides = [1, 1]} : vector<8x512xf32> to vector<8x128xf32>
    %293 = arith.negf %292 : vector<8x128xf32>
    %294 = math.exp %293 : vector<8x128xf32>
    %cst_90 = arith.constant 1.000000e+00 : f32
    %295 = vector.broadcast %cst_90 : f32 to vector<8x128xf32>
    %296 = arith.addf %295, %294 : vector<8x128xf32>
    %297 = arith.divf %295, %296 : vector<8x128xf32>
    %298 = vector.extract_strided_slice %285 {offsets = [0, 256], sizes = [8, 128], strides = [1, 1]} : vector<8x512xf32> to vector<8x128xf32>
    %299 = arith.negf %298 : vector<8x128xf32>
    %300 = math.exp %299 : vector<8x128xf32>
    %cst_91 = arith.constant 1.000000e+00 : f32
    %301 = vector.broadcast %cst_91 : f32 to vector<8x128xf32>
    %302 = arith.addf %301, %300 : vector<8x128xf32>
    %303 = arith.divf %301, %302 : vector<8x128xf32>
    %304 = vector.extract_strided_slice %285 {offsets = [0, 384], sizes = [8, 128], strides = [1, 1]} : vector<8x512xf32> to vector<8x128xf32>
    %305 = math.tanh %304 : vector<8x128xf32>
    %306 = arith.mulf %297, %281 : vector<8x128xf32>
    %307 = arith.mulf %291, %305 : vector<8x128xf32>
    %308 = arith.addf %306, %307 : vector<8x128xf32>
    %309 = math.tanh %308 : vector<8x128xf32>
    %310 = arith.mulf %303, %309 : vector<8x128xf32>
    %311 = arith.index_cast %c6_i32 : i32 to index
    %c0_92 = arith.constant 0 : index
    %c0_93 = arith.constant 0 : index
    %312 = vector.load %arg9[%311, %c0_92, %c0_93] : memref<8x8x128xf32, #tpu.memory_space<vmem>>, vector<1x8x128xf32>
    %313 = vector.shape_cast %312 : vector<1x8x128xf32> to vector<8x128xf32>
    %314 = vector.shape_cast %310 : vector<8x128xf32> to vector<1x8x128xf32>
    tpu.vector_store %arg9[%311, %c0_92, %c0_93], %314 {strides = array<i32>} : memref<8x8x128xf32, #tpu.memory_space<vmem>>, vector<1x8x128xf32>,
    %c7_i32 = arith.constant 7 : i32
    %cst_94 = arith.constant dense<0.000000e+00> : vector<8x512xf32>
    %315 = tpu.matmul %310, %10, %cst_94 {dimension_numbers = #tpu.dot_dimension_numbers<[1], [0], [0], [1], [0, 0, 1, 1], [], []>} : vector<8x128xf32>, vector<128x512xf32>, vector<8x512xf32> -> vector<8x512xf32>
    %cst_95 = arith.constant dense<0.000000e+00> : vector<8x128xf32>
    %316 = tpu.matmul %308, %11, %cst_95 {dimension_numbers = #tpu.dot_dimension_numbers<[1], [0], [0], [1], [0, 0, 1, 1], [], []>} : vector<8x128xf32>, vector<128x128xf32>, vector<8x128xf32> -> vector<8x128xf32>
    %317 = vector.broadcast %9 : vector<1x128xf32> to vector<8x128xf32>
    %318 = arith.addf %316, %317 : vector<8x128xf32>
    %319 = math.tanh %318 : vector<8x128xf32>
    %320 = arith.index_cast %c7_i32 : i32 to index
    %c0_96 = arith.constant 0 : index
    %c0_97 = arith.constant 0 : index
    %321 = vector.load %arg12[%320, %c0_96, %c0_97] : memref<8x8x128xf32, #tpu.memory_space<vmem>>, vector<1x8x128xf32>
    %322 = vector.shape_cast %321 : vector<1x8x128xf32> to vector<8x128xf32>
    %323 = arith.mulf %322, %319 : vector<8x128xf32>
    %324 = arith.addf %308, %323 : vector<8x128xf32>
    %325 = arith.index_cast %c7_i32 : i32 to index
    %c0_98 = arith.constant 0 : index
    %c0_99 = arith.constant 0 : index
    %326 = vector.load %arg2[%325, %c0_98, %c0_99] : memref<8x8x512xf32, #tpu.memory_space<vmem>>, vector<1x8x512xf32>
    %327 = vector.shape_cast %326 : vector<1x8x512xf32> to vector<8x512xf32>
    %328 = arith.addf %327, %315 : vector<8x512xf32>
    %329 = vector.extract_strided_slice %328 {offsets = [0, 0], sizes = [8, 128], strides = [1, 1]} : vector<8x512xf32> to vector<8x128xf32>
    %330 = arith.negf %329 : vector<8x128xf32>
    %331 = math.exp %330 : vector<8x128xf32>
    %cst_100 = arith.constant 1.000000e+00 : f32
    %332 = vector.broadcast %cst_100 : f32 to vector<8x128xf32>
    %333 = arith.addf %332, %331 : vector<8x128xf32>
    %334 = arith.divf %332, %333 : vector<8x128xf32>
    %335 = vector.extract_strided_slice %328 {offsets = [0, 128], sizes = [8, 128], strides = [1, 1]} : vector<8x512xf32> to vector<8x128xf32>
    %336 = arith.negf %335 : vector<8x128xf32>
    %337 = math.exp %336 : vector<8x128xf32>
    %cst_101 = arith.constant 1.000000e+00 : f32
    %338 = vector.broadcast %cst_101 : f32 to vector<8x128xf32>
    %339 = arith.addf %338, %337 : vector<8x128xf32>
    %340 = arith.divf %338, %339 : vector<8x128xf32>
    %341 = vector.extract_strided_slice %328 {offsets = [0, 256], sizes = [8, 128], strides = [1, 1]} : vector<8x512xf32> to vector<8x128xf32>
    %342 = arith.negf %341 : vector<8x128xf32>
    %343 = math.exp %342 : vector<8x128xf32>
    %cst_102 = arith.constant 1.000000e+00 : f32
    %344 = vector.broadcast %cst_102 : f32 to vector<8x128xf32>
    %345 = arith.addf %344, %343 : vector<8x128xf32>
    %346 = arith.divf %344, %345 : vector<8x128xf32>
    %347 = vector.extract_strided_slice %328 {offsets = [0, 384], sizes = [8, 128], strides = [1, 1]} : vector<8x512xf32> to vector<8x128xf32>
    %348 = math.tanh %347 : vector<8x128xf32>
    %349 = arith.mulf %340, %324 : vector<8x128xf32>
    %350 = arith.mulf %334, %348 : vector<8x128xf32>
    %351 = arith.addf %349, %350 : vector<8x128xf32>
    %352 = math.tanh %351 : vector<8x128xf32>
    %353 = arith.mulf %346, %352 : vector<8x128xf32>
    %354 = arith.index_cast %c7_i32 : i32 to index
    %c0_103 = arith.constant 0 : index
    %c0_104 = arith.constant 0 : index
    %355 = vector.load %arg9[%354, %c0_103, %c0_104] : memref<8x8x128xf32, #tpu.memory_space<vmem>>, vector<1x8x128xf32>
    %356 = vector.shape_cast %355 : vector<1x8x128xf32> to vector<8x128xf32>
    %357 = vector.shape_cast %353 : vector<8x128xf32> to vector<1x8x128xf32>
    tpu.vector_store %arg9[%354, %c0_103, %c0_104], %357 {strides = array<i32>} : memref<8x8x128xf32, #tpu.memory_space<vmem>>, vector<1x8x128xf32>,
    %c8_i32 = arith.constant 8 : i32
    %c0_105 = arith.constant 0 : index
    %c0_106 = arith.constant 0 : index
    %358 = vector.load %arg10[%c0_105, %c0_106] : memref<8x128xf32, #tpu.memory_space<vmem>>, vector<8x128xf32>
    tpu.vector_store %arg10[%c0_105, %c0_106], %353 {strides = array<i32>} : memref<8x128xf32, #tpu.memory_space<vmem>>, vector<8x128xf32>,
    %c0_107 = arith.constant 0 : index
    %c0_108 = arith.constant 0 : index
    %359 = vector.load %arg11[%c0_107, %c0_108] : memref<8x128xf32, #tpu.memory_space<vmem>>, vector<8x128xf32>
    tpu.vector_store %arg11[%c0_107, %c0_108], %351 {strides = array<i32>} : memref<8x128xf32, #tpu.memory_space<vmem>>, vector<8x128xf32>,
    return
  }
  func.func @transform_0(%arg0: i32, %arg1: i32) -> (i32, i32, i32) {
    %c0_i32 = arith.constant 0 : i32
    %c0_i32_0 = arith.constant 0 : i32
    return %arg1, %arg0, %c0_i32 : i32, i32, i32
  }
  func.func @transform_1(%arg0: i32, %arg1: i32) -> (i32, i32, i32) {
    %c0_i32 = arith.constant 0 : i32
    %c0_i32_0 = arith.constant 0 : i32
    return %arg1, %arg0, %c0_i32 : i32, i32, i32
  }
  func.func @transform_2(%arg0: i32, %arg1: i32) -> (i32, i32) {
    %c0_i32 = arith.constant 0 : i32
    %c0_i32_0 = arith.constant 0 : i32
    return %arg0, %c0_i32 : i32, i32
  }
  func.func @transform_3(%arg0: i32, %arg1: i32) -> (i32, i32) {
    %c0_i32 = arith.constant 0 : i32
    %c0_i32_0 = arith.constant 0 : i32
    return %arg0, %c0_i32 : i32, i32
  }
  func.func @transform_4(%arg0: i32, %arg1: i32) -> (i32, i32) {
    %c0_i32 = arith.constant 0 : i32
    %c0_i32_0 = arith.constant 0 : i32
    %c0_i32_1 = arith.constant 0 : i32
    return %c0_i32, %c0_i32_0 : i32, i32
  }
  func.func @transform_5(%arg0: i32, %arg1: i32) -> (i32, i32) {
    %c0_i32 = arith.constant 0 : i32
    %c0_i32_0 = arith.constant 0 : i32
    %c0_i32_1 = arith.constant 0 : i32
    return %c0_i32, %c0_i32_0 : i32, i32
  }
  func.func @transform_6(%arg0: i32, %arg1: i32) -> (i32, i32) {
    %c0_i32 = arith.constant 0 : i32
    %c0_i32_0 = arith.constant 0 : i32
    %c0_i32_1 = arith.constant 0 : i32
    return %c0_i32, %c0_i32_0 : i32, i32
  }
  func.func @transform_7(%arg0: i32, %arg1: i32) -> (i32, i32, i32) {
    %c0_i32 = arith.constant 0 : i32
    %c0_i32_0 = arith.constant 0 : i32
    return %arg1, %arg0, %c0_i32 : i32, i32, i32
  }
  func.func @transform_8(%arg0: i32, %arg1: i32) -> (i32, i32) {
    %c0_i32 = arith.constant 0 : i32
    %c0_i32_0 = arith.constant 0 : i32
    return %arg0, %c0_i32 : i32, i32
  }
  func.func @transform_9(%arg0: i32, %arg1: i32) -> (i32, i32) {
    %c0_i32 = arith.constant 0 : i32
    %c0_i32_0 = arith.constant 0 : i32
    return %arg0, %c0_i32 : i32, i32
  }
}

module attributes {stable_mosaic.version = 11 : i64} {
  func.func @kernel(%arg0: i32, %arg1: i32, %arg2: memref<8x8x512xf32, #tpu.memory_space<vmem>>, %arg3: memref<8x8x1xf32, #tpu.memory_space<vmem>>, %arg4: memref<8x128xf32, #tpu.memory_space<vmem>>, %arg5: memref<8x128xf32, #tpu.memory_space<vmem>>, %arg6: memref<128x512xf32, #tpu.memory_space<vmem>>, %arg7: memref<128x128xf32, #tpu.memory_space<vmem>>, %arg8: memref<1x128xf32, #tpu.memory_space<vmem>>, %arg9: memref<8x8x128xf32, #tpu.memory_space<vmem>>, %arg10: memref<8x128xf32, #tpu.memory_space<vmem>>, %arg11: memref<8x128xf32, #tpu.memory_space<vmem>>, %arg12: memref<8x8x128xf32, #tpu.memory_space<vmem>>) attributes {dimension_semantics = [#tpu.dimension_semantics<arbitrary>, #tpu.dimension_semantics<arbitrary>], iteration_bounds = array<i64: 1, 1>, scalar_prefetch = 0 : i64, scratch_operands = 1 : i64, tpu.core_type = #tpu.core_type<tc>, window_params = [{transform_indices = @transform_0, window_bounds = array<i64: 8, 8, 512>}, {transform_indices = @transform_1, window_bounds = array<i64: 8, 8, 1>}, {transform_indices = @transform_2, window_bounds = array<i64: 8, 128>}, {transform_indices = @transform_3, window_bounds = array<i64: 8, 128>}, {pipeline_mode = #tpu.pipeline_mode<synchronous>, transform_indices = @transform_4, window_bounds = array<i64: 128, 512>}, {pipeline_mode = #tpu.pipeline_mode<synchronous>, transform_indices = @transform_5, window_bounds = array<i64: 128, 128>}, {pipeline_mode = #tpu.pipeline_mode<synchronous>, transform_indices = @transform_6, window_bounds = array<i64: 1, 128>}, {transform_indices = @transform_7, window_bounds = array<i64: 8, 8, 128>}, {transform_indices = @transform_8, window_bounds = array<i64: 8, 128>}, {transform_indices = @transform_9, window_bounds = array<i64: 8, 128>}]} {
    %c0_i32 = arith.constant 0 : i32
    %0 = arith.cmpi eq, %arg1, %c0_i32 : i32
    %1 = arith.extui %0 : i1 to i32
    %c0_i32_0 = arith.constant 0 : i32
    %2 = arith.cmpi ne, %1, %c0_i32_0 : i32
    scf.if %2 {
      %c0_109 = arith.constant 0 : index
      %c0_110 = arith.constant 0 : index
      %360 = vector.load %arg4[%c0_109, %c0_110] : memref<8x128xf32, #tpu.memory_space<vmem>>, vector<8x128xf32>
      %c0_111 = arith.constant 0 : index
      %c0_112 = arith.constant 0 : index
      %361 = vector.load %arg10[%c0_111, %c0_112] : memref<8x128xf32, #tpu.memory_space<vmem>>, vector<8x128xf32>
      tpu.vector_store %arg10[%c0_111, %c0_112], %360 {strides = array<i32>} : memref<8x128xf32, #tpu.memory_space<vmem>>, vector<8x128xf32>,
      %c0_113 = arith.constant 0 : index
      %c0_114 = arith.constant 0 : index
      %362 = vector.load %arg5[%c0_113, %c0_114] : memref<8x128xf32, #tpu.memory_space<vmem>>, vector<8x128xf32>
      %c0_115 = arith.constant 0 : index
      %c0_116 = arith.constant 0 : index
      %363 = vector.load %arg11[%c0_115, %c0_116] : memref<8x128xf32, #tpu.memory_space<vmem>>, vector<8x128xf32>
      tpu.vector_store %arg11[%c0_115, %c0_116], %362 {strides = array<i32>} : memref<8x128xf32, #tpu.memory_space<vmem>>, vector<8x128xf32>,
    } else {
    }
    %c0 = arith.constant 0 : index
    %c0_1 = arith.constant 0 : index
    %c0_2 = arith.constant 0 : index
    %3 = vector.load %arg3[%c0, %c0_1, %c0_2] : memref<8x8x1xf32, #tpu.memory_space<vmem>>, vector<8x8x1xf32>
    %4 = vector.shape_cast %3 : vector<8x8x1xf32> to vector<8x8x1xf32>
    %5 = vector.broadcast %4 : vector<8x8x1xf32> to vector<8x8x128xf32>
    %cst = arith.constant 1.000000e+00 : f32
    %6 = vector.broadcast %cst : f32 to vector<8x8x128xf32>
    %7 = arith.subf %5, %6 : vector<8x8x128xf32>
    %c0_3 = arith.constant 0 : index
    %c0_4 = arith.constant 0 : index
    %c0_5 = arith.constant 0 : index
    %8 = vector.load %arg12[%c0_3, %c0_4, %c0_5] : memref<8x8x128xf32, #tpu.memory_space<vmem>>, vector<8x8x128xf32>
    tpu.vector_store %arg12[%c0_3, %c0_4, %c0_5], %7 {strides = array<i32>} : memref<8x8x128xf32, #tpu.memory_space<vmem>>, vector<8x8x128xf32>,
    %c0_6 = arith.constant 0 : index
    %c0_7 = arith.constant 0 : index
    %9 = vector.load %arg8[%c0_6, %c0_7] : memref<1x128xf32, #tpu.memory_space<vmem>>, vector<1x128xf32>
    %c0_8 = arith.constant 0 : index
    %c0_9 = arith.constant 0 : index
    %10 = vector.load %arg6[%c0_8, %c0_9] : memref<128x512xf32, #tpu.memory_space<vmem>>, vector<128x512xf32>
    %c0_10 = arith.constant 0 : index
    %c0_11 = arith.constant 0 : index
    %11 = vector.load %arg7[%c0_10, %c0_11] : memref<128x128xf32, #tpu.memory_space<vmem>>, vector<128x128xf32>
    %c0_12 = arith.constant 0 : index
    %c0_13 = arith.constant 0 : index
    %12 = vector.load %arg10[%c0_12, %c0_13] : memref<8x128xf32, #tpu.memory_space<vmem>>, vector<8x128xf32>
    %c0_14 = arith.constant 0 : index
    %c0_15 = arith.constant 0 : index
    %13 = vector.load %arg11[%c0_14, %c0_15] : memref<8x128xf32, #tpu.memory_space<vmem>>, vector<8x128xf32>
    %c0_i32_16 = arith.constant 0 : i32
    %cst_17 = arith.constant dense<0.000000e+00> : vector<8x512xf32>
    %14 = tpu.matmul %12, %10, %cst_17 {dimension_numbers = #tpu.dot_dimension_numbers<[1], [0], [0], [1], [0, 0, 1, 1], [], []>} : vector<8x128xf32>, vector<128x512xf32>, vector<8x512xf32> -> vector<8x512xf32>
    %cst_18 = arith.constant dense<0.000000e+00> : vector<8x128xf32>
    %15 = tpu.matmul %13, %11, %cst_18 {dimension_numbers = #tpu.dot_dimension_numbers<[1], [0], [0], [1], [0, 0, 1, 1], [], []>} : vector<8x128xf32>, vector<128x128xf32>, vector<8x128xf32> -> vector<8x128xf32>
    %16 = vector.broadcast %9 : vector<1x128xf32> to vector<8x128xf32>
    %17 = arith.addf %15, %16 : vector<8x128xf32>
    %18 = math.tanh %17 : vector<8x128xf32>
    %19 = arith.index_cast %c0_i32_16 : i32 to index
    %c0_19 = arith.constant 0 : index
    %c0_20 = arith.constant 0 : index
    %20 = vector.load %arg12[%19, %c0_19, %c0_20] : memref<8x8x128xf32, #tpu.memory_space<vmem>>, vector<1x8x128xf32>
    %21 = vector.shape_cast %20 : vector<1x8x128xf32> to vector<8x128xf32>
    %22 = arith.mulf %21, %18 : vector<8x128xf32>
    %23 = arith.addf %13, %22 : vector<8x128xf32>
    %24 = arith.index_cast %c0_i32_16 : i32 to index
    %c0_21 = arith.constant 0 : index
    %c0_22 = arith.constant 0 : index
    %25 = vector.load %arg2[%24, %c0_21, %c0_22] : memref<8x8x512xf32, #tpu.memory_space<vmem>>, vector<1x8x512xf32>
    %26 = vector.shape_cast %25 : vector<1x8x512xf32> to vector<8x512xf32>
    %27 = arith.addf %26, %14 : vector<8x512xf32>
    %28 = vector.extract_strided_slice %27 {offsets = [0, 0], sizes = [8, 128], strides = [1, 1]} : vector<8x512xf32> to vector<8x128xf32>
    %29 = arith.negf %28 : vector<8x128xf32>
    %30 = math.exp %29 : vector<8x128xf32>
    %cst_23 = arith.constant 1.000000e+00 : f32
    %31 = vector.broadcast %cst_23 : f32 to vector<8x128xf32>
    %32 = arith.addf %31, %30 : vector<8x128xf32>
    %33 = arith.divf %31, %32 : vector<8x128xf32>
    %34 = vector.extract_strided_slice %27 {offsets = [0, 128], sizes = [8, 128], strides = [1, 1]} : vector<8x512xf32> to vector<8x128xf32>
    %35 = arith.negf %34 : vector<8x128xf32>
    %36 = math.exp %35 : vector<8x128xf32>
    %cst_24 = arith.constant 1.000000e+00 : f32
    %37 = vector.broadcast %cst_24 : f32 to vector<8x128xf32>
    %38 = arith.addf %37, %36 : vector<8x128xf32>
    %39 = arith.divf %37, %38 : vector<8x128xf32>
    %40 = vector.extract_strided_slice %27 {offsets = [0, 256], sizes = [8, 128], strides = [1, 1]} : vector<8x512xf32> to vector<8x128xf32>
    %41 = arith.negf %40 : vector<8x128xf32>
    %42 = math.exp %41 : vector<8x128xf32>
    %cst_25 = arith.constant 1.000000e+00 : f32
    %43 = vector.broadcast %cst_25 : f32 to vector<8x128xf32>
    %44 = arith.addf %43, %42 : vector<8x128xf32>
    %45 = arith.divf %43, %44 : vector<8x128xf32>
    %46 = vector.extract_strided_slice %27 {offsets = [0, 384], sizes = [8, 128], strides = [1, 1]} : vector<8x512xf32> to vector<8x128xf32>
    %47 = math.tanh %46 : vector<8x128xf32>
    %48 = arith.mulf %39, %23 : vector<8x128xf32>
    %49 = arith.mulf %33, %47 : vector<8x128xf32>
    %50 = arith.addf %48, %49 : vector<8x128xf32>
    %51 = math.tanh %50 : vector<8x128xf32>
    %52 = arith.mulf %45, %51 : vector<8x128xf32>
    %53 = arith.index_cast %c0_i32_16 : i32 to index
    %c0_26 = arith.constant 0 : index
    %c0_27 = arith.constant 0 : index
    %54 = vector.load %arg9[%53, %c0_26, %c0_27] : memref<8x8x128xf32, #tpu.memory_space<vmem>>, vector<1x8x128xf32>
    %55 = vector.shape_cast %54 : vector<1x8x128xf32> to vector<8x128xf32>
    %56 = vector.shape_cast %52 : vector<8x128xf32> to vector<1x8x128xf32>
    tpu.vector_store %arg9[%53, %c0_26, %c0_27], %56 {strides = array<i32>} : memref<8x8x128xf32, #tpu.memory_space<vmem>>, vector<1x8x128xf32>,
    %c1_i32 = arith.constant 1 : i32
    %cst_28 = arith.constant dense<0.000000e+00> : vector<8x512xf32>
    %57 = tpu.matmul %52, %10, %cst_28 {dimension_numbers = #tpu.dot_dimension_numbers<[1], [0], [0], [1], [0, 0, 1, 1], [], []>} : vector<8x128xf32>, vector<128x512xf32>, vector<8x512xf32> -> vector<8x512xf32>
    %cst_29 = arith.constant dense<0.000000e+00> : vector<8x128xf32>
    %58 = tpu.matmul %50, %11, %cst_29 {dimension_numbers = #tpu.dot_dimension_numbers<[1], [0], [0], [1], [0, 0, 1, 1], [], []>} : vector<8x128xf32>, vector<128x128xf32>, vector<8x128xf32> -> vector<8x128xf32>
    %59 = vector.broadcast %9 : vector<1x128xf32> to vector<8x128xf32>
    %60 = arith.addf %58, %59 : vector<8x128xf32>
    %61 = math.tanh %60 : vector<8x128xf32>
    %62 = arith.index_cast %c1_i32 : i32 to index
    %c0_30 = arith.constant 0 : index
    %c0_31 = arith.constant 0 : index
    %63 = vector.load %arg12[%62, %c0_30, %c0_31] : memref<8x8x128xf32, #tpu.memory_space<vmem>>, vector<1x8x128xf32>
    %64 = vector.shape_cast %63 : vector<1x8x128xf32> to vector<8x128xf32>
    %65 = arith.mulf %64, %61 : vector<8x128xf32>
    %66 = arith.addf %50, %65 : vector<8x128xf32>
    %67 = arith.index_cast %c1_i32 : i32 to index
    %c0_32 = arith.constant 0 : index
    %c0_33 = arith.constant 0 : index
    %68 = vector.load %arg2[%67, %c0_32, %c0_33] : memref<8x8x512xf32, #tpu.memory_space<vmem>>, vector<1x8x512xf32>
    %69 = vector.shape_cast %68 : vector<1x8x512xf32> to vector<8x512xf32>
    %70 = arith.addf %69, %57 : vector<8x512xf32>
    %71 = vector.extract_strided_slice %70 {offsets = [0, 0], sizes = [8, 128], strides = [1, 1]} : vector<8x512xf32> to vector<8x128xf32>
    %72 = arith.negf %71 : vector<8x128xf32>
    %73 = math.exp %72 : vector<8x128xf32>
    %cst_34 = arith.constant 1.000000e+00 : f32
    %74 = vector.broadcast %cst_34 : f32 to vector<8x128xf32>
    %75 = arith.addf %74, %73 : vector<8x128xf32>
    %76 = arith.divf %74, %75 : vector<8x128xf32>
    %77 = vector.extract_strided_slice %70 {offsets = [0, 128], sizes = [8, 128], strides = [1, 1]} : vector<8x512xf32> to vector<8x128xf32>
    %78 = arith.negf %77 : vector<8x128xf32>
    %79 = math.exp %78 : vector<8x128xf32>
    %cst_35 = arith.constant 1.000000e+00 : f32
    %80 = vector.broadcast %cst_35 : f32 to vector<8x128xf32>
    %81 = arith.addf %80, %79 : vector<8x128xf32>
    %82 = arith.divf %80, %81 : vector<8x128xf32>
    %83 = vector.extract_strided_slice %70 {offsets = [0, 256], sizes = [8, 128], strides = [1, 1]} : vector<8x512xf32> to vector<8x128xf32>
    %84 = arith.negf %83 : vector<8x128xf32>
    %85 = math.exp %84 : vector<8x128xf32>
    %cst_36 = arith.constant 1.000000e+00 : f32
    %86 = vector.broadcast %cst_36 : f32 to vector<8x128xf32>
    %87 = arith.addf %86, %85 : vector<8x128xf32>
    %88 = arith.divf %86, %87 : vector<8x128xf32>
    %89 = vector.extract_strided_slice %70 {offsets = [0, 384], sizes = [8, 128], strides = [1, 1]} : vector<8x512xf32> to vector<8x128xf32>
    %90 = math.tanh %89 : vector<8x128xf32>
    %91 = arith.mulf %82, %66 : vector<8x128xf32>
    %92 = arith.mulf %76, %90 : vector<8x128xf32>
    %93 = arith.addf %91, %92 : vector<8x128xf32>
    %94 = math.tanh %93 : vector<8x128xf32>
    %95 = arith.mulf %88, %94 : vector<8x128xf32>
    %96 = arith.index_cast %c1_i32 : i32 to index
    %c0_37 = arith.constant 0 : index
    %c0_38 = arith.constant 0 : index
    %97 = vector.load %arg9[%96, %c0_37, %c0_38] : memref<8x8x128xf32, #tpu.memory_space<vmem>>, vector<1x8x128xf32>
    %98 = vector.shape_cast %97 : vector<1x8x128xf32> to vector<8x128xf32>
    %99 = vector.shape_cast %95 : vector<8x128xf32> to vector<1x8x128xf32>
    tpu.vector_store %arg9[%96, %c0_37, %c0_38], %99 {strides = array<i32>} : memref<8x8x128xf32, #tpu.memory_space<vmem>>, vector<1x8x128xf32>,
    %c2_i32 = arith.constant 2 : i32
    %cst_39 = arith.constant dense<0.000000e+00> : vector<8x512xf32>
    %100 = tpu.matmul %95, %10, %cst_39 {dimension_numbers = #tpu.dot_dimension_numbers<[1], [0], [0], [1], [0, 0, 1, 1], [], []>} : vector<8x128xf32>, vector<128x512xf32>, vector<8x512xf32> -> vector<8x512xf32>
    %cst_40 = arith.constant dense<0.000000e+00> : vector<8x128xf32>
    %101 = tpu.matmul %93, %11, %cst_40 {dimension_numbers = #tpu.dot_dimension_numbers<[1], [0], [0], [1], [0, 0, 1, 1], [], []>} : vector<8x128xf32>, vector<128x128xf32>, vector<8x128xf32> -> vector<8x128xf32>
    %102 = vector.broadcast %9 : vector<1x128xf32> to vector<8x128xf32>
    %103 = arith.addf %101, %102 : vector<8x128xf32>
    %104 = math.tanh %103 : vector<8x128xf32>
    %105 = arith.index_cast %c2_i32 : i32 to index
    %c0_41 = arith.constant 0 : index
    %c0_42 = arith.constant 0 : index
    %106 = vector.load %arg12[%105, %c0_41, %c0_42] : memref<8x8x128xf32, #tpu.memory_space<vmem>>, vector<1x8x128xf32>
    %107 = vector.shape_cast %106 : vector<1x8x128xf32> to vector<8x128xf32>
    %108 = arith.mulf %107, %104 : vector<8x128xf32>
    %109 = arith.addf %93, %108 : vector<8x128xf32>
    %110 = arith.index_cast %c2_i32 : i32 to index
    %c0_43 = arith.constant 0 : index
    %c0_44 = arith.constant 0 : index
    %111 = vector.load %arg2[%110, %c0_43, %c0_44] : memref<8x8x512xf32, #tpu.memory_space<vmem>>, vector<1x8x512xf32>
    %112 = vector.shape_cast %111 : vector<1x8x512xf32> to vector<8x512xf32>
    %113 = arith.addf %112, %100 : vector<8x512xf32>
    %114 = vector.extract_strided_slice %113 {offsets = [0, 0], sizes = [8, 128], strides = [1, 1]} : vector<8x512xf32> to vector<8x128xf32>
    %115 = arith.negf %114 : vector<8x128xf32>
    %116 = math.exp %115 : vector<8x128xf32>
    %cst_45 = arith.constant 1.000000e+00 : f32
    %117 = vector.broadcast %cst_45 : f32 to vector<8x128xf32>
    %118 = arith.addf %117, %116 : vector<8x128xf32>
    %119 = arith.divf %117, %118 : vector<8x128xf32>
    %120 = vector.extract_strided_slice %113 {offsets = [0, 128], sizes = [8, 128], strides = [1, 1]} : vector<8x512xf32> to vector<8x128xf32>
    %121 = arith.negf %120 : vector<8x128xf32>
    %122 = math.exp %121 : vector<8x128xf32>
    %cst_46 = arith.constant 1.000000e+00 : f32
    %123 = vector.broadcast %cst_46 : f32 to vector<8x128xf32>
    %124 = arith.addf %123, %122 : vector<8x128xf32>
    %125 = arith.divf %123, %124 : vector<8x128xf32>
    %126 = vector.extract_strided_slice %113 {offsets = [0, 256], sizes = [8, 128], strides = [1, 1]} : vector<8x512xf32> to vector<8x128xf32>
    %127 = arith.negf %126 : vector<8x128xf32>
    %128 = math.exp %127 : vector<8x128xf32>
    %cst_47 = arith.constant 1.000000e+00 : f32
    %129 = vector.broadcast %cst_47 : f32 to vector<8x128xf32>
    %130 = arith.addf %129, %128 : vector<8x128xf32>
    %131 = arith.divf %129, %130 : vector<8x128xf32>
    %132 = vector.extract_strided_slice %113 {offsets = [0, 384], sizes = [8, 128], strides = [1, 1]} : vector<8x512xf32> to vector<8x128xf32>
    %133 = math.tanh %132 : vector<8x128xf32>
    %134 = arith.mulf %125, %109 : vector<8x128xf32>
    %135 = arith.mulf %119, %133 : vector<8x128xf32>
    %136 = arith.addf %134, %135 : vector<8x128xf32>
    %137 = math.tanh %136 : vector<8x128xf32>
    %138 = arith.mulf %131, %137 : vector<8x128xf32>
    %139 = arith.index_cast %c2_i32 : i32 to index
    %c0_48 = arith.constant 0 : index
    %c0_49 = arith.constant 0 : index
    %140 = vector.load %arg9[%139, %c0_48, %c0_49] : memref<8x8x128xf32, #tpu.memory_space<vmem>>, vector<1x8x128xf32>
    %141 = vector.shape_cast %140 : vector<1x8x128xf32> to vector<8x128xf32>
    %142 = vector.shape_cast %138 : vector<8x128xf32> to vector<1x8x128xf32>
    tpu.vector_store %arg9[%139, %c0_48, %c0_49], %142 {strides = array<i32>} : memref<8x8x128xf32, #tpu.memory_space<vmem>>, vector<1x8x128xf32>,
    %c3_i32 = arith.constant 3 : i32
    %cst_50 = arith.constant dense<0.000000e+00> : vector<8x512xf32>
    %143 = tpu.matmul %138, %10, %cst_50 {dimension_numbers = #tpu.dot_dimension_numbers<[1], [0], [0], [1], [0, 0, 1, 1], [], []>} : vector<8x128xf32>, vector<128x512xf32>, vector<8x512xf32> -> vector<8x512xf32>
    %cst_51 = arith.constant dense<0.000000e+00> : vector<8x128xf32>
    %144 = tpu.matmul %136, %11, %cst_51 {dimension_numbers = #tpu.dot_dimension_numbers<[1], [0], [0], [1], [0, 0, 1, 1], [], []>} : vector<8x128xf32>, vector<128x128xf32>, vector<8x128xf32> -> vector<8x128xf32>
    %145 = vector.broadcast %9 : vector<1x128xf32> to vector<8x128xf32>
    %146 = arith.addf %144, %145 : vector<8x128xf32>
    %147 = math.tanh %146 : vector<8x128xf32>
    %148 = arith.index_cast %c3_i32 : i32 to index
    %c0_52 = arith.constant 0 : index
    %c0_53 = arith.constant 0 : index
    %149 = vector.load %arg12[%148, %c0_52, %c0_53] : memref<8x8x128xf32, #tpu.memory_space<vmem>>, vector<1x8x128xf32>
    %150 = vector.shape_cast %149 : vector<1x8x128xf32> to vector<8x128xf32>
    %151 = arith.mulf %150, %147 : vector<8x128xf32>
    %152 = arith.addf %136, %151 : vector<8x128xf32>
    %153 = arith.index_cast %c3_i32 : i32 to index
    %c0_54 = arith.constant 0 : index
    %c0_55 = arith.constant 0 : index
    %154 = vector.load %arg2[%153, %c0_54, %c0_55] : memref<8x8x512xf32, #tpu.memory_space<vmem>>, vector<1x8x512xf32>
    %155 = vector.shape_cast %154 : vector<1x8x512xf32> to vector<8x512xf32>
    %156 = arith.addf %155, %143 : vector<8x512xf32>
    %157 = vector.extract_strided_slice %156 {offsets = [0, 0], sizes = [8, 128], strides = [1, 1]} : vector<8x512xf32> to vector<8x128xf32>
    %158 = arith.negf %157 : vector<8x128xf32>
    %159 = math.exp %158 : vector<8x128xf32>
    %cst_56 = arith.constant 1.000000e+00 : f32
    %160 = vector.broadcast %cst_56 : f32 to vector<8x128xf32>
    %161 = arith.addf %160, %159 : vector<8x128xf32>
    %162 = arith.divf %160, %161 : vector<8x128xf32>
    %163 = vector.extract_strided_slice %156 {offsets = [0, 128], sizes = [8, 128], strides = [1, 1]} : vector<8x512xf32> to vector<8x128xf32>
    %164 = arith.negf %163 : vector<8x128xf32>
    %165 = math.exp %164 : vector<8x128xf32>
    %cst_57 = arith.constant 1.000000e+00 : f32
    %166 = vector.broadcast %cst_57 : f32 to vector<8x128xf32>
    %167 = arith.addf %166, %165 : vector<8x128xf32>
    %168 = arith.divf %166, %167 : vector<8x128xf32>
    %169 = vector.extract_strided_slice %156 {offsets = [0, 256], sizes = [8, 128], strides = [1, 1]} : vector<8x512xf32> to vector<8x128xf32>
    %170 = arith.negf %169 : vector<8x128xf32>
    %171 = math.exp %170 : vector<8x128xf32>
    %cst_58 = arith.constant 1.000000e+00 : f32
    %172 = vector.broadcast %cst_58 : f32 to vector<8x128xf32>
    %173 = arith.addf %172, %171 : vector<8x128xf32>
    %174 = arith.divf %172, %173 : vector<8x128xf32>
    %175 = vector.extract_strided_slice %156 {offsets = [0, 384], sizes = [8, 128], strides = [1, 1]} : vector<8x512xf32> to vector<8x128xf32>
    %176 = math.tanh %175 : vector<8x128xf32>
    %177 = arith.mulf %168, %152 : vector<8x128xf32>
    %178 = arith.mulf %162, %176 : vector<8x128xf32>
    %179 = arith.addf %177, %178 : vector<8x128xf32>
    %180 = math.tanh %179 : vector<8x128xf32>
    %181 = arith.mulf %174, %180 : vector<8x128xf32>
    %182 = arith.index_cast %c3_i32 : i32 to index
    %c0_59 = arith.constant 0 : index
    %c0_60 = arith.constant 0 : index
    %183 = vector.load %arg9[%182, %c0_59, %c0_60] : memref<8x8x128xf32, #tpu.memory_space<vmem>>, vector<1x8x128xf32>
    %184 = vector.shape_cast %183 : vector<1x8x128xf32> to vector<8x128xf32>
    %185 = vector.shape_cast %181 : vector<8x128xf32> to vector<1x8x128xf32>
    tpu.vector_store %arg9[%182, %c0_59, %c0_60], %185 {strides = array<i32>} : memref<8x8x128xf32, #tpu.memory_space<vmem>>, vector<1x8x128xf32>,
    %c4_i32 = arith.constant 4 : i32
    %cst_61 = arith.constant dense<0.000000e+00> : vector<8x512xf32>
    %186 = tpu.matmul %181, %10, %cst_61 {dimension_numbers = #tpu.dot_dimension_numbers<[1], [0], [0], [1], [0, 0, 1, 1], [], []>} : vector<8x128xf32>, vector<128x512xf32>, vector<8x512xf32> -> vector<8x512xf32>
    %cst_62 = arith.constant dense<0.000000e+00> : vector<8x128xf32>
    %187 = tpu.matmul %179, %11, %cst_62 {dimension_numbers = #tpu.dot_dimension_numbers<[1], [0], [0], [1], [0, 0, 1, 1], [], []>} : vector<8x128xf32>, vector<128x128xf32>, vector<8x128xf32> -> vector<8x128xf32>
    %188 = vector.broadcast %9 : vector<1x128xf32> to vector<8x128xf32>
    %189 = arith.addf %187, %188 : vector<8x128xf32>
    %190 = math.tanh %189 : vector<8x128xf32>
    %191 = arith.index_cast %c4_i32 : i32 to index
    %c0_63 = arith.constant 0 : index
    %c0_64 = arith.constant 0 : index
    %192 = vector.load %arg12[%191, %c0_63, %c0_64] : memref<8x8x128xf32, #tpu.memory_space<vmem>>, vector<1x8x128xf32>
    %193 = vector.shape_cast %192 : vector<1x8x128xf32> to vector<8x128xf32>
    %194 = arith.mulf %193, %190 : vector<8x128xf32>
    %195 = arith.addf %179, %194 : vector<8x128xf32>
    %196 = arith.index_cast %c4_i32 : i32 to index
    %c0_65 = arith.constant 0 : index
    %c0_66 = arith.constant 0 : index
    %197 = vector.load %arg2[%196, %c0_65, %c0_66] : memref<8x8x512xf32, #tpu.memory_space<vmem>>, vector<1x8x512xf32>
    %198 = vector.shape_cast %197 : vector<1x8x512xf32> to vector<8x512xf32>
    %199 = arith.addf %198, %186 : vector<8x512xf32>
    %200 = vector.extract_strided_slice %199 {offsets = [0, 0], sizes = [8, 128], strides = [1, 1]} : vector<8x512xf32> to vector<8x128xf32>
    %201 = arith.negf %200 : vector<8x128xf32>
    %202 = math.exp %201 : vector<8x128xf32>
    %cst_67 = arith.constant 1.000000e+00 : f32
    %203 = vector.broadcast %cst_67 : f32 to vector<8x128xf32>
    %204 = arith.addf %203, %202 : vector<8x128xf32>
    %205 = arith.divf %203, %204 : vector<8x128xf32>
    %206 = vector.extract_strided_slice %199 {offsets = [0, 128], sizes = [8, 128], strides = [1, 1]} : vector<8x512xf32> to vector<8x128xf32>
    %207 = arith.negf %206 : vector<8x128xf32>
    %208 = math.exp %207 : vector<8x128xf32>
    %cst_68 = arith.constant 1.000000e+00 : f32
    %209 = vector.broadcast %cst_68 : f32 to vector<8x128xf32>
    %210 = arith.addf %209, %208 : vector<8x128xf32>
    %211 = arith.divf %209, %210 : vector<8x128xf32>
    %212 = vector.extract_strided_slice %199 {offsets = [0, 256], sizes = [8, 128], strides = [1, 1]} : vector<8x512xf32> to vector<8x128xf32>
    %213 = arith.negf %212 : vector<8x128xf32>
    %214 = math.exp %213 : vector<8x128xf32>
    %cst_69 = arith.constant 1.000000e+00 : f32
    %215 = vector.broadcast %cst_69 : f32 to vector<8x128xf32>
    %216 = arith.addf %215, %214 : vector<8x128xf32>
    %217 = arith.divf %215, %216 : vector<8x128xf32>
    %218 = vector.extract_strided_slice %199 {offsets = [0, 384], sizes = [8, 128], strides = [1, 1]} : vector<8x512xf32> to vector<8x128xf32>
    %219 = math.tanh %218 : vector<8x128xf32>
    %220 = arith.mulf %211, %195 : vector<8x128xf32>
    %221 = arith.mulf %205, %219 : vector<8x128xf32>
    %222 = arith.addf %220, %221 : vector<8x128xf32>
    %223 = math.tanh %222 : vector<8x128xf32>
    %224 = arith.mulf %217, %223 : vector<8x128xf32>
    %225 = arith.index_cast %c4_i32 : i32 to index
    %c0_70 = arith.constant 0 : index
    %c0_71 = arith.constant 0 : index
    %226 = vector.load %arg9[%225, %c0_70, %c0_71] : memref<8x8x128xf32, #tpu.memory_space<vmem>>, vector<1x8x128xf32>
    %227 = vector.shape_cast %226 : vector<1x8x128xf32> to vector<8x128xf32>
    %228 = vector.shape_cast %224 : vector<8x128xf32> to vector<1x8x128xf32>
    tpu.vector_store %arg9[%225, %c0_70, %c0_71], %228 {strides = array<i32>} : memref<8x8x128xf32, #tpu.memory_space<vmem>>, vector<1x8x128xf32>,
    %c5_i32 = arith.constant 5 : i32
    %cst_72 = arith.constant dense<0.000000e+00> : vector<8x512xf32>
    %229 = tpu.matmul %224, %10, %cst_72 {dimension_numbers = #tpu.dot_dimension_numbers<[1], [0], [0], [1], [0, 0, 1, 1], [], []>} : vector<8x128xf32>, vector<128x512xf32>, vector<8x512xf32> -> vector<8x512xf32>
    %cst_73 = arith.constant dense<0.000000e+00> : vector<8x128xf32>
    %230 = tpu.matmul %222, %11, %cst_73 {dimension_numbers = #tpu.dot_dimension_numbers<[1], [0], [0], [1], [0, 0, 1, 1], [], []>} : vector<8x128xf32>, vector<128x128xf32>, vector<8x128xf32> -> vector<8x128xf32>
    %231 = vector.broadcast %9 : vector<1x128xf32> to vector<8x128xf32>
    %232 = arith.addf %230, %231 : vector<8x128xf32>
    %233 = math.tanh %232 : vector<8x128xf32>
    %234 = arith.index_cast %c5_i32 : i32 to index
    %c0_74 = arith.constant 0 : index
    %c0_75 = arith.constant 0 : index
    %235 = vector.load %arg12[%234, %c0_74, %c0_75] : memref<8x8x128xf32, #tpu.memory_space<vmem>>, vector<1x8x128xf32>
    %236 = vector.shape_cast %235 : vector<1x8x128xf32> to vector<8x128xf32>
    %237 = arith.mulf %236, %233 : vector<8x128xf32>
    %238 = arith.addf %222, %237 : vector<8x128xf32>
    %239 = arith.index_cast %c5_i32 : i32 to index
    %c0_76 = arith.constant 0 : index
    %c0_77 = arith.constant 0 : index
    %240 = vector.load %arg2[%239, %c0_76, %c0_77] : memref<8x8x512xf32, #tpu.memory_space<vmem>>, vector<1x8x512xf32>
    %241 = vector.shape_cast %240 : vector<1x8x512xf32> to vector<8x512xf32>
    %242 = arith.addf %241, %229 : vector<8x512xf32>
    %243 = vector.extract_strided_slice %242 {offsets = [0, 0], sizes = [8, 128], strides = [1, 1]} : vector<8x512xf32> to vector<8x128xf32>
    %244 = arith.negf %243 : vector<8x128xf32>
    %245 = math.exp %244 : vector<8x128xf32>
    %cst_78 = arith.constant 1.000000e+00 : f32
    %246 = vector.broadcast %cst_78 : f32 to vector<8x128xf32>
    %247 = arith.addf %246, %245 : vector<8x128xf32>
    %248 = arith.divf %246, %247 : vector<8x128xf32>
    %249 = vector.extract_strided_slice %242 {offsets = [0, 128], sizes = [8, 128], strides = [1, 1]} : vector<8x512xf32> to vector<8x128xf32>
    %250 = arith.negf %249 : vector<8x128xf32>
    %251 = math.exp %250 : vector<8x128xf32>
    %cst_79 = arith.constant 1.000000e+00 : f32
    %252 = vector.broadcast %cst_79 : f32 to vector<8x128xf32>
    %253 = arith.addf %252, %251 : vector<8x128xf32>
    %254 = arith.divf %252, %253 : vector<8x128xf32>
    %255 = vector.extract_strided_slice %242 {offsets = [0, 256], sizes = [8, 128], strides = [1, 1]} : vector<8x512xf32> to vector<8x128xf32>
    %256 = arith.negf %255 : vector<8x128xf32>
    %257 = math.exp %256 : vector<8x128xf32>
    %cst_80 = arith.constant 1.000000e+00 : f32
    %258 = vector.broadcast %cst_80 : f32 to vector<8x128xf32>
    %259 = arith.addf %258, %257 : vector<8x128xf32>
    %260 = arith.divf %258, %259 : vector<8x128xf32>
    %261 = vector.extract_strided_slice %242 {offsets = [0, 384], sizes = [8, 128], strides = [1, 1]} : vector<8x512xf32> to vector<8x128xf32>
    %262 = math.tanh %261 : vector<8x128xf32>
    %263 = arith.mulf %254, %238 : vector<8x128xf32>
    %264 = arith.mulf %248, %262 : vector<8x128xf32>
    %265 = arith.addf %263, %264 : vector<8x128xf32>
    %266 = math.tanh %265 : vector<8x128xf32>
    %267 = arith.mulf %260, %266 : vector<8x128xf32>
    %268 = arith.index_cast %c5_i32 : i32 to index
    %c0_81 = arith.constant 0 : index
    %c0_82 = arith.constant 0 : index
    %269 = vector.load %arg9[%268, %c0_81, %c0_82] : memref<8x8x128xf32, #tpu.memory_space<vmem>>, vector<1x8x128xf32>
    %270 = vector.shape_cast %269 : vector<1x8x128xf32> to vector<8x128xf32>
    %271 = vector.shape_cast %267 : vector<8x128xf32> to vector<1x8x128xf32>
    tpu.vector_store %arg9[%268, %c0_81, %c0_82], %271 {strides = array<i32>} : memref<8x8x128xf32, #tpu.memory_space<vmem>>, vector<1x8x128xf32>,
    %c6_i32 = arith.constant 6 : i32
    %cst_83 = arith.constant dense<0.000000e+00> : vector<8x512xf32>
    %272 = tpu.matmul %267, %10, %cst_83 {dimension_numbers = #tpu.dot_dimension_numbers<[1], [0], [0], [1], [0, 0, 1, 1], [], []>} : vector<8x128xf32>, vector<128x512xf32>, vector<8x512xf32> -> vector<8x512xf32>
    %cst_84 = arith.constant dense<0.000000e+00> : vector<8x128xf32>
    %273 = tpu.matmul %265, %11, %cst_84 {dimension_numbers = #tpu.dot_dimension_numbers<[1], [0], [0], [1], [0, 0, 1, 1], [], []>} : vector<8x128xf32>, vector<128x128xf32>, vector<8x128xf32> -> vector<8x128xf32>
    %274 = vector.broadcast %9 : vector<1x128xf32> to vector<8x128xf32>
    %275 = arith.addf %273, %274 : vector<8x128xf32>
    %276 = math.tanh %275 : vector<8x128xf32>
    %277 = arith.index_cast %c6_i32 : i32 to index
    %c0_85 = arith.constant 0 : index
    %c0_86 = arith.constant 0 : index
    %278 = vector.load %arg12[%277, %c0_85, %c0_86] : memref<8x8x128xf32, #tpu.memory_space<vmem>>, vector<1x8x128xf32>
    %279 = vector.shape_cast %278 : vector<1x8x128xf32> to vector<8x128xf32>
    %280 = arith.mulf %279, %276 : vector<8x128xf32>
    %281 = arith.addf %265, %280 : vector<8x128xf32>
    %282 = arith.index_cast %c6_i32 : i32 to index
    %c0_87 = arith.constant 0 : index
    %c0_88 = arith.constant 0 : index
    %283 = vector.load %arg2[%282, %c0_87, %c0_88] : memref<8x8x512xf32, #tpu.memory_space<vmem>>, vector<1x8x512xf32>
    %284 = vector.shape_cast %283 : vector<1x8x512xf32> to vector<8x512xf32>
    %285 = arith.addf %284, %272 : vector<8x512xf32>
    %286 = vector.extract_strided_slice %285 {offsets = [0, 0], sizes = [8, 128], strides = [1, 1]} : vector<8x512xf32> to vector<8x128xf32>
    %287 = arith.negf %286 : vector<8x128xf32>
    %288 = math.exp %287 : vector<8x128xf32>
    %cst_89 = arith.constant 1.000000e+00 : f32
    %289 = vector.broadcast %cst_89 : f32 to vector<8x128xf32>
    %290 = arith.addf %289, %288 : vector<8x128xf32>
    %291 = arith.divf %289, %290 : vector<8x128xf32>
    %292 = vector.extract_strided_slice %285 {offsets = [0, 128], sizes = [8, 128], strides = [1, 1]} : vector<8x512xf32> to vector<8x128xf32>
    %293 = arith.negf %292 : vector<8x128xf32>
    %294 = math.exp %293 : vector<8x128xf32>
    %cst_90 = arith.constant 1.000000e+00 : f32
    %295 = vector.broadcast %cst_90 : f32 to vector<8x128xf32>
    %296 = arith.addf %295, %294 : vector<8x128xf32>
    %297 = arith.divf %295, %296 : vector<8x128xf32>
    %298 = vector.extract_strided_slice %285 {offsets = [0, 256], sizes = [8, 128], strides = [1, 1]} : vector<8x512xf32> to vector<8x128xf32>
    %299 = arith.negf %298 : vector<8x128xf32>
    %300 = math.exp %299 : vector<8x128xf32>
    %cst_91 = arith.constant 1.000000e+00 : f32
    %301 = vector.broadcast %cst_91 : f32 to vector<8x128xf32>
    %302 = arith.addf %301, %300 : vector<8x128xf32>
    %303 = arith.divf %301, %302 : vector<8x128xf32>
    %304 = vector.extract_strided_slice %285 {offsets = [0, 384], sizes = [8, 128], strides = [1, 1]} : vector<8x512xf32> to vector<8x128xf32>
    %305 = math.tanh %304 : vector<8x128xf32>
    %306 = arith.mulf %297, %281 : vector<8x128xf32>
    %307 = arith.mulf %291, %305 : vector<8x128xf32>
    %308 = arith.addf %306, %307 : vector<8x128xf32>
    %309 = math.tanh %308 : vector<8x128xf32>
    %310 = arith.mulf %303, %309 : vector<8x128xf32>
    %311 = arith.index_cast %c6_i32 : i32 to index
    %c0_92 = arith.constant 0 : index
    %c0_93 = arith.constant 0 : index
    %312 = vector.load %arg9[%311, %c0_92, %c0_93] : memref<8x8x128xf32, #tpu.memory_space<vmem>>, vector<1x8x128xf32>
    %313 = vector.shape_cast %312 : vector<1x8x128xf32> to vector<8x128xf32>
    %314 = vector.shape_cast %310 : vector<8x128xf32> to vector<1x8x128xf32>
    tpu.vector_store %arg9[%311, %c0_92, %c0_93], %314 {strides = array<i32>} : memref<8x8x128xf32, #tpu.memory_space<vmem>>, vector<1x8x128xf32>,
    %c7_i32 = arith.constant 7 : i32
    %cst_94 = arith.constant dense<0.000000e+00> : vector<8x512xf32>
    %315 = tpu.matmul %310, %10, %cst_94 {dimension_numbers = #tpu.dot_dimension_numbers<[1], [0], [0], [1], [0, 0, 1, 1], [], []>} : vector<8x128xf32>, vector<128x512xf32>, vector<8x512xf32> -> vector<8x512xf32>
    %cst_95 = arith.constant dense<0.000000e+00> : vector<8x128xf32>
    %316 = tpu.matmul %308, %11, %cst_95 {dimension_numbers = #tpu.dot_dimension_numbers<[1], [0], [0], [1], [0, 0, 1, 1], [], []>} : vector<8x128xf32>, vector<128x128xf32>, vector<8x128xf32> -> vector<8x128xf32>
    %317 = vector.broadcast %9 : vector<1x128xf32> to vector<8x128xf32>
    %318 = arith.addf %316, %317 : vector<8x128xf32>
    %319 = math.tanh %318 : vector<8x128xf32>
    %320 = arith.index_cast %c7_i32 : i32 to index
    %c0_96 = arith.constant 0 : index
    %c0_97 = arith.constant 0 : index
    %321 = vector.load %arg12[%320, %c0_96, %c0_97] : memref<8x8x128xf32, #tpu.memory_space<vmem>>, vector<1x8x128xf32>
    %322 = vector.shape_cast %321 : vector<1x8x128xf32> to vector<8x128xf32>
    %323 = arith.mulf %322, %319 : vector<8x128xf32>
    %324 = arith.addf %308, %323 : vector<8x128xf32>
    %325 = arith.index_cast %c7_i32 : i32 to index
    %c0_98 = arith.constant 0 : index
    %c0_99 = arith.constant 0 : index
    %326 = vector.load %arg2[%325, %c0_98, %c0_99] : memref<8x8x512xf32, #tpu.memory_space<vmem>>, vector<1x8x512xf32>
    %327 = vector.shape_cast %326 : vector<1x8x512xf32> to vector<8x512xf32>
    %328 = arith.addf %327, %315 : vector<8x512xf32>
    %329 = vector.extract_strided_slice %328 {offsets = [0, 0], sizes = [8, 128], strides = [1, 1]} : vector<8x512xf32> to vector<8x128xf32>
    %330 = arith.negf %329 : vector<8x128xf32>
    %331 = math.exp %330 : vector<8x128xf32>
    %cst_100 = arith.constant 1.000000e+00 : f32
    %332 = vector.broadcast %cst_100 : f32 to vector<8x128xf32>
    %333 = arith.addf %332, %331 : vector<8x128xf32>
    %334 = arith.divf %332, %333 : vector<8x128xf32>
    %335 = vector.extract_strided_slice %328 {offsets = [0, 128], sizes = [8, 128], strides = [1, 1]} : vector<8x512xf32> to vector<8x128xf32>
    %336 = arith.negf %335 : vector<8x128xf32>
    %337 = math.exp %336 : vector<8x128xf32>
    %cst_101 = arith.constant 1.000000e+00 : f32
    %338 = vector.broadcast %cst_101 : f32 to vector<8x128xf32>
    %339 = arith.addf %338, %337 : vector<8x128xf32>
    %340 = arith.divf %338, %339 : vector<8x128xf32>
    %341 = vector.extract_strided_slice %328 {offsets = [0, 256], sizes = [8, 128], strides = [1, 1]} : vector<8x512xf32> to vector<8x128xf32>
    %342 = arith.negf %341 : vector<8x128xf32>
    %343 = math.exp %342 : vector<8x128xf32>
    %cst_102 = arith.constant 1.000000e+00 : f32
    %344 = vector.broadcast %cst_102 : f32 to vector<8x128xf32>
    %345 = arith.addf %344, %343 : vector<8x128xf32>
    %346 = arith.divf %344, %345 : vector<8x128xf32>
    %347 = vector.extract_strided_slice %328 {offsets = [0, 384], sizes = [8, 128], strides = [1, 1]} : vector<8x512xf32> to vector<8x128xf32>
    %348 = math.tanh %347 : vector<8x128xf32>
    %349 = arith.mulf %340, %324 : vector<8x128xf32>
    %350 = arith.mulf %334, %348 : vector<8x128xf32>
    %351 = arith.addf %349, %350 : vector<8x128xf32>
    %352 = math.tanh %351 : vector<8x128xf32>
    %353 = arith.mulf %346, %352 : vector<8x128xf32>
    %354 = arith.index_cast %c7_i32 : i32 to index
    %c0_103 = arith.constant 0 : index
    %c0_104 = arith.constant 0 : index
    %355 = vector.load %arg9[%354, %c0_103, %c0_104] : memref<8x8x128xf32, #tpu.memory_space<vmem>>, vector<1x8x128xf32>
    %356 = vector.shape_cast %355 : vector<1x8x128xf32> to vector<8x128xf32>
    %357 = vector.shape_cast %353 : vector<8x128xf32> to vector<1x8x128xf32>
    tpu.vector_store %arg9[%354, %c0_103, %c0_104], %357 {strides = array<i32>} : memref<8x8x128xf32, #tpu.memory_space<vmem>>, vector<1x8x128xf32>,
    %c8_i32 = arith.constant 8 : i32
    %c0_105 = arith.constant 0 : index
    %c0_106 = arith.constant 0 : index
    %358 = vector.load %arg10[%c0_105, %c0_106] : memref<8x128xf32, #tpu.memory_space<vmem>>, vector<8x128xf32>
    tpu.vector_store %arg10[%c0_105, %c0_106], %353 {strides = array<i32>} : memref<8x128xf32, #tpu.memory_space<vmem>>, vector<8x128xf32>,
    %c0_107 = arith.constant 0 : index
    %c0_108 = arith.constant 0 : index
    %359 = vector.load %arg11[%c0_107, %c0_108] : memref<8x128xf32, #tpu.memory_space<vmem>>, vector<8x128xf32>
    tpu.vector_store %arg11[%c0_107, %c0_108], %351 {strides = array<i32>} : memref<8x128xf32, #tpu.memory_space<vmem>>, vector<8x128xf32>,
    return
  }
  func.func @transform_0(%arg0: i32, %arg1: i32) -> (i32, i32, i32) {
    %c0_i32 = arith.constant 0 : i32
    %c0_i32_0 = arith.constant 0 : i32
    return %arg1, %arg0, %c0_i32 : i32, i32, i32
  }
  func.func @transform_1(%arg0: i32, %arg1: i32) -> (i32, i32, i32) {
    %c0_i32 = arith.constant 0 : i32
    %c0_i32_0 = arith.constant 0 : i32
    return %arg1, %arg0, %c0_i32 : i32, i32, i32
  }
  func.func @transform_2(%arg0: i32, %arg1: i32) -> (i32, i32) {
    %c0_i32 = arith.constant 0 : i32
    %c0_i32_0 = arith.constant 0 : i32
    return %arg0, %c0_i32 : i32, i32
  }
  func.func @transform_3(%arg0: i32, %arg1: i32) -> (i32, i32) {
    %c0_i32 = arith.constant 0 : i32
    %c0_i32_0 = arith.constant 0 : i32
    return %arg0, %c0_i32 : i32, i32
  }
  func.func @transform_4(%arg0: i32, %arg1: i32) -> (i32, i32) {
    %c0_i32 = arith.constant 0 : i32
    %c0_i32_0 = arith.constant 0 : i32
    %c0_i32_1 = arith.constant 0 : i32
    return %c0_i32, %c0_i32_0 : i32, i32
  }
  func.func @transform_5(%arg0: i32, %arg1: i32) -> (i32, i32) {
    %c0_i32 = arith.constant 0 : i32
    %c0_i32_0 = arith.constant 0 : i32
    %c0_i32_1 = arith.constant 0 : i32
    return %c0_i32, %c0_i32_0 : i32, i32
  }
  func.func @transform_6(%arg0: i32, %arg1: i32) -> (i32, i32) {
    %c0_i32 = arith.constant 0 : i32
    %c0_i32_0 = arith.constant 0 : i32
    %c0_i32_1 = arith.constant 0 : i32
    return %c0_i32, %c0_i32_0 : i32, i32
  }
  func.func @transform_7(%arg0: i32, %arg1: i32) -> (i32, i32, i32) {
    %c0_i32 = arith.constant 0 : i32
    %c0_i32_0 = arith.constant 0 : i32
    return %arg1, %arg0, %c0_i32 : i32, i32, i32
  }
  func.func @transform_8(%arg0: i32, %arg1: i32) -> (i32, i32) {
    %c0_i32 = arith.constant 0 : i32
    %c0_i32_0 = arith.constant 0 : i32
    return %arg0, %c0_i32 : i32, i32
  }
  func.func @transform_9(%arg0: i32, %arg1: i32) -> (i32, i32) {
    %c0_i32 = arith.constant 0 : i32
    %c0_i32_0 = arith.constant 0 : i32
    return %arg0, %c0_i32 : i32, i32
  }
}

</mosaic_0001>

<llo_original>
// kernel: tpu_custom_call.1
$region0: #{tpu_custom_call.1}
  #allocation0 [shape = 'u32[]', space=smem, size = 0x4, offset = 0x4, fixed_abs, tag = 'smem constant byte address 0x4 - core index']
  #allocation1 [shape = 'u32[144,128]{1,0:T(1,128)}', space=vmem, size = 0x12000, scoped, tag = 'internal scratch']
  #allocation2 [shape = 'f32[8,8,128]{2,1,0:T(8,128)}', space=vmem, size = 0x8000, scoped, tag = 'scratch operand']
  %s0 = inlined_call_operand.hbm [shape: f32[8,8,512], index: 0, kind: input, shape index: {}]
  %s1 = inlined_call_operand.vmem [shape: f32[8,8,1], index: 1, kind: input, shape index: {}]
  %s2 = inlined_call_operand.vmem [shape: f32[8,128], index: 2, kind: input, shape index: {}]
  %s3 = inlined_call_operand.vmem [shape: f32[8,128], index: 3, kind: input, shape index: {}]
  %s4 = inlined_call_operand.hbm [shape: f32[128,512], index: 4, kind: input, shape index: {}]
  %s5 = inlined_call_operand.hbm [shape: f32[128,128], index: 5, kind: input, shape index: {}]
  %s6 = inlined_call_operand.vmem [shape: f32[1,128], index: 6, kind: input, shape index: {}]
  %s7 = inlined_call_operand.hbm [shape: f32[8,8,128], index: 7, kind: output, shape index: {0}]
  %s8 = inlined_call_operand.hbm [shape: f32[8,128], index: 8, kind: output, shape index: {1}]
  %s9 = inlined_call_operand.hbm [shape: f32[8,128], index: 9, kind: output, shape index: {2}]
  %10 = xla_tuple %s7, %s8, %s9
  %s11 = sld [smem:[#allocation0]]
  $region70: #{tpu_custom_call.1} parent=0
    _
  %s13 = ssub.s32 1, %s11
  %s14 = scalar_select 0, %s13, %s11
  $region1: #{tpu_custom_call.1} parent=0
    #allocation3 [shape = 'u8[131072]{0}', space=vmem, size = 0x20000, scoped, tag = 'input window, operand 0, single buffered']
    #allocation4 [shape = 's32[1]{0}', space=sflag, size = 0x4, scoped, tag = 'scoped memory for tpu_custom_call.1']
    #allocation5 [shape = 's32[1]{0}', space=sflag, size = 0x4, scoped, tag = 'scoped memory for tpu_custom_call.1']
    #allocation6 [shape = 'u8[262144]{0}', space=vmem, size = 0x40000, scoped, tag = 'input window, operand 4, single buffered']
    #allocation7 [shape = 's32[1]{0}', space=sflag, size = 0x4, scoped, tag = 'scoped memory for tpu_custom_call.1']
    #allocation8 [shape = 'u8[65536]{0}', space=vmem, size = 0x10000, scoped, tag = 'input window, operand 5, single buffered']
    #allocation9 [shape = 'u8[32768]{0}', space=vmem, size = 0x8000, scoped, tag = 'output window, operand 0, single buffered']
    #allocation10 [shape = 'u8[4096]{0}', space=vmem, size = 0x1000, scoped, tag = 'output window, operand 1, single buffered']
    #allocation11 [shape = 's32[1]{0}', space=sflag, size = 0x4, scoped, tag = 'scoped memory for tpu_custom_call.1']
    #allocation12 [shape = 'u8[4096]{0}', space=vmem, size = 0x1000, scoped, tag = 'output window, operand 2, single buffered']
    %15 = vsyncpa [#allocation4], 0
    %16 = vsyncpa [#allocation7], 0
    %17 = vsyncpa [#allocation5], 0
    %18 = vsyncpa [#allocation11], 0
    // Predicated region
    $region2: #{tpu_custom_call.1} parent=1 // pred_check
      _
    $region3: #{tpu_custom_call.1} parent=1 // pred_check_branch
      %20 = sbr.rel (0) target = $region5
    $region4: #{tpu_custom_call.1} parent=1 // pred_region
      %s22 = ssub.s32 4096, 4096
      %23 = vsyncadd [#allocation4], %s22
      %s24 = sshll.u32 [#allocation3], 4
      %s25 = int_to_ptr.vmem [resolvable:$true] %s24
      %30 = dma.hbm_to_vmem [thread:$0]  %s0, 4096, %s25, [#allocation4], 512, 512, 32
    $region5: #{tpu_custom_call.1} parent=1 // pred_fallthru
      _
    // Predicated region
    $region6: #{tpu_custom_call.1} parent=1 // pred_check
      _
    $region7: #{tpu_custom_call.1} parent=1 // pred_check_branch
      %32 = sbr.rel (0) target = $region9
    $region8: #{tpu_custom_call.1} parent=1 // pred_region
      _
    $region9: #{tpu_custom_call.1} parent=1 // pred_fallthru
      _
    // Predicated region
    $region10: #{tpu_custom_call.1} parent=1 // pred_check
      _
    $region11: #{tpu_custom_call.1} parent=1 // pred_check_branch
      %34 = sbr.rel (0) target = $region13
    $region12: #{tpu_custom_call.1} parent=1 // pred_region
      _
    $region13: #{tpu_custom_call.1} parent=1 // pred_fallthru
      _
    // Predicated region
    $region14: #{tpu_custom_call.1} parent=1 // pred_check
      _
    $region15: #{tpu_custom_call.1} parent=1 // pred_check_branch
      %36 = sbr.rel (0) target = $region17
    $region16: #{tpu_custom_call.1} parent=1 // pred_region
      _
    $region17: #{tpu_custom_call.1} parent=1 // pred_fallthru
      _
    // Predicated region
    $region18: #{tpu_custom_call.1} parent=1 // pred_check
      _
    $region19: #{tpu_custom_call.1} parent=1 // pred_check_branch
      %38 = sbr.rel (0) target = $region21
    $region20: #{tpu_custom_call.1} parent=1 // pred_region
      %s40 = ssub.s32 8192, 8192
      %41 = vsyncadd [#allocation7], %s40
      %s42 = sshll.u32 [#allocation6], 4
      %s43 = int_to_ptr.vmem [resolvable:$true] %s42
      %48 = dma.hbm_to_vmem [thread:$0]  %s4, 8192, %s43, [#allocation7], 512, 512, 32
    $region21: #{tpu_custom_call.1} parent=1 // pred_fallthru
      _
    // Predicated region
    $region22: #{tpu_custom_call.1} parent=1 // pred_check
      _
    $region23: #{tpu_custom_call.1} parent=1 // pred_check_branch
      %50 = sbr.rel (0) target = $region25
    $region24: #{tpu_custom_call.1} parent=1 // pred_region
      %s52 = ssub.s32 2048, 2048
      %53 = vsyncadd [#allocation7], %s52
      %s54 = sshll.u32 [#allocation8], 4
      %s55 = int_to_ptr.vmem [resolvable:$true] %s54
      %60 = dma.hbm_to_vmem [thread:$0]  %s5, 2048, %s55, [#allocation7], 128, 128, 8
    $region25: #{tpu_custom_call.1} parent=1 // pred_fallthru
      _
    // Predicated region
    $region26: #{tpu_custom_call.1} parent=1 // pred_check
      _
    $region27: #{tpu_custom_call.1} parent=1 // pred_check_branch
      %62 = sbr.rel (0) target = $region29
    $region28: #{tpu_custom_call.1} parent=1 // pred_region
      _
    $region29: #{tpu_custom_call.1} parent=1 // pred_fallthru
      _
    // Predicated region
    $region30: #{tpu_custom_call.1} parent=1 // pred_check
      _
    $region31: #{tpu_custom_call.1} parent=1 // pred_check_branch
      %64 = sbr.rel (0) target = $region33
    $region32: #{tpu_custom_call.1} parent=1 // pred_region
      %65 = dma.done [#allocation4], 4096
    $region33: #{tpu_custom_call.1} parent=1 // pred_fallthru
      _
    // Predicated region
    $region34: #{tpu_custom_call.1} parent=1 // pred_check
      _
    $region35: #{tpu_custom_call.1} parent=1 // pred_check_branch
      %67 = sbr.rel (0) target = $region37
    $region36: #{tpu_custom_call.1} parent=1 // pred_region
      %68 = dma.done [#allocation7], 8192
    $region37: #{tpu_custom_call.1} parent=1 // pred_fallthru
      _
    // Predicated region
    $region38: #{tpu_custom_call.1} parent=1 // pred_check
      _
    $region39: #{tpu_custom_call.1} parent=1 // pred_check_branch
      %70 = sbr.rel (0) target = $region41
    $region40: #{tpu_custom_call.1} parent=1 // pred_region
      %71 = dma.done [#allocation7], 2048
    $region41: #{tpu_custom_call.1} parent=1 // pred_fallthru
      _
    %p72 = scmp.eq.s32.totalorder 0, 0
    // Predicated region
    $region42: #{tpu_custom_call.1} parent=1 // pred_check
      %p73 = pneg %p72
    $region43: #{tpu_custom_call.1} parent=1 // pred_check_branch
      %75 = sbr.rel (%p73) target = $region45
    $region44: #{tpu_custom_call.1} parent=1 // pred_region
      %v76 = vld [vmem:[%s2] sm:$0xff]
      %77 = vst [vmem:[#allocation10] sm:$0xff] %v76
      %v78 = vld [vmem:[%s3] sm:$0xff]
      %79 = vst [vmem:[#allocation12] sm:$0xff] %v78
    $region45: #{tpu_custom_call.1} parent=1 // pred_fallthru
      _
    %v80 = vld [vmem:[%s1] sm:$0xff]
    %v81 = vld [vmem:[%s1 + $0x8] sm:$0xff]
    %v82 = vld [vmem:[%s1 + $0x10] sm:$0xff]
    %v83 = vld [vmem:[%s1 + $0x18] sm:$0xff]
    %v84 = vld [vmem:[%s1 + $0x20] sm:$0xff]
    %v85 = vld [vmem:[%s1 + $0x28] sm:$0xff]
    %v86 = vld [vmem:[%s1 + $0x30] sm:$0xff]
    %v87 = vld [vmem:[%s1 + $0x38] sm:$0xff]
    %89 = vset.pattern.permute.xlu0 0
    %90 = vperm.xlu0 %89, %v80
    %v91 = vpop.permute.xlu0 %90
    %94 = vset.pattern.permute.xlu0 0
    %95 = vperm.xlu0 %94, %v81
    %v96 = vpop.permute.xlu0 %95
    %99 = vset.pattern.permute.xlu0 0
    %100 = vperm.xlu0 %99, %v82
    %v101 = vpop.permute.xlu0 %100
    %104 = vset.pattern.permute.xlu0 0
    %105 = vperm.xlu0 %104, %v83
    %v106 = vpop.permute.xlu0 %105
    %109 = vset.pattern.permute.xlu0 0
    %110 = vperm.xlu0 %109, %v84
    %v111 = vpop.permute.xlu0 %110
    %114 = vset.pattern.permute.xlu0 0
    %115 = vperm.xlu0 %114, %v85
    %v116 = vpop.permute.xlu0 %115
    %119 = vset.pattern.permute.xlu0 0
    %120 = vperm.xlu0 %119, %v86
    %v121 = vpop.permute.xlu0 %120
    %124 = vset.pattern.permute.xlu0 0
    %125 = vperm.xlu0 %124, %v87
    %v126 = vpop.permute.xlu0 %125
    %v128 = vsub.f32 %v91, 1.0
    %v129 = vsub.f32 %v96, 1.0
    %v130 = vsub.f32 %v101, 1.0
    %v131 = vsub.f32 %v106, 1.0
    %v132 = vsub.f32 %v111, 1.0
    %v133 = vsub.f32 %v116, 1.0
    %v134 = vsub.f32 %v121, 1.0
    %v135 = vsub.f32 %v126, 1.0
    %136 = vst [vmem:[#allocation2] sm:$0xff] %v128
    %137 = vst [vmem:[#allocation2 + $0x8] sm:$0xff] %v129
    %138 = vst [vmem:[#allocation2 + $0x10] sm:$0xff] %v130
    %139 = vst [vmem:[#allocation2 + $0x18] sm:$0xff] %v131
    %140 = vst [vmem:[#allocation2 + $0x20] sm:$0xff] %v132
    %141 = vst [vmem:[#allocation2 + $0x28] sm:$0xff] %v133
    %142 = vst [vmem:[#allocation2 + $0x30] sm:$0xff] %v134
    %143 = vst [vmem:[#allocation2 + $0x38] sm:$0xff] %v135
    %v144 = vld [vmem:[%s6] sm:$0x1]
    %v145 = vld [vmem:[#allocation6] sm:$0xff]
    %v146 = vld [vmem:[#allocation6 + $0x8] sm:$0xff]
    %v147 = vld [vmem:[#allocation6 + $0x10] sm:$0xff]
    %v148 = vld [vmem:[#allocation6 + $0x18] sm:$0xff]
    %v149 = vld [vmem:[#allocation6 + $0x20] sm:$0xff]
    %v150 = vld [vmem:[#allocation6 + $0x28] sm:$0xff]
    %v151 = vld [vmem:[#allocation6 + $0x30] sm:$0xff]
    %v152 = vld [vmem:[#allocation6 + $0x38] sm:$0xff]
    %v153 = vld [vmem:[#allocation6 + $0x40] sm:$0xff]
    %v154 = vld [vmem:[#allocation6 + $0x48] sm:$0xff]
    %v155 = vld [vmem:[#allocation6 + $0x50] sm:$0xff]
    %v156 = vld [vmem:[#allocation6 + $0x58] sm:$0xff]
    %v157 = vld [vmem:[#allocation6 + $0x60] sm:$0xff]
    %v158 = vld [vmem:[#allocation6 + $0x68] sm:$0xff]
    %v159 = vld [vmem:[#allocation6 + $0x70] sm:$0xff]
    %v160 = vld [vmem:[#allocation6 + $0x78] sm:$0xff]
    %v161 = vld [vmem:[#allocation6 + $0x80] sm:$0xff]
    %v162 = vld [vmem:[#allocation6 + $0x88] sm:$0xff]
    %v163 = vld [vmem:[#allocation6 + $0x90] sm:$0xff]
    %v164 = vld [vmem:[#allocation6 + $0x98] sm:$0xff]
    %v165 = vld [vmem:[#allocation6 + $0xa0] sm:$0xff]
    %v166 = vld [vmem:[#allocation6 + $0xa8] sm:$0xff]
    %v167 = vld [vmem:[#allocation6 + $0xb0] sm:$0xff]
    %v168 = vld [vmem:[#allocation6 + $0xb8] sm:$0xff]
    %v169 = vld [vmem:[#allocation6 + $0xc0] sm:$0xff]
    %v170 = vld [vmem:[#allocation6 + $0xc8] sm:$0xff]
    %v171 = vld [vmem:[#allocation6 + $0xd0] sm:$0xff]
    %v172 = vld [vmem:[#allocation6 + $0xd8] sm:$0xff]
    %v173 = vld [vmem:[#allocation6 + $0xe0] sm:$0xff]
    %v174 = vld [vmem:[#allocation6 + $0xe8] sm:$0xff]
    %v175 = vld [vmem:[#allocation6 + $0xf0] sm:$0xff]
    %v176 = vld [vmem:[#allocation6 + $0xf8] sm:$0xff]
    %v177 = vld [vmem:[#allocation6 + $0x100] sm:$0xff]
    %v178 = vld [vmem:[#allocation6 + $0x108] sm:$0xff]
    %v179 = vld [vmem:[#allocation6 + $0x110] sm:$0xff]
    %v180 = vld [vmem:[#allocation6 + $0x118] sm:$0xff]
    %v181 = vld [vmem:[#allocation6 + $0x120] sm:$0xff]
    %v182 = vld [vmem:[#allocation6 + $0x128] sm:$0xff]
    %v183 = vld [vmem:[#allocation6 + $0x130] sm:$0xff]
    %v184 = vld [vmem:[#allocation6 + $0x138] sm:$0xff]
    %v185 = vld [vmem:[#allocation6 + $0x140] sm:$0xff]
    %v186 = vld [vmem:[#allocation6 + $0x148] sm:$0xff]
    %v187 = vld [vmem:[#allocation6 + $0x150] sm:$0xff]
    %v188 = vld [vmem:[#allocation6 + $0x158] sm:$0xff]
    %v189 = vld [vmem:[#allocation6 + $0x160] sm:$0xff]
    %v190 = vld [vmem:[#allocation6 + $0x168] sm:$0xff]
    %v191 = vld [vmem:[#allocation6 + $0x170] sm:$0xff]
    %v192 = vld [vmem:[#allocation6 + $0x178] sm:$0xff]
    %v193 = vld [vmem:[#allocation6 + $0x180] sm:$0xff]
    %v194 = vld [vmem:[#allocation6 + $0x188] sm:$0xff]
    %v195 = vld [vmem:[#allocation6 + $0x190] sm:$0xff]
    %v196 = vld [vmem:[#allocation6 + $0x198] sm:$0xff]
    %v197 = vld [vmem:[#allocation6 + $0x1a0] sm:$0xff]
    %v198 = vld [vmem:[#allocation6 + $0x1a8] sm:$0xff]
    %v199 = vld [vmem:[#allocation6 + $0x1b0] sm:$0xff]
    %v200 = vld [vmem:[#allocation6 + $0x1b8] sm:$0xff]
    %v201 = vld [vmem:[#allocation6 + $0x1c0] sm:$0xff]
    %v202 = vld [vmem:[#allocation6 + $0x1c8] sm:$0xff]
    %v203 = vld [vmem:[#allocation6 + $0x1d0] sm:$0xff]
    %v204 = vld [vmem:[#allocation6 + $0x1d8] sm:$0xff]
    %v205 = vld [vmem:[#allocation6 + $0x1e0] sm:$0xff]
    %v206 = vld [vmem:[#allocation6 + $0x1e8] sm:$0xff]
    %v207 = vld [vmem:[#allocation6 + $0x1f0] sm:$0xff]
    %v208 = vld [vmem:[#allocation6 + $0x1f8] sm:$0xff]
    %v209 = vld [vmem:[#allocation8] sm:$0xff]
    %v210 = vld [vmem:[#allocation8 + $0x8] sm:$0xff]
    %v211 = vld [vmem:[#allocation8 + $0x10] sm:$0xff]
    %v212 = vld [vmem:[#allocation8 + $0x18] sm:$0xff]
    %v213 = vld [vmem:[#allocation8 + $0x20] sm:$0xff]
    %v214 = vld [vmem:[#allocation8 + $0x28] sm:$0xff]
    %v215 = vld [vmem:[#allocation8 + $0x30] sm:$0xff]
    %v216 = vld [vmem:[#allocation8 + $0x38] sm:$0xff]
    %v217 = vld [vmem:[#allocation8 + $0x40] sm:$0xff]
    %v218 = vld [vmem:[#allocation8 + $0x48] sm:$0xff]
    %v219 = vld [vmem:[#allocation8 + $0x50] sm:$0xff]
    %v220 = vld [vmem:[#allocation8 + $0x58] sm:$0xff]
    %v221 = vld [vmem:[#allocation8 + $0x60] sm:$0xff]
    %v222 = vld [vmem:[#allocation8 + $0x68] sm:$0xff]
    %v223 = vld [vmem:[#allocation8 + $0x70] sm:$0xff]
    %v224 = vld [vmem:[#allocation8 + $0x78] sm:$0xff]
    %v225 = vld [vmem:[#allocation10] sm:$0xff]
    %v226 = vld [vmem:[#allocation12] sm:$0xff]
    %227 = vmatprep.subr.mxu0 %v146
    %228 = vmatpush1.msra.mxu0 %v145
    %229 = vmatprep.subr.mxu0 %v150
    %230 = vmatpush1.msra.mxu0 %v149
    %231 = vmatprep.subr.mxu0 %v154
    %232 = vmatpush1.msra.mxu0 %v153
    %233 = vmatprep.subr.mxu0 %v158
    %234 = vmatpush1.msra.mxu0 %v157
    %235 = vmatprep.subr.mxu0 %v162
    %236 = vmatpush1.msra.mxu0 %v161
    %237 = vmatprep.subr.mxu0 %v166
    %238 = vmatpush1.msra.mxu0 %v165
    %239 = vmatprep.subr.mxu0 %v170
    %240 = vmatpush1.msra.mxu0 %v169
    %241 = vmatprep.subr.mxu0 %v174
    %242 = vmatpush1.msra.mxu0 %v173
    %243 = vmatprep.subr.mxu0 %v178
    %244 = vmatpush1.msra.mxu0 %v177
    %245 = vmatprep.subr.mxu0 %v182
    %246 = vmatpush1.msra.mxu0 %v181
    %247 = vmatprep.subr.mxu0 %v186
    %248 = vmatpush1.msra.mxu0 %v185
    %249 = vmatprep.subr.mxu0 %v190
    %250 = vmatpush1.msra.mxu0 %v189
    %251 = vmatprep.subr.mxu0 %v194
    %252 = vmatpush1.msra.mxu0 %v193
    %253 = vmatprep.subr.mxu0 %v198
    %254 = vmatpush1.msra.mxu0 %v197
    %255 = vmatprep.subr.mxu0 %v202
    %256 = vmatpush1.msra.mxu0 %v201
    %257 = vmatprep.subr.mxu0 %v206
    %258 = vmatpush1.msra.mxu0 %v205
    %259 = vmatprep.subr.mxu0 0.0
    %260 = vmatpush1.msra.mxu0 0.0
    %261 = vmatprep.subr.mxu0 0.0
    %262 = vmatpush1.msra.mxu0 0.0
    %263 = vmatprep.subr.mxu0 0.0
    %264 = vmatpush1.msra.mxu0 0.0
    %265 = vmatprep.subr.mxu0 0.0
    %266 = vmatpush1.msra.mxu0 0.0
    %267 = vmatprep.subr.mxu0 0.0
    %268 = vmatpush1.msra.mxu0 0.0
    %269 = vmatprep.subr.mxu0 0.0
    %270 = vmatpush1.msra.mxu0 0.0
    %271 = vmatprep.subr.mxu0 0.0
    %272 = vmatpush1.msra.mxu0 0.0
    %273 = vmatprep.subr.mxu0 0.0
    %274 = vmatpush1.msra.mxu0 0.0
    %275 = vmatprep.subr.mxu0 0.0
    %276 = vmatpush1.msra.mxu0 0.0
    %277 = vmatprep.subr.mxu0 0.0
    %278 = vmatpush1.msra.mxu0 0.0
    %279 = vmatprep.subr.mxu0 0.0
    %280 = vmatpush1.msra.mxu0 0.0
    %281 = vmatprep.subr.mxu0 0.0
    %282 = vmatpush1.msra.mxu0 0.0
    %283 = vmatprep.subr.mxu0 0.0
    %284 = vmatpush1.msra.mxu0 0.0
    %285 = vmatprep.subr.mxu0 0.0
    %286 = vmatpush1.msra.mxu0 0.0
    %287 = vmatprep.subr.mxu0 0.0
    %288 = vmatpush1.msra.mxu0 0.0
    %289 = vmatprep.subr.mxu0 0.0
    %290 = vmatpush1.msra.mxu0 0.0
    %291 = vmatprep.mubr.f32.mxu0 0.0
    %292 = vmatmul.mubr.f32.gmra.mrb[0].mxu0 %v225
    %v293 = vpop.f32.mrb[0].mxu0
    %v294 = vadd.f32 0.0, %v293
    %v295 = vpop.f32.mrb[0].mxu0
    %v296 = vadd.f32 0.0, %v295
    %297 = vdwg.mxu0
    %298 = vmatprep.subr.mxu0 %v148
    %299 = vmatpush1.msra.mxu0 %v147
    %300 = vmatprep.subr.mxu0 %v152
    %301 = vmatpush1.msra.mxu0 %v151
    %302 = vmatprep.subr.mxu0 %v156
    %303 = vmatpush1.msra.mxu0 %v155
    %304 = vmatprep.subr.mxu0 %v160
    %305 = vmatpush1.msra.mxu0 %v159
    %306 = vmatprep.subr.mxu0 %v164
    %307 = vmatpush1.msra.mxu0 %v163
    %308 = vmatprep.subr.mxu0 %v168
    %309 = vmatpush1.msra.mxu0 %v167
    %310 = vmatprep.subr.mxu0 %v172
    %311 = vmatpush1.msra.mxu0 %v171
    %312 = vmatprep.subr.mxu0 %v176
    %313 = vmatpush1.msra.mxu0 %v175
    %314 = vmatprep.subr.mxu0 %v180
    %315 = vmatpush1.msra.mxu0 %v179
    %316 = vmatprep.subr.mxu0 %v184
    %317 = vmatpush1.msra.mxu0 %v183
    %318 = vmatprep.subr.mxu0 %v188
    %319 = vmatpush1.msra.mxu0 %v187
    %320 = vmatprep.subr.mxu0 %v192
    %321 = vmatpush1.msra.mxu0 %v191
    %322 = vmatprep.subr.mxu0 %v196
    %323 = vmatpush1.msra.mxu0 %v195
    %324 = vmatprep.subr.mxu0 %v200
    %325 = vmatpush1.msra.mxu0 %v199
    %326 = vmatprep.subr.mxu0 %v204
    %327 = vmatpush1.msra.mxu0 %v203
    %328 = vmatprep.subr.mxu0 %v208
    %329 = vmatpush1.msra.mxu0 %v207
    %330 = vmatprep.subr.mxu0 0.0
    %331 = vmatpush1.msra.mxu0 0.0
    %332 = vmatprep.subr.mxu0 0.0
    %333 = vmatpush1.msra.mxu0 0.0
    %334 = vmatprep.subr.mxu0 0.0
    %335 = vmatpush1.msra.mxu0 0.0
    %336 = vmatprep.subr.mxu0 0.0
    %337 = vmatpush1.msra.mxu0 0.0
    %338 = vmatprep.subr.mxu0 0.0
    %339 = vmatpush1.msra.mxu0 0.0
    %340 = vmatprep.subr.mxu0 0.0
    %341 = vmatpush1.msra.mxu0 0.0
    %342 = vmatprep.subr.mxu0 0.0
    %343 = vmatpush1.msra.mxu0 0.0
    %344 = vmatprep.subr.mxu0 0.0
    %345 = vmatpush1.msra.mxu0 0.0
    %346 = vmatprep.subr.mxu0 0.0
    %347 = vmatpush1.msra.mxu0 0.0
    %348 = vmatprep.subr.mxu0 0.0
    %349 = vmatpush1.msra.mxu0 0.0
    %350 = vmatprep.subr.mxu0 0.0
    %351 = vmatpush1.msra.mxu0 0.0
    %352 = vmatprep.subr.mxu0 0.0
    %353 = vmatpush1.msra.mxu0 0.0
    %354 = vmatprep.subr.mxu0 0.0
    %355 = vmatpush1.msra.mxu0 0.0
    %356 = vmatprep.subr.mxu0 0.0
    %357 = vmatpush1.msra.mxu0 0.0
    %358 = vmatprep.subr.mxu0 0.0
    %359 = vmatpush1.msra.mxu0 0.0
    %360 = vmatprep.subr.mxu0 0.0
    %361 = vmatpush1.msra.mxu0 0.0
    %362 = vmatprep.mubr.f32.mxu0 0.0
    %363 = vmatmul.mubr.f32.gmra.mrb[0].mxu0 %v225
    %v364 = vpop.f32.mrb[0].mxu0
    %v365 = vadd.f32 0.0, %v364
    %v366 = vpop.f32.mrb[0].mxu0
    %v367 = vadd.f32 0.0, %v366
    %368 = vdwg.mxu0
    %v370 = vlaneseq
    %v371 = vshrl.u32 %v370, 7
    %v372 = vsub.s32 0, %v371
    %v373 = vrot.slane %v144, %v372
    %375 = vmatprep.subr.mxu0 0.0
    %376 = vmatpush1.msra.mxu0 %v209
    %377 = vmatprep.subr.mxu0 0.0
    %378 = vmatpush1.msra.mxu0 %v210
    %379 = vmatprep.subr.mxu0 0.0
    %380 = vmatpush1.msra.mxu0 %v211
    %381 = vmatprep.subr.mxu0 0.0
    %382 = vmatpush1.msra.mxu0 %v212
    %383 = vmatprep.subr.mxu0 0.0
    %384 = vmatpush1.msra.mxu0 %v213
    %385 = vmatprep.subr.mxu0 0.0
    %386 = vmatpush1.msra.mxu0 %v214
    %387 = vmatprep.subr.mxu0 0.0
    %388 = vmatpush1.msra.mxu0 %v215
    %389 = vmatprep.subr.mxu0 0.0
    %390 = vmatpush1.msra.mxu0 %v216
    %391 = vmatprep.subr.mxu0 0.0
    %392 = vmatpush1.msra.mxu0 %v217
    %393 = vmatprep.subr.mxu0 0.0
    %394 = vmatpush1.msra.mxu0 %v218
    %395 = vmatprep.subr.mxu0 0.0
    %396 = vmatpush1.msra.mxu0 %v219
    %397 = vmatprep.subr.mxu0 0.0
    %398 = vmatpush1.msra.mxu0 %v220
    %399 = vmatprep.subr.mxu0 0.0
    %400 = vmatpush1.msra.mxu0 %v221
    %401 = vmatprep.subr.mxu0 0.0
    %402 = vmatpush1.msra.mxu0 %v222
    %403 = vmatprep.subr.mxu0 0.0
    %404 = vmatpush1.msra.mxu0 %v223
    %405 = vmatprep.subr.mxu0 0.0
    %406 = vmatpush1.msra.mxu0 %v224
    %407 = vmatprep.subr.mxu0 0.0
    %408 = vmatpush1.msra.mxu0 0.0
    %409 = vmatprep.subr.mxu0 0.0
    %410 = vmatpush1.msra.mxu0 0.0
    %411 = vmatprep.subr.mxu0 0.0
    %412 = vmatpush1.msra.mxu0 0.0
    %413 = vmatprep.subr.mxu0 0.0
    %414 = vmatpush1.msra.mxu0 0.0
    %415 = vmatprep.subr.mxu0 0.0
    %416 = vmatpush1.msra.mxu0 0.0
    %417 = vmatprep.subr.mxu0 0.0
    %418 = vmatpush1.msra.mxu0 0.0
    %419 = vmatprep.subr.mxu0 0.0
    %420 = vmatpush1.msra.mxu0 0.0
    %421 = vmatprep.subr.mxu0 0.0
    %422 = vmatpush1.msra.mxu0 0.0
    %423 = vmatprep.subr.mxu0 0.0
    %424 = vmatpush1.msra.mxu0 0.0
    %425 = vmatprep.subr.mxu0 0.0
    %426 = vmatpush1.msra.mxu0 0.0
    %427 = vmatprep.subr.mxu0 0.0
    %428 = vmatpush1.msra.mxu0 0.0
    %429 = vmatprep.subr.mxu0 0.0
    %430 = vmatpush1.msra.mxu0 0.0
    %431 = vmatprep.subr.mxu0 0.0
    %432 = vmatpush1.msra.mxu0 0.0
    %433 = vmatprep.subr.mxu0 0.0
    %434 = vmatpush1.msra.mxu0 0.0
    %435 = vmatprep.subr.mxu0 0.0
    %436 = vmatpush1.msra.mxu0 0.0
    %437 = vmatprep.subr.mxu0 0.0
    %438 = vmatpush1.msra.mxu0 0.0
    %439 = vmatprep.mubr.f32.mxu0 0.0
    %440 = vmatmul.mubr.f32.gmra.mrb[0].mxu0 %v226
    %v441 = vpop.f32.mrb[0].mxu0
    %v442 = vadd.f32 %v373, %v441
    %v443 = vpop.f32.mrb[0].mxu0
    %444 = vdwg.mxu0
    %v445 = vtanh.pop %v442
    %v446 = vld [vmem:[#allocation2] sm:$0xff]
    %v447 = vmul.f32 %v446, %v445
    %v448 = vadd.f32 %v226, %v447
    %v449 = vld [vmem:[#allocation3] sm:$0xff]
    %v450 = vld [vmem:[#allocation3 + $0x8] sm:$0xff]
    %v451 = vld [vmem:[#allocation3 + $0x10] sm:$0xff]
    %v452 = vld [vmem:[#allocation3 + $0x18] sm:$0xff]
    %v453 = vadd.f32 %v449, %v294
    %v454 = vadd.f32 %v450, %v296
    %v455 = vadd.f32 %v451, %v365
    %v456 = vadd.f32 %v452, %v367
    %v457 = vxor.u32 %v453, 2147483648
    %v458 = vmul.f32 %v457, 1.442695
    %v459 = vpow.pop %v458
    %v460 = vadd.f32 %v459, 1.0
    %v461 = vrcp.pop %v460
    %v462 = vmul.f32 1.0, %v461
    %v463 = vxor.u32 %v454, 2147483648
    %v464 = vmul.f32 %v463, 1.442695
    %v465 = vpow.pop %v464
    %v466 = vadd.f32 %v465, 1.0
    %v467 = vrcp.pop %v466
    %v468 = vmul.f32 1.0, %v467
    %v469 = vxor.u32 %v455, 2147483648
    %v470 = vmul.f32 %v469, 1.442695
    %v471 = vpow.pop %v470
    %v472 = vadd.f32 %v471, 1.0
    %v473 = vrcp.pop %v472
    %v474 = vmul.f32 1.0, %v473
    %v475 = vtanh.pop %v456
    %v476 = vmul.f32 %v468, %v448
    %v477 = vmul.f32 %v462, %v475
    %v478 = vadd.f32 %v476, %v477
    %v479 = vtanh.pop %v478
    %v480 = vmul.f32 %v474, %v479
    %481 = vst [vmem:[#allocation9] sm:$0xff] %v480
    %482 = vmatprep.subr.mxu0 %v146
    %483 = vmatpush1.msra.mxu0 %v145
    %484 = vmatprep.subr.mxu0 %v150
    %485 = vmatpush1.msra.mxu0 %v149
    %486 = vmatprep.subr.mxu0 %v154
    %487 = vmatpush1.msra.mxu0 %v153
    %488 = vmatprep.subr.mxu0 %v158
    %489 = vmatpush1.msra.mxu0 %v157
    %490 = vmatprep.subr.mxu0 %v162
    %491 = vmatpush1.msra.mxu0 %v161
    %492 = vmatprep.subr.mxu0 %v166
    %493 = vmatpush1.msra.mxu0 %v165
    %494 = vmatprep.subr.mxu0 %v170
    %495 = vmatpush1.msra.mxu0 %v169
    %496 = vmatprep.subr.mxu0 %v174
    %497 = vmatpush1.msra.mxu0 %v173
    %498 = vmatprep.subr.mxu0 %v178
    %499 = vmatpush1.msra.mxu0 %v177
    %500 = vmatprep.subr.mxu0 %v182
    %501 = vmatpush1.msra.mxu0 %v181
    %502 = vmatprep.subr.mxu0 %v186
    %503 = vmatpush1.msra.mxu0 %v185
    %504 = vmatprep.subr.mxu0 %v190
    %505 = vmatpush1.msra.mxu0 %v189
    %506 = vmatprep.subr.mxu0 %v194
    %507 = vmatpush1.msra.mxu0 %v193
    %508 = vmatprep.subr.mxu0 %v198
    %509 = vmatpush1.msra.mxu0 %v197
    %510 = vmatprep.subr.mxu0 %v202
    %511 = vmatpush1.msra.mxu0 %v201
    %512 = vmatprep.subr.mxu0 %v206
    %513 = vmatpush1.msra.mxu0 %v205
    %514 = vmatprep.subr.mxu0 0.0
    %515 = vmatpush1.msra.mxu0 0.0
    %516 = vmatprep.subr.mxu0 0.0
    %517 = vmatpush1.msra.mxu0 0.0
    %518 = vmatprep.subr.mxu0 0.0
    %519 = vmatpush1.msra.mxu0 0.0
    %520 = vmatprep.subr.mxu0 0.0
    %521 = vmatpush1.msra.mxu0 0.0
    %522 = vmatprep.subr.mxu0 0.0
    %523 = vmatpush1.msra.mxu0 0.0
    %524 = vmatprep.subr.mxu0 0.0
    %525 = vmatpush1.msra.mxu0 0.0
    %526 = vmatprep.subr.mxu0 0.0
    %527 = vmatpush1.msra.mxu0 0.0
    %528 = vmatprep.subr.mxu0 0.0
    %529 = vmatpush1.msra.mxu0 0.0
    %530 = vmatprep.subr.mxu0 0.0
    %531 = vmatpush1.msra.mxu0 0.0
    %532 = vmatprep.subr.mxu0 0.0
    %533 = vmatpush1.msra.mxu0 0.0
    %534 = vmatprep.subr.mxu0 0.0
    %535 = vmatpush1.msra.mxu0 0.0
    %536 = vmatprep.subr.mxu0 0.0
    %537 = vmatpush1.msra.mxu0 0.0
    %538 = vmatprep.subr.mxu0 0.0
    %539 = vmatpush1.msra.mxu0 0.0
    %540 = vmatprep.subr.mxu0 0.0
    %541 = vmatpush1.msra.mxu0 0.0
    %542 = vmatprep.subr.mxu0 0.0
    %543 = vmatpush1.msra.mxu0 0.0
    %544 = vmatprep.subr.mxu0 0.0
    %545 = vmatpush1.msra.mxu0 0.0
    %546 = vmatprep.mubr.f32.mxu0 0.0
    %547 = vmatmul.mubr.f32.gmra.mrb[0].mxu0 %v480
    %v548 = vpop.f32.mrb[0].mxu0
    %v549 = vadd.f32 0.0, %v548
    %v550 = vpop.f32.mrb[0].mxu0
    %v551 = vadd.f32 0.0, %v550
    %552 = vdwg.mxu0
    %553 = vmatprep.subr.mxu0 %v148
    %554 = vmatpush1.msra.mxu0 %v147
    %555 = vmatprep.subr.mxu0 %v152
    %556 = vmatpush1.msra.mxu0 %v151
    %557 = vmatprep.subr.mxu0 %v156
    %558 = vmatpush1.msra.mxu0 %v155
    %559 = vmatprep.subr.mxu0 %v160
    %560 = vmatpush1.msra.mxu0 %v159
    %561 = vmatprep.subr.mxu0 %v164
    %562 = vmatpush1.msra.mxu0 %v163
    %563 = vmatprep.subr.mxu0 %v168
    %564 = vmatpush1.msra.mxu0 %v167
    %565 = vmatprep.subr.mxu0 %v172
    %566 = vmatpush1.msra.mxu0 %v171
    %567 = vmatprep.subr.mxu0 %v176
    %568 = vmatpush1.msra.mxu0 %v175
    %569 = vmatprep.subr.mxu0 %v180
    %570 = vmatpush1.msra.mxu0 %v179
    %571 = vmatprep.subr.mxu0 %v184
    %572 = vmatpush1.msra.mxu0 %v183
    %573 = vmatprep.subr.mxu0 %v188
    %574 = vmatpush1.msra.mxu0 %v187
    %575 = vmatprep.subr.mxu0 %v192
    %576 = vmatpush1.msra.mxu0 %v191
    %577 = vmatprep.subr.mxu0 %v196
    %578 = vmatpush1.msra.mxu0 %v195
    %579 = vmatprep.subr.mxu0 %v200
    %580 = vmatpush1.msra.mxu0 %v199
    %581 = vmatprep.subr.mxu0 %v204
    %582 = vmatpush1.msra.mxu0 %v203
    %583 = vmatprep.subr.mxu0 %v208
    %584 = vmatpush1.msra.mxu0 %v207
    %585 = vmatprep.subr.mxu0 0.0
    %586 = vmatpush1.msra.mxu0 0.0
    %587 = vmatprep.subr.mxu0 0.0
    %588 = vmatpush1.msra.mxu0 0.0
    %589 = vmatprep.subr.mxu0 0.0
    %590 = vmatpush1.msra.mxu0 0.0
    %591 = vmatprep.subr.mxu0 0.0
    %592 = vmatpush1.msra.mxu0 0.0
    %593 = vmatprep.subr.mxu0 0.0
    %594 = vmatpush1.msra.mxu0 0.0
    %595 = vmatprep.subr.mxu0 0.0
    %596 = vmatpush1.msra.mxu0 0.0
    %597 = vmatprep.subr.mxu0 0.0
    %598 = vmatpush1.msra.mxu0 0.0
    %599 = vmatprep.subr.mxu0 0.0
    %600 = vmatpush1.msra.mxu0 0.0
    %601 = vmatprep.subr.mxu0 0.0
    %602 = vmatpush1.msra.mxu0 0.0
    %603 = vmatprep.subr.mxu0 0.0
    %604 = vmatpush1.msra.mxu0 0.0
    %605 = vmatprep.subr.mxu0 0.0
    %606 = vmatpush1.msra.mxu0 0.0
    %607 = vmatprep.subr.mxu0 0.0
    %608 = vmatpush1.msra.mxu0 0.0
    %609 = vmatprep.subr.mxu0 0.0
    %610 = vmatpush1.msra.mxu0 0.0
    %611 = vmatprep.subr.mxu0 0.0
    %612 = vmatpush1.msra.mxu0 0.0
    %613 = vmatprep.subr.mxu0 0.0
    %614 = vmatpush1.msra.mxu0 0.0
    %615 = vmatprep.subr.mxu0 0.0
    %616 = vmatpush1.msra.mxu0 0.0
    %617 = vmatprep.mubr.f32.mxu0 0.0
    %618 = vmatmul.mubr.f32.gmra.mrb[0].mxu0 %v480
    %v619 = vpop.f32.mrb[0].mxu0
    %v620 = vadd.f32 0.0, %v619
    %v621 = vpop.f32.mrb[0].mxu0
    %v622 = vadd.f32 0.0, %v621
    %623 = vdwg.mxu0
    %624 = vmatprep.subr.mxu0 0.0
    %625 = vmatpush1.msra.mxu0 %v209
    %626 = vmatprep.subr.mxu0 0.0
    %627 = vmatpush1.msra.mxu0 %v210
    %628 = vmatprep.subr.mxu0 0.0
    %629 = vmatpush1.msra.mxu0 %v211
    %630 = vmatprep.subr.mxu0 0.0
    %631 = vmatpush1.msra.mxu0 %v212
    %632 = vmatprep.subr.mxu0 0.0
    %633 = vmatpush1.msra.mxu0 %v213
    %634 = vmatprep.subr.mxu0 0.0
    %635 = vmatpush1.msra.mxu0 %v214
    %636 = vmatprep.subr.mxu0 0.0
    %637 = vmatpush1.msra.mxu0 %v215
    %638 = vmatprep.subr.mxu0 0.0
    %639 = vmatpush1.msra.mxu0 %v216
    %640 = vmatprep.subr.mxu0 0.0
    %641 = vmatpush1.msra.mxu0 %v217
    %642 = vmatprep.subr.mxu0 0.0
    %643 = vmatpush1.msra.mxu0 %v218
    %644 = vmatprep.subr.mxu0 0.0
    %645 = vmatpush1.msra.mxu0 %v219
    %646 = vmatprep.subr.mxu0 0.0
    %647 = vmatpush1.msra.mxu0 %v220
    %648 = vmatprep.subr.mxu0 0.0
    %649 = vmatpush1.msra.mxu0 %v221
    %650 = vmatprep.subr.mxu0 0.0
    %651 = vmatpush1.msra.mxu0 %v222
    %652 = vmatprep.subr.mxu0 0.0
    %653 = vmatpush1.msra.mxu0 %v223
    %654 = vmatprep.subr.mxu0 0.0
    %655 = vmatpush1.msra.mxu0 %v224
    %656 = vmatprep.subr.mxu0 0.0
    %657 = vmatpush1.msra.mxu0 0.0
    %658 = vmatprep.subr.mxu0 0.0
    %659 = vmatpush1.msra.mxu0 0.0
    %660 = vmatprep.subr.mxu0 0.0
    %661 = vmatpush1.msra.mxu0 0.0
    %662 = vmatprep.subr.mxu0 0.0
    %663 = vmatpush1.msra.mxu0 0.0
    %664 = vmatprep.subr.mxu0 0.0
    %665 = vmatpush1.msra.mxu0 0.0
    %666 = vmatprep.subr.mxu0 0.0
    %667 = vmatpush1.msra.mxu0 0.0
    %668 = vmatprep.subr.mxu0 0.0
    %669 = vmatpush1.msra.mxu0 0.0
    %670 = vmatprep.subr.mxu0 0.0
    %671 = vmatpush1.msra.mxu0 0.0
    %672 = vmatprep.subr.mxu0 0.0
    %673 = vmatpush1.msra.mxu0 0.0
    %674 = vmatprep.subr.mxu0 0.0
    %675 = vmatpush1.msra.mxu0 0.0
    %676 = vmatprep.subr.mxu0 0.0
    %677 = vmatpush1.msra.mxu0 0.0
    %678 = vmatprep.subr.mxu0 0.0
    %679 = vmatpush1.msra.mxu0 0.0
    %680 = vmatprep.subr.mxu0 0.0
    %681 = vmatpush1.msra.mxu0 0.0
    %682 = vmatprep.subr.mxu0 0.0
    %683 = vmatpush1.msra.mxu0 0.0
    %684 = vmatprep.subr.mxu0 0.0
    %685 = vmatpush1.msra.mxu0 0.0
    %686 = vmatprep.subr.mxu0 0.0
    %687 = vmatpush1.msra.mxu0 0.0
    %688 = vmatprep.mubr.f32.mxu0 0.0
    %689 = vmatmul.mubr.f32.gmra.mrb[0].mxu0 %v478
    %v690 = vpop.f32.mrb[0].mxu0
    %v691 = vadd.f32 %v373, %v690
    %v692 = vpop.f32.mrb[0].mxu0
    %693 = vdwg.mxu0
    %v694 = vtanh.pop %v691
    %s695 = scalar_lea.vmem [#allocation2], 8
    %v696 = vld [vmem:[%s695] sm:$0xff]
    %v697 = vmul.f32 %v696, %v694
    %v698 = vadd.f32 %v478, %v697
    %s699 = scalar_lea.vmem [#allocation3], 32
    %v700 = vld [vmem:[%s699] sm:$0xff]
    %v701 = vld [vmem:[%s699 + $0x8] sm:$0xff]
    %v702 = vld [vmem:[%s699 + $0x10] sm:$0xff]
    %v703 = vld [vmem:[%s699 + $0x18] sm:$0xff]
    %v704 = vadd.f32 %v700, %v549
    %v705 = vadd.f32 %v701, %v551
    %v706 = vadd.f32 %v702, %v620
    %v707 = vadd.f32 %v703, %v622
    %v708 = vxor.u32 %v704, 2147483648
    %v709 = vmul.f32 %v708, 1.442695
    %v710 = vpow.pop %v709
    %v711 = vadd.f32 %v710, 1.0
    %v712 = vrcp.pop %v711
    %v713 = vmul.f32 1.0, %v712
    %v714 = vxor.u32 %v705, 2147483648
    %v715 = vmul.f32 %v714, 1.442695
    %v716 = vpow.pop %v715
    %v717 = vadd.f32 %v716, 1.0
    %v718 = vrcp.pop %v717
    %v719 = vmul.f32 1.0, %v718
    %v720 = vxor.u32 %v706, 2147483648
    %v721 = vmul.f32 %v720, 1.442695
    %v722 = vpow.pop %v721
    %v723 = vadd.f32 %v722, 1.0
    %v724 = vrcp.pop %v723
    %v725 = vmul.f32 1.0, %v724
    %v726 = vtanh.pop %v707
    %v727 = vmul.f32 %v719, %v698
    %v728 = vmul.f32 %v713, %v726
    %v729 = vadd.f32 %v727, %v728
    %v730 = vtanh.pop %v729
    %v731 = vmul.f32 %v725, %v730
    %s732 = scalar_lea.vmem [#allocation9], 8
    %733 = vst [vmem:[%s732] sm:$0xff] %v731
    %734 = vmatprep.subr.mxu0 %v146
    %735 = vmatpush1.msra.mxu0 %v145
    %736 = vmatprep.subr.mxu0 %v150
    %737 = vmatpush1.msra.mxu0 %v149
    %738 = vmatprep.subr.mxu0 %v154
    %739 = vmatpush1.msra.mxu0 %v153
    %740 = vmatprep.subr.mxu0 %v158
    %741 = vmatpush1.msra.mxu0 %v157
    %742 = vmatprep.subr.mxu0 %v162
    %743 = vmatpush1.msra.mxu0 %v161
    %744 = vmatprep.subr.mxu0 %v166
    %745 = vmatpush1.msra.mxu0 %v165
    %746 = vmatprep.subr.mxu0 %v170
    %747 = vmatpush1.msra.mxu0 %v169
    %748 = vmatprep.subr.mxu0 %v174
    %749 = vmatpush1.msra.mxu0 %v173
    %750 = vmatprep.subr.mxu0 %v178
    %751 = vmatpush1.msra.mxu0 %v177
    %752 = vmatprep.subr.mxu0 %v182
    %753 = vmatpush1.msra.mxu0 %v181
    %754 = vmatprep.subr.mxu0 %v186
    %755 = vmatpush1.msra.mxu0 %v185
    %756 = vmatprep.subr.mxu0 %v190
    %757 = vmatpush1.msra.mxu0 %v189
    %758 = vmatprep.subr.mxu0 %v194
    %759 = vmatpush1.msra.mxu0 %v193
    %760 = vmatprep.subr.mxu0 %v198
    %761 = vmatpush1.msra.mxu0 %v197
    %762 = vmatprep.subr.mxu0 %v202
    %763 = vmatpush1.msra.mxu0 %v201
    %764 = vmatprep.subr.mxu0 %v206
    %765 = vmatpush1.msra.mxu0 %v205
    %766 = vmatprep.subr.mxu0 0.0
    %767 = vmatpush1.msra.mxu0 0.0
    %768 = vmatprep.subr.mxu0 0.0
    %769 = vmatpush1.msra.mxu0 0.0
    %770 = vmatprep.subr.mxu0 0.0
    %771 = vmatpush1.msra.mxu0 0.0
    %772 = vmatprep.subr.mxu0 0.0
    %773 = vmatpush1.msra.mxu0 0.0
    %774 = vmatprep.subr.mxu0 0.0
    %775 = vmatpush1.msra.mxu0 0.0
    %776 = vmatprep.subr.mxu0 0.0
    %777 = vmatpush1.msra.mxu0 0.0
    %778 = vmatprep.subr.mxu0 0.0
    %779 = vmatpush1.msra.mxu0 0.0
    %780 = vmatprep.subr.mxu0 0.0
    %781 = vmatpush1.msra.mxu0 0.0
    %782 = vmatprep.subr.mxu0 0.0
    %783 = vmatpush1.msra.mxu0 0.0
    %784 = vmatprep.subr.mxu0 0.0
    %785 = vmatpush1.msra.mxu0 0.0
    %786 = vmatprep.subr.mxu0 0.0
    %787 = vmatpush1.msra.mxu0 0.0
    %788 = vmatprep.subr.mxu0 0.0
    %789 = vmatpush1.msra.mxu0 0.0
    %790 = vmatprep.subr.mxu0 0.0
    %791 = vmatpush1.msra.mxu0 0.0
    %792 = vmatprep.subr.mxu0 0.0
    %793 = vmatpush1.msra.mxu0 0.0
    %794 = vmatprep.subr.mxu0 0.0
    %795 = vmatpush1.msra.mxu0 0.0
    %796 = vmatprep.subr.mxu0 0.0
    %797 = vmatpush1.msra.mxu0 0.0
    %798 = vmatprep.mubr.f32.mxu0 0.0
    %799 = vmatmul.mubr.f32.gmra.mrb[0].mxu0 %v731
    %v800 = vpop.f32.mrb[0].mxu0
    %v801 = vadd.f32 0.0, %v800
    %v802 = vpop.f32.mrb[0].mxu0
    %v803 = vadd.f32 0.0, %v802
    %804 = vdwg.mxu0
    %805 = vmatprep.subr.mxu0 %v148
    %806 = vmatpush1.msra.mxu0 %v147
    %807 = vmatprep.subr.mxu0 %v152
    %808 = vmatpush1.msra.mxu0 %v151
    %809 = vmatprep.subr.mxu0 %v156
    %810 = vmatpush1.msra.mxu0 %v155
    %811 = vmatprep.subr.mxu0 %v160
    %812 = vmatpush1.msra.mxu0 %v159
    %813 = vmatprep.subr.mxu0 %v164
    %814 = vmatpush1.msra.mxu0 %v163
    %815 = vmatprep.subr.mxu0 %v168
    %816 = vmatpush1.msra.mxu0 %v167
    %817 = vmatprep.subr.mxu0 %v172
    %818 = vmatpush1.msra.mxu0 %v171
    %819 = vmatprep.subr.mxu0 %v176
    %820 = vmatpush1.msra.mxu0 %v175
    %821 = vmatprep.subr.mxu0 %v180
    %822 = vmatpush1.msra.mxu0 %v179
    %823 = vmatprep.subr.mxu0 %v184
    %824 = vmatpush1.msra.mxu0 %v183
    %825 = vmatprep.subr.mxu0 %v188
    %826 = vmatpush1.msra.mxu0 %v187
    %827 = vmatprep.subr.mxu0 %v192
    %828 = vmatpush1.msra.mxu0 %v191
    %829 = vmatprep.subr.mxu0 %v196
    %830 = vmatpush1.msra.mxu0 %v195
    %831 = vmatprep.subr.mxu0 %v200
    %832 = vmatpush1.msra.mxu0 %v199
    %833 = vmatprep.subr.mxu0 %v204
    %834 = vmatpush1.msra.mxu0 %v203
    %835 = vmatprep.subr.mxu0 %v208
    %836 = vmatpush1.msra.mxu0 %v207
    %837 = vmatprep.subr.mxu0 0.0
    %838 = vmatpush1.msra.mxu0 0.0
    %839 = vmatprep.subr.mxu0 0.0
    %840 = vmatpush1.msra.mxu0 0.0
    %841 = vmatprep.subr.mxu0 0.0
    %842 = vmatpush1.msra.mxu0 0.0
    %843 = vmatprep.subr.mxu0 0.0
    %844 = vmatpush1.msra.mxu0 0.0
    %845 = vmatprep.subr.mxu0 0.0
    %846 = vmatpush1.msra.mxu0 0.0
    %847 = vmatprep.subr.mxu0 0.0
    %848 = vmatpush1.msra.mxu0 0.0
    %849 = vmatprep.subr.mxu0 0.0
    %850 = vmatpush1.msra.mxu0 0.0
    %851 = vmatprep.subr.mxu0 0.0
    %852 = vmatpush1.msra.mxu0 0.0
    %853 = vmatprep.subr.mxu0 0.0
    %854 = vmatpush1.msra.mxu0 0.0
    %855 = vmatprep.subr.mxu0 0.0
    %856 = vmatpush1.msra.mxu0 0.0
    %857 = vmatprep.subr.mxu0 0.0
    %858 = vmatpush1.msra.mxu0 0.0
    %859 = vmatprep.subr.mxu0 0.0
    %860 = vmatpush1.msra.mxu0 0.0
    %861 = vmatprep.subr.mxu0 0.0
    %862 = vmatpush1.msra.mxu0 0.0
    %863 = vmatprep.subr.mxu0 0.0
    %864 = vmatpush1.msra.mxu0 0.0
    %865 = vmatprep.subr.mxu0 0.0
    %866 = vmatpush1.msra.mxu0 0.0
    %867 = vmatprep.subr.mxu0 0.0
    %868 = vmatpush1.msra.mxu0 0.0
    %869 = vmatprep.mubr.f32.mxu0 0.0
    %870 = vmatmul.mubr.f32.gmra.mrb[0].mxu0 %v731
    %v871 = vpop.f32.mrb[0].mxu0
    %v872 = vadd.f32 0.0, %v871
    %v873 = vpop.f32.mrb[0].mxu0
    %v874 = vadd.f32 0.0, %v873
    %875 = vdwg.mxu0
    %876 = vmatprep.subr.mxu0 0.0
    %877 = vmatpush1.msra.mxu0 %v209
    %878 = vmatprep.subr.mxu0 0.0
    %879 = vmatpush1.msra.mxu0 %v210
    %880 = vmatprep.subr.mxu0 0.0
    %881 = vmatpush1.msra.mxu0 %v211
    %882 = vmatprep.subr.mxu0 0.0
    %883 = vmatpush1.msra.mxu0 %v212
    %884 = vmatprep.subr.mxu0 0.0
    %885 = vmatpush1.msra.mxu0 %v213
    %886 = vmatprep.subr.mxu0 0.0
    %887 = vmatpush1.msra.mxu0 %v214
    %888 = vmatprep.subr.mxu0 0.0
    %889 = vmatpush1.msra.mxu0 %v215
    %890 = vmatprep.subr.mxu0 0.0
    %891 = vmatpush1.msra.mxu0 %v216
    %892 = vmatprep.subr.mxu0 0.0
    %893 = vmatpush1.msra.mxu0 %v217
    %894 = vmatprep.subr.mxu0 0.0
    %895 = vmatpush1.msra.mxu0 %v218
    %896 = vmatprep.subr.mxu0 0.0
    %897 = vmatpush1.msra.mxu0 %v219
    %898 = vmatprep.subr.mxu0 0.0
    %899 = vmatpush1.msra.mxu0 %v220
    %900 = vmatprep.subr.mxu0 0.0
    %901 = vmatpush1.msra.mxu0 %v221
    %902 = vmatprep.subr.mxu0 0.0
    %903 = vmatpush1.msra.mxu0 %v222
    %904 = vmatprep.subr.mxu0 0.0
    %905 = vmatpush1.msra.mxu0 %v223
    %906 = vmatprep.subr.mxu0 0.0
    %907 = vmatpush1.msra.mxu0 %v224
    %908 = vmatprep.subr.mxu0 0.0
    %909 = vmatpush1.msra.mxu0 0.0
    %910 = vmatprep.subr.mxu0 0.0
    %911 = vmatpush1.msra.mxu0 0.0
    %912 = vmatprep.subr.mxu0 0.0
    %913 = vmatpush1.msra.mxu0 0.0
    %914 = vmatprep.subr.mxu0 0.0
    %915 = vmatpush1.msra.mxu0 0.0
    %916 = vmatprep.subr.mxu0 0.0
    %917 = vmatpush1.msra.mxu0 0.0
    %918 = vmatprep.subr.mxu0 0.0
    %919 = vmatpush1.msra.mxu0 0.0
    %920 = vmatprep.subr.mxu0 0.0
    %921 = vmatpush1.msra.mxu0 0.0
    %922 = vmatprep.subr.mxu0 0.0
    %923 = vmatpush1.msra.mxu0 0.0
    %924 = vmatprep.subr.mxu0 0.0
    %925 = vmatpush1.msra.mxu0 0.0
    %926 = vmatprep.subr.mxu0 0.0
    %927 = vmatpush1.msra.mxu0 0.0
    %928 = vmatprep.subr.mxu0 0.0
    %929 = vmatpush1.msra.mxu0 0.0
    %930 = vmatprep.subr.mxu0 0.0
    %931 = vmatpush1.msra.mxu0 0.0
    %932 = vmatprep.subr.mxu0 0.0
    %933 = vmatpush1.msra.mxu0 0.0
    %934 = vmatprep.subr.mxu0 0.0
    %935 = vmatpush1.msra.mxu0 0.0
    %936 = vmatprep.subr.mxu0 0.0
    %937 = vmatpush1.msra.mxu0 0.0
    %938 = vmatprep.subr.mxu0 0.0
    %939 = vmatpush1.msra.mxu0 0.0
    %940 = vmatprep.mubr.f32.mxu0 0.0
    %941 = vmatmul.mubr.f32.gmra.mrb[0].mxu0 %v729
    %v942 = vpop.f32.mrb[0].mxu0
    %v943 = vadd.f32 %v373, %v942
    %v944 = vpop.f32.mrb[0].mxu0
    %945 = vdwg.mxu0
    %v946 = vtanh.pop %v943
    %s947 = scalar_lea.vmem [#allocation2], 16
    %v948 = vld [vmem:[%s947] sm:$0xff]
    %v949 = vmul.f32 %v948, %v946
    %v950 = vadd.f32 %v729, %v949
    %s951 = scalar_lea.vmem [#allocation3], 64
    %v952 = vld [vmem:[%s951] sm:$0xff]
    %v953 = vld [vmem:[%s951 + $0x8] sm:$0xff]
    %v954 = vld [vmem:[%s951 + $0x10] sm:$0xff]
    %v955 = vld [vmem:[%s951 + $0x18] sm:$0xff]
    %v956 = vadd.f32 %v952, %v801
    %v957 = vadd.f32 %v953, %v803
    %v958 = vadd.f32 %v954, %v872
    %v959 = vadd.f32 %v955, %v874
    %v960 = vxor.u32 %v956, 2147483648
    %v961 = vmul.f32 %v960, 1.442695
    %v962 = vpow.pop %v961
    %v963 = vadd.f32 %v962, 1.0
    %v964 = vrcp.pop %v963
    %v965 = vmul.f32 1.0, %v964
    %v966 = vxor.u32 %v957, 2147483648
    %v967 = vmul.f32 %v966, 1.442695
    %v968 = vpow.pop %v967
    %v969 = vadd.f32 %v968, 1.0
    %v970 = vrcp.pop %v969
    %v971 = vmul.f32 1.0, %v970
    %v972 = vxor.u32 %v958, 2147483648
    %v973 = vmul.f32 %v972, 1.442695
    %v974 = vpow.pop %v973
    %v975 = vadd.f32 %v974, 1.0
    %v976 = vrcp.pop %v975
    %v977 = vmul.f32 1.0, %v976
    %v978 = vtanh.pop %v959
    %v979 = vmul.f32 %v971, %v950
    %v980 = vmul.f32 %v965, %v978
    %v981 = vadd.f32 %v979, %v980
    %v982 = vtanh.pop %v981
    %v983 = vmul.f32 %v977, %v982
    %s984 = scalar_lea.vmem [#allocation9], 16
    %985 = vst [vmem:[%s984] sm:$0xff] %v983
    %986 = vmatprep.subr.mxu0 %v146
    %987 = vmatpush1.msra.mxu0 %v145
    %988 = vmatprep.subr.mxu0 %v150
    %989 = vmatpush1.msra.mxu0 %v149
    %990 = vmatprep.subr.mxu0 %v154
    %991 = vmatpush1.msra.mxu0 %v153
    %992 = vmatprep.subr.mxu0 %v158
    %993 = vmatpush1.msra.mxu0 %v157
    %994 = vmatprep.subr.mxu0 %v162
    %995 = vmatpush1.msra.mxu0 %v161
    %996 = vmatprep.subr.mxu0 %v166
    %997 = vmatpush1.msra.mxu0 %v165
    %998 = vmatprep.subr.mxu0 %v170
    %999 = vmatpush1.msra.mxu0 %v169
    %1000 = vmatprep.subr.mxu0 %v174
    %1001 = vmatpush1.msra.mxu0 %v173
    %1002 = vmatprep.subr.mxu0 %v178
    %1003 = vmatpush1.msra.mxu0 %v177
    %1004 = vmatprep.subr.mxu0 %v182
    %1005 = vmatpush1.msra.mxu0 %v181
    %1006 = vmatprep.subr.mxu0 %v186
    %1007 = vmatpush1.msra.mxu0 %v185
    %1008 = vmatprep.subr.mxu0 %v190
    %1009 = vmatpush1.msra.mxu0 %v189
    %1010 = vmatprep.subr.mxu0 %v194
    %1011 = vmatpush1.msra.mxu0 %v193
    %1012 = vmatprep.subr.mxu0 %v198
    %1013 = vmatpush1.msra.mxu0 %v197
    %1014 = vmatprep.subr.mxu0 %v202
    %1015 = vmatpush1.msra.mxu0 %v201
    %1016 = vmatprep.subr.mxu0 %v206
    %1017 = vmatpush1.msra.mxu0 %v205
    %1018 = vmatprep.subr.mxu0 0.0
    %1019 = vmatpush1.msra.mxu0 0.0
    %1020 = vmatprep.subr.mxu0 0.0
    %1021 = vmatpush1.msra.mxu0 0.0
    %1022 = vmatprep.subr.mxu0 0.0
    %1023 = vmatpush1.msra.mxu0 0.0
    %1024 = vmatprep.subr.mxu0 0.0
    %1025 = vmatpush1.msra.mxu0 0.0
    %1026 = vmatprep.subr.mxu0 0.0
    %1027 = vmatpush1.msra.mxu0 0.0
    %1028 = vmatprep.subr.mxu0 0.0
    %1029 = vmatpush1.msra.mxu0 0.0
    %1030 = vmatprep.subr.mxu0 0.0
    %1031 = vmatpush1.msra.mxu0 0.0
    %1032 = vmatprep.subr.mxu0 0.0
    %1033 = vmatpush1.msra.mxu0 0.0
    %1034 = vmatprep.subr.mxu0 0.0
    %1035 = vmatpush1.msra.mxu0 0.0
    %1036 = vmatprep.subr.mxu0 0.0
    %1037 = vmatpush1.msra.mxu0 0.0
    %1038 = vmatprep.subr.mxu0 0.0
    %1039 = vmatpush1.msra.mxu0 0.0
    %1040 = vmatprep.subr.mxu0 0.0
    %1041 = vmatpush1.msra.mxu0 0.0
    %1042 = vmatprep.subr.mxu0 0.0
    %1043 = vmatpush1.msra.mxu0 0.0
    %1044 = vmatprep.subr.mxu0 0.0
    %1045 = vmatpush1.msra.mxu0 0.0
    %1046 = vmatprep.subr.mxu0 0.0
    %1047 = vmatpush1.msra.mxu0 0.0
    %1048 = vmatprep.subr.mxu0 0.0
    %1049 = vmatpush1.msra.mxu0 0.0
    %1050 = vmatprep.mubr.f32.mxu0 0.0
    %1051 = vmatmul.mubr.f32.gmra.mrb[0].mxu0 %v983
    %v1052 = vpop.f32.mrb[0].mxu0
    %v1053 = vadd.f32 0.0, %v1052
    %v1054 = vpop.f32.mrb[0].mxu0
    %v1055 = vadd.f32 0.0, %v1054
    %1056 = vdwg.mxu0
    %1057 = vmatprep.subr.mxu0 %v148
    %1058 = vmatpush1.msra.mxu0 %v147
    %1059 = vmatprep.subr.mxu0 %v152
    %1060 = vmatpush1.msra.mxu0 %v151
    %1061 = vmatprep.subr.mxu0 %v156
    %1062 = vmatpush1.msra.mxu0 %v155
    %1063 = vmatprep.subr.mxu0 %v160
    %1064 = vmatpush1.msra.mxu0 %v159
    %1065 = vmatprep.subr.mxu0 %v164
    %1066 = vmatpush1.msra.mxu0 %v163
    %1067 = vmatprep.subr.mxu0 %v168
    %1068 = vmatpush1.msra.mxu0 %v167
    %1069 = vmatprep.subr.mxu0 %v172
    %1070 = vmatpush1.msra.mxu0 %v171
    %1071 = vmatprep.subr.mxu0 %v176
    %1072 = vmatpush1.msra.mxu0 %v175
    %1073 = vmatprep.subr.mxu0 %v180
    %1074 = vmatpush1.msra.mxu0 %v179
    %1075 = vmatprep.subr.mxu0 %v184
    %1076 = vmatpush1.msra.mxu0 %v183
    %1077 = vmatprep.subr.mxu0 %v188
    %1078 = vmatpush1.msra.mxu0 %v187
    %1079 = vmatprep.subr.mxu0 %v192
    %1080 = vmatpush1.msra.mxu0 %v191
    %1081 = vmatprep.subr.mxu0 %v196
    %1082 = vmatpush1.msra.mxu0 %v195
    %1083 = vmatprep.subr.mxu0 %v200
    %1084 = vmatpush1.msra.mxu0 %v199
    %1085 = vmatprep.subr.mxu0 %v204
    %1086 = vmatpush1.msra.mxu0 %v203
    %1087 = vmatprep.subr.mxu0 %v208
    %1088 = vmatpush1.msra.mxu0 %v207
    %1089 = vmatprep.subr.mxu0 0.0
    %1090 = vmatpush1.msra.mxu0 0.0
    %1091 = vmatprep.subr.mxu0 0.0
    %1092 = vmatpush1.msra.mxu0 0.0
    %1093 = vmatprep.subr.mxu0 0.0
    %1094 = vmatpush1.msra.mxu0 0.0
    %1095 = vmatprep.subr.mxu0 0.0
    %1096 = vmatpush1.msra.mxu0 0.0
    %1097 = vmatprep.subr.mxu0 0.0
    %1098 = vmatpush1.msra.mxu0 0.0
    %1099 = vmatprep.subr.mxu0 0.0
    %1100 = vmatpush1.msra.mxu0 0.0
    %1101 = vmatprep.subr.mxu0 0.0
    %1102 = vmatpush1.msra.mxu0 0.0
    %1103 = vmatprep.subr.mxu0 0.0
    %1104 = vmatpush1.msra.mxu0 0.0
    %1105 = vmatprep.subr.mxu0 0.0
    %1106 = vmatpush1.msra.mxu0 0.0
    %1107 = vmatprep.subr.mxu0 0.0
    %1108 = vmatpush1.msra.mxu0 0.0
    %1109 = vmatprep.subr.mxu0 0.0
    %1110 = vmatpush1.msra.mxu0 0.0
    %1111 = vmatprep.subr.mxu0 0.0
    %1112 = vmatpush1.msra.mxu0 0.0
    %1113 = vmatprep.subr.mxu0 0.0
    %1114 = vmatpush1.msra.mxu0 0.0
    %1115 = vmatprep.subr.mxu0 0.0
    %1116 = vmatpush1.msra.mxu0 0.0
    %1117 = vmatprep.subr.mxu0 0.0
    %1118 = vmatpush1.msra.mxu0 0.0
    %1119 = vmatprep.subr.mxu0 0.0
    %1120 = vmatpush1.msra.mxu0 0.0
    %1121 = vmatprep.mubr.f32.mxu0 0.0
    %1122 = vmatmul.mubr.f32.gmra.mrb[0].mxu0 %v983
    %v1123 = vpop.f32.mrb[0].mxu0
    %v1124 = vadd.f32 0.0, %v1123
    %v1125 = vpop.f32.mrb[0].mxu0
    %v1126 = vadd.f32 0.0, %v1125
    %1127 = vdwg.mxu0
    %1128 = vmatprep.subr.mxu0 0.0
    %1129 = vmatpush1.msra.mxu0 %v209
    %1130 = vmatprep.subr.mxu0 0.0
    %1131 = vmatpush1.msra.mxu0 %v210
    %1132 = vmatprep.subr.mxu0 0.0
    %1133 = vmatpush1.msra.mxu0 %v211
    %1134 = vmatprep.subr.mxu0 0.0
    %1135 = vmatpush1.msra.mxu0 %v212
    %1136 = vmatprep.subr.mxu0 0.0
    %1137 = vmatpush1.msra.mxu0 %v213
    %1138 = vmatprep.subr.mxu0 0.0
    %1139 = vmatpush1.msra.mxu0 %v214
    %1140 = vmatprep.subr.mxu0 0.0
    %1141 = vmatpush1.msra.mxu0 %v215
    %1142 = vmatprep.subr.mxu0 0.0
    %1143 = vmatpush1.msra.mxu0 %v216
    %1144 = vmatprep.subr.mxu0 0.0
    %1145 = vmatpush1.msra.mxu0 %v217
    %1146 = vmatprep.subr.mxu0 0.0
    %1147 = vmatpush1.msra.mxu0 %v218
    %1148 = vmatprep.subr.mxu0 0.0
    %1149 = vmatpush1.msra.mxu0 %v219
    %1150 = vmatprep.subr.mxu0 0.0
    %1151 = vmatpush1.msra.mxu0 %v220
    %1152 = vmatprep.subr.mxu0 0.0
    %1153 = vmatpush1.msra.mxu0 %v221
    %1154 = vmatprep.subr.mxu0 0.0
    %1155 = vmatpush1.msra.mxu0 %v222
    %1156 = vmatprep.subr.mxu0 0.0
    %1157 = vmatpush1.msra.mxu0 %v223
    %1158 = vmatprep.subr.mxu0 0.0
    %1159 = vmatpush1.msra.mxu0 %v224
    %1160 = vmatprep.subr.mxu0 0.0
    %1161 = vmatpush1.msra.mxu0 0.0
    %1162 = vmatprep.subr.mxu0 0.0
    %1163 = vmatpush1.msra.mxu0 0.0
    %1164 = vmatprep.subr.mxu0 0.0
    %1165 = vmatpush1.msra.mxu0 0.0
    %1166 = vmatprep.subr.mxu0 0.0
    %1167 = vmatpush1.msra.mxu0 0.0
    %1168 = vmatprep.subr.mxu0 0.0
    %1169 = vmatpush1.msra.mxu0 0.0
    %1170 = vmatprep.subr.mxu0 0.0
    %1171 = vmatpush1.msra.mxu0 0.0
    %1172 = vmatprep.subr.mxu0 0.0
    %1173 = vmatpush1.msra.mxu0 0.0
    %1174 = vmatprep.subr.mxu0 0.0
    %1175 = vmatpush1.msra.mxu0 0.0
    %1176 = vmatprep.subr.mxu0 0.0
    %1177 = vmatpush1.msra.mxu0 0.0
    %1178 = vmatprep.subr.mxu0 0.0
    %1179 = vmatpush1.msra.mxu0 0.0
    %1180 = vmatprep.subr.mxu0 0.0
    %1181 = vmatpush1.msra.mxu0 0.0
    %1182 = vmatprep.subr.mxu0 0.0
    %1183 = vmatpush1.msra.mxu0 0.0
    %1184 = vmatprep.subr.mxu0 0.0
    %1185 = vmatpush1.msra.mxu0 0.0
    %1186 = vmatprep.subr.mxu0 0.0
    %1187 = vmatpush1.msra.mxu0 0.0
    %1188 = vmatprep.subr.mxu0 0.0
    %1189 = vmatpush1.msra.mxu0 0.0
    %1190 = vmatprep.subr.mxu0 0.0
    %1191 = vmatpush1.msra.mxu0 0.0
    %1192 = vmatprep.mubr.f32.mxu0 0.0
    %1193 = vmatmul.mubr.f32.gmra.mrb[0].mxu0 %v981
    %v1194 = vpop.f32.mrb[0].mxu0
    %v1195 = vadd.f32 %v373, %v1194
    %v1196 = vpop.f32.mrb[0].mxu0
    %1197 = vdwg.mxu0
    %v1198 = vtanh.pop %v1195
    %s1199 = scalar_lea.vmem [#allocation2], 24
    %v1200 = vld [vmem:[%s1199] sm:$0xff]
    %v1201 = vmul.f32 %v1200, %v1198
    %v1202 = vadd.f32 %v981, %v1201
    %s1203 = scalar_lea.vmem [#allocation3], 96
    %v1204 = vld [vmem:[%s1203] sm:$0xff]
    %v1205 = vld [vmem:[%s1203 + $0x8] sm:$0xff]
    %v1206 = vld [vmem:[%s1203 + $0x10] sm:$0xff]
    %v1207 = vld [vmem:[%s1203 + $0x18] sm:$0xff]
    %v1208 = vadd.f32 %v1204, %v1053
    %v1209 = vadd.f32 %v1205, %v1055
    %v1210 = vadd.f32 %v1206, %v1124
    %v1211 = vadd.f32 %v1207, %v1126
    %v1212 = vxor.u32 %v1208, 2147483648
    %v1213 = vmul.f32 %v1212, 1.442695
    %v1214 = vpow.pop %v1213
    %v1215 = vadd.f32 %v1214, 1.0
    %v1216 = vrcp.pop %v1215
    %v1217 = vmul.f32 1.0, %v1216
    %v1218 = vxor.u32 %v1209, 2147483648
    %v1219 = vmul.f32 %v1218, 1.442695
    %v1220 = vpow.pop %v1219
    %v1221 = vadd.f32 %v1220, 1.0
    %v1222 = vrcp.pop %v1221
    %v1223 = vmul.f32 1.0, %v1222
    %v1224 = vxor.u32 %v1210, 2147483648
    %v1225 = vmul.f32 %v1224, 1.442695
    %v1226 = vpow.pop %v1225
    %v1227 = vadd.f32 %v1226, 1.0
    %v1228 = vrcp.pop %v1227
    %v1229 = vmul.f32 1.0, %v1228
    %v1230 = vtanh.pop %v1211
    %v1231 = vmul.f32 %v1223, %v1202
    %v1232 = vmul.f32 %v1217, %v1230
    %v1233 = vadd.f32 %v1231, %v1232
    %v1234 = vtanh.pop %v1233
    %v1235 = vmul.f32 %v1229, %v1234
    %s1236 = scalar_lea.vmem [#allocation9], 24
    %1237 = vst [vmem:[%s1236] sm:$0xff] %v1235
    %1238 = vmatprep.subr.mxu0 %v146
    %1239 = vmatpush1.msra.mxu0 %v145
    %1240 = vmatprep.subr.mxu0 %v150
    %1241 = vmatpush1.msra.mxu0 %v149
    %1242 = vmatprep.subr.mxu0 %v154
    %1243 = vmatpush1.msra.mxu0 %v153
    %1244 = vmatprep.subr.mxu0 %v158
    %1245 = vmatpush1.msra.mxu0 %v157
    %1246 = vmatprep.subr.mxu0 %v162
    %1247 = vmatpush1.msra.mxu0 %v161
    %1248 = vmatprep.subr.mxu0 %v166
    %1249 = vmatpush1.msra.mxu0 %v165
    %1250 = vmatprep.subr.mxu0 %v170
    %1251 = vmatpush1.msra.mxu0 %v169
    %1252 = vmatprep.subr.mxu0 %v174
    %1253 = vmatpush1.msra.mxu0 %v173
    %1254 = vmatprep.subr.mxu0 %v178
    %1255 = vmatpush1.msra.mxu0 %v177
    %1256 = vmatprep.subr.mxu0 %v182
    %1257 = vmatpush1.msra.mxu0 %v181
    %1258 = vmatprep.subr.mxu0 %v186
    %1259 = vmatpush1.msra.mxu0 %v185
    %1260 = vmatprep.subr.mxu0 %v190
    %1261 = vmatpush1.msra.mxu0 %v189
    %1262 = vmatprep.subr.mxu0 %v194
    %1263 = vmatpush1.msra.mxu0 %v193
    %1264 = vmatprep.subr.mxu0 %v198
    %1265 = vmatpush1.msra.mxu0 %v197
    %1266 = vmatprep.subr.mxu0 %v202
    %1267 = vmatpush1.msra.mxu0 %v201
    %1268 = vmatprep.subr.mxu0 %v206
    %1269 = vmatpush1.msra.mxu0 %v205
    %1270 = vmatprep.subr.mxu0 0.0
    %1271 = vmatpush1.msra.mxu0 0.0
    %1272 = vmatprep.subr.mxu0 0.0
    %1273 = vmatpush1.msra.mxu0 0.0
    %1274 = vmatprep.subr.mxu0 0.0
    %1275 = vmatpush1.msra.mxu0 0.0
    %1276 = vmatprep.subr.mxu0 0.0
    %1277 = vmatpush1.msra.mxu0 0.0
    %1278 = vmatprep.subr.mxu0 0.0
    %1279 = vmatpush1.msra.mxu0 0.0
    %1280 = vmatprep.subr.mxu0 0.0
    %1281 = vmatpush1.msra.mxu0 0.0
    %1282 = vmatprep.subr.mxu0 0.0
    %1283 = vmatpush1.msra.mxu0 0.0
    %1284 = vmatprep.subr.mxu0 0.0
    %1285 = vmatpush1.msra.mxu0 0.0
    %1286 = vmatprep.subr.mxu0 0.0
    %1287 = vmatpush1.msra.mxu0 0.0
    %1288 = vmatprep.subr.mxu0 0.0
    %1289 = vmatpush1.msra.mxu0 0.0
    %1290 = vmatprep.subr.mxu0 0.0
    %1291 = vmatpush1.msra.mxu0 0.0
    %1292 = vmatprep.subr.mxu0 0.0
    %1293 = vmatpush1.msra.mxu0 0.0
    %1294 = vmatprep.subr.mxu0 0.0
    %1295 = vmatpush1.msra.mxu0 0.0
    %1296 = vmatprep.subr.mxu0 0.0
    %1297 = vmatpush1.msra.mxu0 0.0
    %1298 = vmatprep.subr.mxu0 0.0
    %1299 = vmatpush1.msra.mxu0 0.0
    %1300 = vmatprep.subr.mxu0 0.0
    %1301 = vmatpush1.msra.mxu0 0.0
    %1302 = vmatprep.mubr.f32.mxu0 0.0
    %1303 = vmatmul.mubr.f32.gmra.mrb[0].mxu0 %v1235
    %v1304 = vpop.f32.mrb[0].mxu0
    %v1305 = vadd.f32 0.0, %v1304
    %v1306 = vpop.f32.mrb[0].mxu0
    %v1307 = vadd.f32 0.0, %v1306
    %1308 = vdwg.mxu0
    %1309 = vmatprep.subr.mxu0 %v148
    %1310 = vmatpush1.msra.mxu0 %v147
    %1311 = vmatprep.subr.mxu0 %v152
    %1312 = vmatpush1.msra.mxu0 %v151
    %1313 = vmatprep.subr.mxu0 %v156
    %1314 = vmatpush1.msra.mxu0 %v155
    %1315 = vmatprep.subr.mxu0 %v160
    %1316 = vmatpush1.msra.mxu0 %v159
    %1317 = vmatprep.subr.mxu0 %v164
    %1318 = vmatpush1.msra.mxu0 %v163
    %1319 = vmatprep.subr.mxu0 %v168
    %1320 = vmatpush1.msra.mxu0 %v167
    %1321 = vmatprep.subr.mxu0 %v172
    %1322 = vmatpush1.msra.mxu0 %v171
    %1323 = vmatprep.subr.mxu0 %v176
    %1324 = vmatpush1.msra.mxu0 %v175
    %1325 = vmatprep.subr.mxu0 %v180
    %1326 = vmatpush1.msra.mxu0 %v179
    %1327 = vmatprep.subr.mxu0 %v184
    %1328 = vmatpush1.msra.mxu0 %v183
    %1329 = vmatprep.subr.mxu0 %v188
    %1330 = vmatpush1.msra.mxu0 %v187
    %1331 = vmatprep.subr.mxu0 %v192
    %1332 = vmatpush1.msra.mxu0 %v191
    %1333 = vmatprep.subr.mxu0 %v196
    %1334 = vmatpush1.msra.mxu0 %v195
    %1335 = vmatprep.subr.mxu0 %v200
    %1336 = vmatpush1.msra.mxu0 %v199
    %1337 = vmatprep.subr.mxu0 %v204
    %1338 = vmatpush1.msra.mxu0 %v203
    %1339 = vmatprep.subr.mxu0 %v208
    %1340 = vmatpush1.msra.mxu0 %v207
    %1341 = vmatprep.subr.mxu0 0.0
    %1342 = vmatpush1.msra.mxu0 0.0
    %1343 = vmatprep.subr.mxu0 0.0
    %1344 = vmatpush1.msra.mxu0 0.0
    %1345 = vmatprep.subr.mxu0 0.0
    %1346 = vmatpush1.msra.mxu0 0.0
    %1347 = vmatprep.subr.mxu0 0.0
    %1348 = vmatpush1.msra.mxu0 0.0
    %1349 = vmatprep.subr.mxu0 0.0
    %1350 = vmatpush1.msra.mxu0 0.0
    %1351 = vmatprep.subr.mxu0 0.0
    %1352 = vmatpush1.msra.mxu0 0.0
    %1353 = vmatprep.subr.mxu0 0.0
    %1354 = vmatpush1.msra.mxu0 0.0
    %1355 = vmatprep.subr.mxu0 0.0
    %1356 = vmatpush1.msra.mxu0 0.0
    %1357 = vmatprep.subr.mxu0 0.0
    %1358 = vmatpush1.msra.mxu0 0.0
    %1359 = vmatprep.subr.mxu0 0.0
    %1360 = vmatpush1.msra.mxu0 0.0
    %1361 = vmatprep.subr.mxu0 0.0
    %1362 = vmatpush1.msra.mxu0 0.0
    %1363 = vmatprep.subr.mxu0 0.0
    %1364 = vmatpush1.msra.mxu0 0.0
    %1365 = vmatprep.subr.mxu0 0.0
    %1366 = vmatpush1.msra.mxu0 0.0
    %1367 = vmatprep.subr.mxu0 0.0
    %1368 = vmatpush1.msra.mxu0 0.0
    %1369 = vmatprep.subr.mxu0 0.0
    %1370 = vmatpush1.msra.mxu0 0.0
    %1371 = vmatprep.subr.mxu0 0.0
    %1372 = vmatpush1.msra.mxu0 0.0
    %1373 = vmatprep.mubr.f32.mxu0 0.0
    %1374 = vmatmul.mubr.f32.gmra.mrb[0].mxu0 %v1235
    %v1375 = vpop.f32.mrb[0].mxu0
    %v1376 = vadd.f32 0.0, %v1375
    %v1377 = vpop.f32.mrb[0].mxu0
    %v1378 = vadd.f32 0.0, %v1377
    %1379 = vdwg.mxu0
    %1380 = vmatprep.subr.mxu0 0.0
    %1381 = vmatpush1.msra.mxu0 %v209
    %1382 = vmatprep.subr.mxu0 0.0
    %1383 = vmatpush1.msra.mxu0 %v210
    %1384 = vmatprep.subr.mxu0 0.0
    %1385 = vmatpush1.msra.mxu0 %v211
    %1386 = vmatprep.subr.mxu0 0.0
    %1387 = vmatpush1.msra.mxu0 %v212
    %1388 = vmatprep.subr.mxu0 0.0
    %1389 = vmatpush1.msra.mxu0 %v213
    %1390 = vmatprep.subr.mxu0 0.0
    %1391 = vmatpush1.msra.mxu0 %v214
    %1392 = vmatprep.subr.mxu0 0.0
    %1393 = vmatpush1.msra.mxu0 %v215
    %1394 = vmatprep.subr.mxu0 0.0
    %1395 = vmatpush1.msra.mxu0 %v216
    %1396 = vmatprep.subr.mxu0 0.0
    %1397 = vmatpush1.msra.mxu0 %v217
    %1398 = vmatprep.subr.mxu0 0.0
    %1399 = vmatpush1.msra.mxu0 %v218
    %1400 = vmatprep.subr.mxu0 0.0
    %1401 = vmatpush1.msra.mxu0 %v219
    %1402 = vmatprep.subr.mxu0 0.0
    %1403 = vmatpush1.msra.mxu0 %v220
    %1404 = vmatprep.subr.mxu0 0.0
    %1405 = vmatpush1.msra.mxu0 %v221
    %1406 = vmatprep.subr.mxu0 0.0
    %1407 = vmatpush1.msra.mxu0 %v222
    %1408 = vmatprep.subr.mxu0 0.0
    %1409 = vmatpush1.msra.mxu0 %v223
    %1410 = vmatprep.subr.mxu0 0.0
    %1411 = vmatpush1.msra.mxu0 %v224
    %1412 = vmatprep.subr.mxu0 0.0
    %1413 = vmatpush1.msra.mxu0 0.0
    %1414 = vmatprep.subr.mxu0 0.0
    %1415 = vmatpush1.msra.mxu0 0.0
    %1416 = vmatprep.subr.mxu0 0.0
    %1417 = vmatpush1.msra.mxu0 0.0
    %1418 = vmatprep.subr.mxu0 0.0
    %1419 = vmatpush1.msra.mxu0 0.0
    %1420 = vmatprep.subr.mxu0 0.0
    %1421 = vmatpush1.msra.mxu0 0.0
    %1422 = vmatprep.subr.mxu0 0.0
    %1423 = vmatpush1.msra.mxu0 0.0
    %1424 = vmatprep.subr.mxu0 0.0
    %1425 = vmatpush1.msra.mxu0 0.0
    %1426 = vmatprep.subr.mxu0 0.0
    %1427 = vmatpush1.msra.mxu0 0.0
    %1428 = vmatprep.subr.mxu0 0.0
    %1429 = vmatpush1.msra.mxu0 0.0
    %1430 = vmatprep.subr.mxu0 0.0
    %1431 = vmatpush1.msra.mxu0 0.0
    %1432 = vmatprep.subr.mxu0 0.0
    %1433 = vmatpush1.msra.mxu0 0.0
    %1434 = vmatprep.subr.mxu0 0.0
    %1435 = vmatpush1.msra.mxu0 0.0
    %1436 = vmatprep.subr.mxu0 0.0
    %1437 = vmatpush1.msra.mxu0 0.0
    %1438 = vmatprep.subr.mxu0 0.0
    %1439 = vmatpush1.msra.mxu0 0.0
    %1440 = vmatprep.subr.mxu0 0.0
    %1441 = vmatpush1.msra.mxu0 0.0
    %1442 = vmatprep.subr.mxu0 0.0
    %1443 = vmatpush1.msra.mxu0 0.0
    %1444 = vmatprep.mubr.f32.mxu0 0.0
    %1445 = vmatmul.mubr.f32.gmra.mrb[0].mxu0 %v1233
    %v1446 = vpop.f32.mrb[0].mxu0
    %v1447 = vadd.f32 %v373, %v1446
    %v1448 = vpop.f32.mrb[0].mxu0
    %1449 = vdwg.mxu0
    %v1450 = vtanh.pop %v1447
    %s1451 = scalar_lea.vmem [#allocation2], 32
    %v1452 = vld [vmem:[%s1451] sm:$0xff]
    %v1453 = vmul.f32 %v1452, %v1450
    %v1454 = vadd.f32 %v1233, %v1453
    %s1455 = scalar_lea.vmem [#allocation3], 128
    %v1456 = vld [vmem:[%s1455] sm:$0xff]
    %v1457 = vld [vmem:[%s1455 + $0x8] sm:$0xff]
    %v1458 = vld [vmem:[%s1455 + $0x10] sm:$0xff]
    %v1459 = vld [vmem:[%s1455 + $0x18] sm:$0xff]
    %v1460 = vadd.f32 %v1456, %v1305
    %v1461 = vadd.f32 %v1457, %v1307
    %v1462 = vadd.f32 %v1458, %v1376
    %v1463 = vadd.f32 %v1459, %v1378
    %v1464 = vxor.u32 %v1460, 2147483648
    %v1465 = vmul.f32 %v1464, 1.442695
    %v1466 = vpow.pop %v1465
    %v1467 = vadd.f32 %v1466, 1.0
    %v1468 = vrcp.pop %v1467
    %v1469 = vmul.f32 1.0, %v1468
    %v1470 = vxor.u32 %v1461, 2147483648
    %v1471 = vmul.f32 %v1470, 1.442695
    %v1472 = vpow.pop %v1471
    %v1473 = vadd.f32 %v1472, 1.0
    %v1474 = vrcp.pop %v1473
    %v1475 = vmul.f32 1.0, %v1474
    %v1476 = vxor.u32 %v1462, 2147483648
    %v1477 = vmul.f32 %v1476, 1.442695
    %v1478 = vpow.pop %v1477
    %v1479 = vadd.f32 %v1478, 1.0
    %v1480 = vrcp.pop %v1479
    %v1481 = vmul.f32 1.0, %v1480
    %v1482 = vtanh.pop %v1463
    %v1483 = vmul.f32 %v1475, %v1454
    %v1484 = vmul.f32 %v1469, %v1482
    %v1485 = vadd.f32 %v1483, %v1484
    %v1486 = vtanh.pop %v1485
    %v1487 = vmul.f32 %v1481, %v1486
    %s1488 = scalar_lea.vmem [#allocation9], 32
    %1489 = vst [vmem:[%s1488] sm:$0xff] %v1487
    %1490 = vmatprep.subr.mxu0 %v146
    %1491 = vmatpush1.msra.mxu0 %v145
    %1492 = vmatprep.subr.mxu0 %v150
    %1493 = vmatpush1.msra.mxu0 %v149
    %1494 = vmatprep.subr.mxu0 %v154
    %1495 = vmatpush1.msra.mxu0 %v153
    %1496 = vmatprep.subr.mxu0 %v158
    %1497 = vmatpush1.msra.mxu0 %v157
    %1498 = vmatprep.subr.mxu0 %v162
    %1499 = vmatpush1.msra.mxu0 %v161
    %1500 = vmatprep.subr.mxu0 %v166
    %1501 = vmatpush1.msra.mxu0 %v165
    %1502 = vmatprep.subr.mxu0 %v170
    %1503 = vmatpush1.msra.mxu0 %v169
    %1504 = vmatprep.subr.mxu0 %v174
    %1505 = vmatpush1.msra.mxu0 %v173
    %1506 = vmatprep.subr.mxu0 %v178
    %1507 = vmatpush1.msra.mxu0 %v177
    %1508 = vmatprep.subr.mxu0 %v182
    %1509 = vmatpush1.msra.mxu0 %v181
    %1510 = vmatprep.subr.mxu0 %v186
    %1511 = vmatpush1.msra.mxu0 %v185
    %1512 = vmatprep.subr.mxu0 %v190
    %1513 = vmatpush1.msra.mxu0 %v189
    %1514 = vmatprep.subr.mxu0 %v194
    %1515 = vmatpush1.msra.mxu0 %v193
    %1516 = vmatprep.subr.mxu0 %v198
    %1517 = vmatpush1.msra.mxu0 %v197
    %1518 = vmatprep.subr.mxu0 %v202
    %1519 = vmatpush1.msra.mxu0 %v201
    %1520 = vmatprep.subr.mxu0 %v206
    %1521 = vmatpush1.msra.mxu0 %v205
    %1522 = vmatprep.subr.mxu0 0.0
    %1523 = vmatpush1.msra.mxu0 0.0
    %1524 = vmatprep.subr.mxu0 0.0
    %1525 = vmatpush1.msra.mxu0 0.0
    %1526 = vmatprep.subr.mxu0 0.0
    %1527 = vmatpush1.msra.mxu0 0.0
    %1528 = vmatprep.subr.mxu0 0.0
    %1529 = vmatpush1.msra.mxu0 0.0
    %1530 = vmatprep.subr.mxu0 0.0
    %1531 = vmatpush1.msra.mxu0 0.0
    %1532 = vmatprep.subr.mxu0 0.0
    %1533 = vmatpush1.msra.mxu0 0.0
    %1534 = vmatprep.subr.mxu0 0.0
    %1535 = vmatpush1.msra.mxu0 0.0
    %1536 = vmatprep.subr.mxu0 0.0
    %1537 = vmatpush1.msra.mxu0 0.0
    %1538 = vmatprep.subr.mxu0 0.0
    %1539 = vmatpush1.msra.mxu0 0.0
    %1540 = vmatprep.subr.mxu0 0.0
    %1541 = vmatpush1.msra.mxu0 0.0
    %1542 = vmatprep.subr.mxu0 0.0
    %1543 = vmatpush1.msra.mxu0 0.0
    %1544 = vmatprep.subr.mxu0 0.0
    %1545 = vmatpush1.msra.mxu0 0.0
    %1546 = vmatprep.subr.mxu0 0.0
    %1547 = vmatpush1.msra.mxu0 0.0
    %1548 = vmatprep.subr.mxu0 0.0
    %1549 = vmatpush1.msra.mxu0 0.0
    %1550 = vmatprep.subr.mxu0 0.0
    %1551 = vmatpush1.msra.mxu0 0.0
    %1552 = vmatprep.subr.mxu0 0.0
    %1553 = vmatpush1.msra.mxu0 0.0
    %1554 = vmatprep.mubr.f32.mxu0 0.0
    %1555 = vmatmul.mubr.f32.gmra.mrb[0].mxu0 %v1487
    %v1556 = vpop.f32.mrb[0].mxu0
    %v1557 = vadd.f32 0.0, %v1556
    %v1558 = vpop.f32.mrb[0].mxu0
    %v1559 = vadd.f32 0.0, %v1558
    %1560 = vdwg.mxu0
    %1561 = vmatprep.subr.mxu0 %v148
    %1562 = vmatpush1.msra.mxu0 %v147
    %1563 = vmatprep.subr.mxu0 %v152
    %1564 = vmatpush1.msra.mxu0 %v151
    %1565 = vmatprep.subr.mxu0 %v156
    %1566 = vmatpush1.msra.mxu0 %v155
    %1567 = vmatprep.subr.mxu0 %v160
    %1568 = vmatpush1.msra.mxu0 %v159
    %1569 = vmatprep.subr.mxu0 %v164
    %1570 = vmatpush1.msra.mxu0 %v163
    %1571 = vmatprep.subr.mxu0 %v168
    %1572 = vmatpush1.msra.mxu0 %v167
    %1573 = vmatprep.subr.mxu0 %v172
    %1574 = vmatpush1.msra.mxu0 %v171
    %1575 = vmatprep.subr.mxu0 %v176
    %1576 = vmatpush1.msra.mxu0 %v175
    %1577 = vmatprep.subr.mxu0 %v180
    %1578 = vmatpush1.msra.mxu0 %v179
    %1579 = vmatprep.subr.mxu0 %v184
    %1580 = vmatpush1.msra.mxu0 %v183
    %1581 = vmatprep.subr.mxu0 %v188
    %1582 = vmatpush1.msra.mxu0 %v187
    %1583 = vmatprep.subr.mxu0 %v192
    %1584 = vmatpush1.msra.mxu0 %v191
    %1585 = vmatprep.subr.mxu0 %v196
    %1586 = vmatpush1.msra.mxu0 %v195
    %1587 = vmatprep.subr.mxu0 %v200
    %1588 = vmatpush1.msra.mxu0 %v199
    %1589 = vmatprep.subr.mxu0 %v204
    %1590 = vmatpush1.msra.mxu0 %v203
    %1591 = vmatprep.subr.mxu0 %v208
    %1592 = vmatpush1.msra.mxu0 %v207
    %1593 = vmatprep.subr.mxu0 0.0
    %1594 = vmatpush1.msra.mxu0 0.0
    %1595 = vmatprep.subr.mxu0 0.0
    %1596 = vmatpush1.msra.mxu0 0.0
    %1597 = vmatprep.subr.mxu0 0.0
    %1598 = vmatpush1.msra.mxu0 0.0
    %1599 = vmatprep.subr.mxu0 0.0
    %1600 = vmatpush1.msra.mxu0 0.0
    %1601 = vmatprep.subr.mxu0 0.0
    %1602 = vmatpush1.msra.mxu0 0.0
    %1603 = vmatprep.subr.mxu0 0.0
    %1604 = vmatpush1.msra.mxu0 0.0
    %1605 = vmatprep.subr.mxu0 0.0
    %1606 = vmatpush1.msra.mxu0 0.0
    %1607 = vmatprep.subr.mxu0 0.0
    %1608 = vmatpush1.msra.mxu0 0.0
    %1609 = vmatprep.subr.mxu0 0.0
    %1610 = vmatpush1.msra.mxu0 0.0
    %1611 = vmatprep.subr.mxu0 0.0
    %1612 = vmatpush1.msra.mxu0 0.0
    %1613 = vmatprep.subr.mxu0 0.0
    %1614 = vmatpush1.msra.mxu0 0.0
    %1615 = vmatprep.subr.mxu0 0.0
    %1616 = vmatpush1.msra.mxu0 0.0
    %1617 = vmatprep.subr.mxu0 0.0
    %1618 = vmatpush1.msra.mxu0 0.0
    %1619 = vmatprep.subr.mxu0 0.0
    %1620 = vmatpush1.msra.mxu0 0.0
    %1621 = vmatprep.subr.mxu0 0.0
    %1622 = vmatpush1.msra.mxu0 0.0
    %1623 = vmatprep.subr.mxu0 0.0
    %1624 = vmatpush1.msra.mxu0 0.0
    %1625 = vmatprep.mubr.f32.mxu0 0.0
    %1626 = vmatmul.mubr.f32.gmra.mrb[0].mxu0 %v1487
    %v1627 = vpop.f32.mrb[0].mxu0
    %v1628 = vadd.f32 0.0, %v1627
    %v1629 = vpop.f32.mrb[0].mxu0
    %v1630 = vadd.f32 0.0, %v1629
    %1631 = vdwg.mxu0
    %1632 = vmatprep.subr.mxu0 0.0
    %1633 = vmatpush1.msra.mxu0 %v209
    %1634 = vmatprep.subr.mxu0 0.0
    %1635 = vmatpush1.msra.mxu0 %v210
    %1636 = vmatprep.subr.mxu0 0.0
    %1637 = vmatpush1.msra.mxu0 %v211
    %1638 = vmatprep.subr.mxu0 0.0
    %1639 = vmatpush1.msra.mxu0 %v212
    %1640 = vmatprep.subr.mxu0 0.0
    %1641 = vmatpush1.msra.mxu0 %v213
    %1642 = vmatprep.subr.mxu0 0.0
    %1643 = vmatpush1.msra.mxu0 %v214
    %1644 = vmatprep.subr.mxu0 0.0
    %1645 = vmatpush1.msra.mxu0 %v215
    %1646 = vmatprep.subr.mxu0 0.0
    %1647 = vmatpush1.msra.mxu0 %v216
    %1648 = vmatprep.subr.mxu0 0.0
    %1649 = vmatpush1.msra.mxu0 %v217
    %1650 = vmatprep.subr.mxu0 0.0
    %1651 = vmatpush1.msra.mxu0 %v218
    %1652 = vmatprep.subr.mxu0 0.0
    %1653 = vmatpush1.msra.mxu0 %v219
    %1654 = vmatprep.subr.mxu0 0.0
    %1655 = vmatpush1.msra.mxu0 %v220
    %1656 = vmatprep.subr.mxu0 0.0
    %1657 = vmatpush1.msra.mxu0 %v221
    %1658 = vmatprep.subr.mxu0 0.0
    %1659 = vmatpush1.msra.mxu0 %v222
    %1660 = vmatprep.subr.mxu0 0.0
    %1661 = vmatpush1.msra.mxu0 %v223
    %1662 = vmatprep.subr.mxu0 0.0
    %1663 = vmatpush1.msra.mxu0 %v224
    %1664 = vmatprep.subr.mxu0 0.0
    %1665 = vmatpush1.msra.mxu0 0.0
    %1666 = vmatprep.subr.mxu0 0.0
    %1667 = vmatpush1.msra.mxu0 0.0
    %1668 = vmatprep.subr.mxu0 0.0
    %1669 = vmatpush1.msra.mxu0 0.0
    %1670 = vmatprep.subr.mxu0 0.0
    %1671 = vmatpush1.msra.mxu0 0.0
    %1672 = vmatprep.subr.mxu0 0.0
    %1673 = vmatpush1.msra.mxu0 0.0
    %1674 = vmatprep.subr.mxu0 0.0
    %1675 = vmatpush1.msra.mxu0 0.0
    %1676 = vmatprep.subr.mxu0 0.0
    %1677 = vmatpush1.msra.mxu0 0.0
    %1678 = vmatprep.subr.mxu0 0.0
    %1679 = vmatpush1.msra.mxu0 0.0
    %1680 = vmatprep.subr.mxu0 0.0
    %1681 = vmatpush1.msra.mxu0 0.0
    %1682 = vmatprep.subr.mxu0 0.0
    %1683 = vmatpush1.msra.mxu0 0.0
    %1684 = vmatprep.subr.mxu0 0.0
    %1685 = vmatpush1.msra.mxu0 0.0
    %1686 = vmatprep.subr.mxu0 0.0
    %1687 = vmatpush1.msra.mxu0 0.0
    %1688 = vmatprep.subr.mxu0 0.0
    %1689 = vmatpush1.msra.mxu0 0.0
    %1690 = vmatprep.subr.mxu0 0.0
    %1691 = vmatpush1.msra.mxu0 0.0
    %1692 = vmatprep.subr.mxu0 0.0
    %1693 = vmatpush1.msra.mxu0 0.0
    %1694 = vmatprep.subr.mxu0 0.0
    %1695 = vmatpush1.msra.mxu0 0.0
    %1696 = vmatprep.mubr.f32.mxu0 0.0
    %1697 = vmatmul.mubr.f32.gmra.mrb[0].mxu0 %v1485
    %v1698 = vpop.f32.mrb[0].mxu0
    %v1699 = vadd.f32 %v373, %v1698
    %v1700 = vpop.f32.mrb[0].mxu0
    %1701 = vdwg.mxu0
    %v1702 = vtanh.pop %v1699
    %s1703 = scalar_lea.vmem [#allocation2], 40
    %v1704 = vld [vmem:[%s1703] sm:$0xff]
    %v1705 = vmul.f32 %v1704, %v1702
    %v1706 = vadd.f32 %v1485, %v1705
    %s1707 = scalar_lea.vmem [#allocation3], 160
    %v1708 = vld [vmem:[%s1707] sm:$0xff]
    %v1709 = vld [vmem:[%s1707 + $0x8] sm:$0xff]
    %v1710 = vld [vmem:[%s1707 + $0x10] sm:$0xff]
    %v1711 = vld [vmem:[%s1707 + $0x18] sm:$0xff]
    %v1712 = vadd.f32 %v1708, %v1557
    %v1713 = vadd.f32 %v1709, %v1559
    %v1714 = vadd.f32 %v1710, %v1628
    %v1715 = vadd.f32 %v1711, %v1630
    %v1716 = vxor.u32 %v1712, 2147483648
    %v1717 = vmul.f32 %v1716, 1.442695
    %v1718 = vpow.pop %v1717
    %v1719 = vadd.f32 %v1718, 1.0
    %v1720 = vrcp.pop %v1719
    %v1721 = vmul.f32 1.0, %v1720
    %v1722 = vxor.u32 %v1713, 2147483648
    %v1723 = vmul.f32 %v1722, 1.442695
    %v1724 = vpow.pop %v1723
    %v1725 = vadd.f32 %v1724, 1.0
    %v1726 = vrcp.pop %v1725
    %v1727 = vmul.f32 1.0, %v1726
    %v1728 = vxor.u32 %v1714, 2147483648
    %v1729 = vmul.f32 %v1728, 1.442695
    %v1730 = vpow.pop %v1729
    %v1731 = vadd.f32 %v1730, 1.0
    %v1732 = vrcp.pop %v1731
    %v1733 = vmul.f32 1.0, %v1732
    %v1734 = vtanh.pop %v1715
    %v1735 = vmul.f32 %v1727, %v1706
    %v1736 = vmul.f32 %v1721, %v1734
    %v1737 = vadd.f32 %v1735, %v1736
    %v1738 = vtanh.pop %v1737
    %v1739 = vmul.f32 %v1733, %v1738
    %s1740 = scalar_lea.vmem [#allocation9], 40
    %1741 = vst [vmem:[%s1740] sm:$0xff] %v1739
    %1742 = vmatprep.subr.mxu0 %v146
    %1743 = vmatpush1.msra.mxu0 %v145
    %1744 = vmatprep.subr.mxu0 %v150
    %1745 = vmatpush1.msra.mxu0 %v149
    %1746 = vmatprep.subr.mxu0 %v154
    %1747 = vmatpush1.msra.mxu0 %v153
    %1748 = vmatprep.subr.mxu0 %v158
    %1749 = vmatpush1.msra.mxu0 %v157
    %1750 = vmatprep.subr.mxu0 %v162
    %1751 = vmatpush1.msra.mxu0 %v161
    %1752 = vmatprep.subr.mxu0 %v166
    %1753 = vmatpush1.msra.mxu0 %v165
    %1754 = vmatprep.subr.mxu0 %v170
    %1755 = vmatpush1.msra.mxu0 %v169
    %1756 = vmatprep.subr.mxu0 %v174
    %1757 = vmatpush1.msra.mxu0 %v173
    %1758 = vmatprep.subr.mxu0 %v178
    %1759 = vmatpush1.msra.mxu0 %v177
    %1760 = vmatprep.subr.mxu0 %v182
    %1761 = vmatpush1.msra.mxu0 %v181
    %1762 = vmatprep.subr.mxu0 %v186
    %1763 = vmatpush1.msra.mxu0 %v185
    %1764 = vmatprep.subr.mxu0 %v190
    %1765 = vmatpush1.msra.mxu0 %v189
    %1766 = vmatprep.subr.mxu0 %v194
    %1767 = vmatpush1.msra.mxu0 %v193
    %1768 = vmatprep.subr.mxu0 %v198
    %1769 = vmatpush1.msra.mxu0 %v197
    %1770 = vmatprep.subr.mxu0 %v202
    %1771 = vmatpush1.msra.mxu0 %v201
    %1772 = vmatprep.subr.mxu0 %v206
    %1773 = vmatpush1.msra.mxu0 %v205
    %1774 = vmatprep.subr.mxu0 0.0
    %1775 = vmatpush1.msra.mxu0 0.0
    %1776 = vmatprep.subr.mxu0 0.0
    %1777 = vmatpush1.msra.mxu0 0.0
    %1778 = vmatprep.subr.mxu0 0.0
    %1779 = vmatpush1.msra.mxu0 0.0
    %1780 = vmatprep.subr.mxu0 0.0
    %1781 = vmatpush1.msra.mxu0 0.0
    %1782 = vmatprep.subr.mxu0 0.0
    %1783 = vmatpush1.msra.mxu0 0.0
    %1784 = vmatprep.subr.mxu0 0.0
    %1785 = vmatpush1.msra.mxu0 0.0
    %1786 = vmatprep.subr.mxu0 0.0
    %1787 = vmatpush1.msra.mxu0 0.0
    %1788 = vmatprep.subr.mxu0 0.0
    %1789 = vmatpush1.msra.mxu0 0.0
    %1790 = vmatprep.subr.mxu0 0.0
    %1791 = vmatpush1.msra.mxu0 0.0
    %1792 = vmatprep.subr.mxu0 0.0
    %1793 = vmatpush1.msra.mxu0 0.0
    %1794 = vmatprep.subr.mxu0 0.0
    %1795 = vmatpush1.msra.mxu0 0.0
    %1796 = vmatprep.subr.mxu0 0.0
    %1797 = vmatpush1.msra.mxu0 0.0
    %1798 = vmatprep.subr.mxu0 0.0
    %1799 = vmatpush1.msra.mxu0 0.0
    %1800 = vmatprep.subr.mxu0 0.0
    %1801 = vmatpush1.msra.mxu0 0.0
    %1802 = vmatprep.subr.mxu0 0.0
    %1803 = vmatpush1.msra.mxu0 0.0
    %1804 = vmatprep.subr.mxu0 0.0
    %1805 = vmatpush1.msra.mxu0 0.0
    %1806 = vmatprep.mubr.f32.mxu0 0.0
    %1807 = vmatmul.mubr.f32.gmra.mrb[0].mxu0 %v1739
    %v1808 = vpop.f32.mrb[0].mxu0
    %v1809 = vadd.f32 0.0, %v1808
    %v1810 = vpop.f32.mrb[0].mxu0
    %v1811 = vadd.f32 0.0, %v1810
    %1812 = vdwg.mxu0
    %1813 = vmatprep.subr.mxu0 %v148
    %1814 = vmatpush1.msra.mxu0 %v147
    %1815 = vmatprep.subr.mxu0 %v152
    %1816 = vmatpush1.msra.mxu0 %v151
    %1817 = vmatprep.subr.mxu0 %v156
    %1818 = vmatpush1.msra.mxu0 %v155
    %1819 = vmatprep.subr.mxu0 %v160
    %1820 = vmatpush1.msra.mxu0 %v159
    %1821 = vmatprep.subr.mxu0 %v164
    %1822 = vmatpush1.msra.mxu0 %v163
    %1823 = vmatprep.subr.mxu0 %v168
    %1824 = vmatpush1.msra.mxu0 %v167
    %1825 = vmatprep.subr.mxu0 %v172
    %1826 = vmatpush1.msra.mxu0 %v171
    %1827 = vmatprep.subr.mxu0 %v176
    %1828 = vmatpush1.msra.mxu0 %v175
    %1829 = vmatprep.subr.mxu0 %v180
    %1830 = vmatpush1.msra.mxu0 %v179
    %1831 = vmatprep.subr.mxu0 %v184
    %1832 = vmatpush1.msra.mxu0 %v183
    %1833 = vmatprep.subr.mxu0 %v188
    %1834 = vmatpush1.msra.mxu0 %v187
    %1835 = vmatprep.subr.mxu0 %v192
    %1836 = vmatpush1.msra.mxu0 %v191
    %1837 = vmatprep.subr.mxu0 %v196
    %1838 = vmatpush1.msra.mxu0 %v195
    %1839 = vmatprep.subr.mxu0 %v200
    %1840 = vmatpush1.msra.mxu0 %v199
    %1841 = vmatprep.subr.mxu0 %v204
    %1842 = vmatpush1.msra.mxu0 %v203
    %1843 = vmatprep.subr.mxu0 %v208
    %1844 = vmatpush1.msra.mxu0 %v207
    %1845 = vmatprep.subr.mxu0 0.0
    %1846 = vmatpush1.msra.mxu0 0.0
    %1847 = vmatprep.subr.mxu0 0.0
    %1848 = vmatpush1.msra.mxu0 0.0
    %1849 = vmatprep.subr.mxu0 0.0
    %1850 = vmatpush1.msra.mxu0 0.0
    %1851 = vmatprep.subr.mxu0 0.0
    %1852 = vmatpush1.msra.mxu0 0.0
    %1853 = vmatprep.subr.mxu0 0.0
    %1854 = vmatpush1.msra.mxu0 0.0
    %1855 = vmatprep.subr.mxu0 0.0
    %1856 = vmatpush1.msra.mxu0 0.0
    %1857 = vmatprep.subr.mxu0 0.0
    %1858 = vmatpush1.msra.mxu0 0.0
    %1859 = vmatprep.subr.mxu0 0.0
    %1860 = vmatpush1.msra.mxu0 0.0
    %1861 = vmatprep.subr.mxu0 0.0
    %1862 = vmatpush1.msra.mxu0 0.0
    %1863 = vmatprep.subr.mxu0 0.0
    %1864 = vmatpush1.msra.mxu0 0.0
    %1865 = vmatprep.subr.mxu0 0.0
    %1866 = vmatpush1.msra.mxu0 0.0
    %1867 = vmatprep.subr.mxu0 0.0
    %1868 = vmatpush1.msra.mxu0 0.0
    %1869 = vmatprep.subr.mxu0 0.0
    %1870 = vmatpush1.msra.mxu0 0.0
    %1871 = vmatprep.subr.mxu0 0.0
    %1872 = vmatpush1.msra.mxu0 0.0
    %1873 = vmatprep.subr.mxu0 0.0
    %1874 = vmatpush1.msra.mxu0 0.0
    %1875 = vmatprep.subr.mxu0 0.0
    %1876 = vmatpush1.msra.mxu0 0.0
    %1877 = vmatprep.mubr.f32.mxu0 0.0
    %1878 = vmatmul.mubr.f32.gmra.mrb[0].mxu0 %v1739
    %v1879 = vpop.f32.mrb[0].mxu0
    %v1880 = vadd.f32 0.0, %v1879
    %v1881 = vpop.f32.mrb[0].mxu0
    %v1882 = vadd.f32 0.0, %v1881
    %1883 = vdwg.mxu0
    %1884 = vmatprep.subr.mxu0 0.0
    %1885 = vmatpush1.msra.mxu0 %v209
    %1886 = vmatprep.subr.mxu0 0.0
    %1887 = vmatpush1.msra.mxu0 %v210
    %1888 = vmatprep.subr.mxu0 0.0
    %1889 = vmatpush1.msra.mxu0 %v211
    %1890 = vmatprep.subr.mxu0 0.0
    %1891 = vmatpush1.msra.mxu0 %v212
    %1892 = vmatprep.subr.mxu0 0.0
    %1893 = vmatpush1.msra.mxu0 %v213
    %1894 = vmatprep.subr.mxu0 0.0
    %1895 = vmatpush1.msra.mxu0 %v214
    %1896 = vmatprep.subr.mxu0 0.0
    %1897 = vmatpush1.msra.mxu0 %v215
    %1898 = vmatprep.subr.mxu0 0.0
    %1899 = vmatpush1.msra.mxu0 %v216
    %1900 = vmatprep.subr.mxu0 0.0
    %1901 = vmatpush1.msra.mxu0 %v217
    %1902 = vmatprep.subr.mxu0 0.0
    %1903 = vmatpush1.msra.mxu0 %v218
    %1904 = vmatprep.subr.mxu0 0.0
    %1905 = vmatpush1.msra.mxu0 %v219
    %1906 = vmatprep.subr.mxu0 0.0
    %1907 = vmatpush1.msra.mxu0 %v220
    %1908 = vmatprep.subr.mxu0 0.0
    %1909 = vmatpush1.msra.mxu0 %v221
    %1910 = vmatprep.subr.mxu0 0.0
    %1911 = vmatpush1.msra.mxu0 %v222
    %1912 = vmatprep.subr.mxu0 0.0
    %1913 = vmatpush1.msra.mxu0 %v223
    %1914 = vmatprep.subr.mxu0 0.0
    %1915 = vmatpush1.msra.mxu0 %v224
    %1916 = vmatprep.subr.mxu0 0.0
    %1917 = vmatpush1.msra.mxu0 0.0
    %1918 = vmatprep.subr.mxu0 0.0
    %1919 = vmatpush1.msra.mxu0 0.0
    %1920 = vmatprep.subr.mxu0 0.0
    %1921 = vmatpush1.msra.mxu0 0.0
    %1922 = vmatprep.subr.mxu0 0.0
    %1923 = vmatpush1.msra.mxu0 0.0
    %1924 = vmatprep.subr.mxu0 0.0
    %1925 = vmatpush1.msra.mxu0 0.0
    %1926 = vmatprep.subr.mxu0 0.0
    %1927 = vmatpush1.msra.mxu0 0.0
    %1928 = vmatprep.subr.mxu0 0.0
    %1929 = vmatpush1.msra.mxu0 0.0
    %1930 = vmatprep.subr.mxu0 0.0
    %1931 = vmatpush1.msra.mxu0 0.0
    %1932 = vmatprep.subr.mxu0 0.0
    %1933 = vmatpush1.msra.mxu0 0.0
    %1934 = vmatprep.subr.mxu0 0.0
    %1935 = vmatpush1.msra.mxu0 0.0
    %1936 = vmatprep.subr.mxu0 0.0
    %1937 = vmatpush1.msra.mxu0 0.0
    %1938 = vmatprep.subr.mxu0 0.0
    %1939 = vmatpush1.msra.mxu0 0.0
    %1940 = vmatprep.subr.mxu0 0.0
    %1941 = vmatpush1.msra.mxu0 0.0
    %1942 = vmatprep.subr.mxu0 0.0
    %1943 = vmatpush1.msra.mxu0 0.0
    %1944 = vmatprep.subr.mxu0 0.0
    %1945 = vmatpush1.msra.mxu0 0.0
    %1946 = vmatprep.subr.mxu0 0.0
    %1947 = vmatpush1.msra.mxu0 0.0
    %1948 = vmatprep.mubr.f32.mxu0 0.0
    %1949 = vmatmul.mubr.f32.gmra.mrb[0].mxu0 %v1737
    %v1950 = vpop.f32.mrb[0].mxu0
    %v1951 = vadd.f32 %v373, %v1950
    %v1952 = vpop.f32.mrb[0].mxu0
    %1953 = vdwg.mxu0
    %v1954 = vtanh.pop %v1951
    %s1955 = scalar_lea.vmem [#allocation2], 48
    %v1956 = vld [vmem:[%s1955] sm:$0xff]
    %v1957 = vmul.f32 %v1956, %v1954
    %v1958 = vadd.f32 %v1737, %v1957
    %s1959 = scalar_lea.vmem [#allocation3], 192
    %v1960 = vld [vmem:[%s1959] sm:$0xff]
    %v1961 = vld [vmem:[%s1959 + $0x8] sm:$0xff]
    %v1962 = vld [vmem:[%s1959 + $0x10] sm:$0xff]
    %v1963 = vld [vmem:[%s1959 + $0x18] sm:$0xff]
    %v1964 = vadd.f32 %v1960, %v1809
    %v1965 = vadd.f32 %v1961, %v1811
    %v1966 = vadd.f32 %v1962, %v1880
    %v1967 = vadd.f32 %v1963, %v1882
    %v1968 = vxor.u32 %v1964, 2147483648
    %v1969 = vmul.f32 %v1968, 1.442695
    %v1970 = vpow.pop %v1969
    %v1971 = vadd.f32 %v1970, 1.0
    %v1972 = vrcp.pop %v1971
    %v1973 = vmul.f32 1.0, %v1972
    %v1974 = vxor.u32 %v1965, 2147483648
    %v1975 = vmul.f32 %v1974, 1.442695
    %v1976 = vpow.pop %v1975
    %v1977 = vadd.f32 %v1976, 1.0
    %v1978 = vrcp.pop %v1977
    %v1979 = vmul.f32 1.0, %v1978
    %v1980 = vxor.u32 %v1966, 2147483648
    %v1981 = vmul.f32 %v1980, 1.442695
    %v1982 = vpow.pop %v1981
    %v1983 = vadd.f32 %v1982, 1.0
    %v1984 = vrcp.pop %v1983
    %v1985 = vmul.f32 1.0, %v1984
    %v1986 = vtanh.pop %v1967
    %v1987 = vmul.f32 %v1979, %v1958
    %v1988 = vmul.f32 %v1973, %v1986
    %v1989 = vadd.f32 %v1987, %v1988
    %v1990 = vtanh.pop %v1989
    %v1991 = vmul.f32 %v1985, %v1990
    %s1992 = scalar_lea.vmem [#allocation9], 48
    %1993 = vst [vmem:[%s1992] sm:$0xff] %v1991
    %1994 = vmatprep.subr.mxu0 %v146
    %1995 = vmatpush1.msra.mxu0 %v145
    %1996 = vmatprep.subr.mxu0 %v150
    %1997 = vmatpush1.msra.mxu0 %v149
    %1998 = vmatprep.subr.mxu0 %v154
    %1999 = vmatpush1.msra.mxu0 %v153
    %2000 = vmatprep.subr.mxu0 %v158
    %2001 = vmatpush1.msra.mxu0 %v157
    %2002 = vmatprep.subr.mxu0 %v162
    %2003 = vmatpush1.msra.mxu0 %v161
    %2004 = vmatprep.subr.mxu0 %v166
    %2005 = vmatpush1.msra.mxu0 %v165
    %2006 = vmatprep.subr.mxu0 %v170
    %2007 = vmatpush1.msra.mxu0 %v169
    %2008 = vmatprep.subr.mxu0 %v174
    %2009 = vmatpush1.msra.mxu0 %v173
    %2010 = vmatprep.subr.mxu0 %v178
    %2011 = vmatpush1.msra.mxu0 %v177
    %2012 = vmatprep.subr.mxu0 %v182
    %2013 = vmatpush1.msra.mxu0 %v181
    %2014 = vmatprep.subr.mxu0 %v186
    %2015 = vmatpush1.msra.mxu0 %v185
    %2016 = vmatprep.subr.mxu0 %v190
    %2017 = vmatpush1.msra.mxu0 %v189
    %2018 = vmatprep.subr.mxu0 %v194
    %2019 = vmatpush1.msra.mxu0 %v193
    %2020 = vmatprep.subr.mxu0 %v198
    %2021 = vmatpush1.msra.mxu0 %v197
    %2022 = vmatprep.subr.mxu0 %v202
    %2023 = vmatpush1.msra.mxu0 %v201
    %2024 = vmatprep.subr.mxu0 %v206
    %2025 = vmatpush1.msra.mxu0 %v205
    %2026 = vmatprep.subr.mxu0 0.0
    %2027 = vmatpush1.msra.mxu0 0.0
    %2028 = vmatprep.subr.mxu0 0.0
    %2029 = vmatpush1.msra.mxu0 0.0
    %2030 = vmatprep.subr.mxu0 0.0
    %2031 = vmatpush1.msra.mxu0 0.0
    %2032 = vmatprep.subr.mxu0 0.0
    %2033 = vmatpush1.msra.mxu0 0.0
    %2034 = vmatprep.subr.mxu0 0.0
    %2035 = vmatpush1.msra.mxu0 0.0
    %2036 = vmatprep.subr.mxu0 0.0
    %2037 = vmatpush1.msra.mxu0 0.0
    %2038 = vmatprep.subr.mxu0 0.0
    %2039 = vmatpush1.msra.mxu0 0.0
    %2040 = vmatprep.subr.mxu0 0.0
    %2041 = vmatpush1.msra.mxu0 0.0
    %2042 = vmatprep.subr.mxu0 0.0
    %2043 = vmatpush1.msra.mxu0 0.0
    %2044 = vmatprep.subr.mxu0 0.0
    %2045 = vmatpush1.msra.mxu0 0.0
    %2046 = vmatprep.subr.mxu0 0.0
    %2047 = vmatpush1.msra.mxu0 0.0
    %2048 = vmatprep.subr.mxu0 0.0
    %2049 = vmatpush1.msra.mxu0 0.0
    %2050 = vmatprep.subr.mxu0 0.0
    %2051 = vmatpush1.msra.mxu0 0.0
    %2052 = vmatprep.subr.mxu0 0.0
    %2053 = vmatpush1.msra.mxu0 0.0
    %2054 = vmatprep.subr.mxu0 0.0
    %2055 = vmatpush1.msra.mxu0 0.0
    %2056 = vmatprep.subr.mxu0 0.0
    %2057 = vmatpush1.msra.mxu0 0.0
    %2058 = vmatprep.mubr.f32.mxu0 0.0
    %2059 = vmatmul.mubr.f32.gmra.mrb[0].mxu0 %v1991
    %v2060 = vpop.f32.mrb[0].mxu0
    %v2061 = vadd.f32 0.0, %v2060
    %v2062 = vpop.f32.mrb[0].mxu0
    %v2063 = vadd.f32 0.0, %v2062
    %2064 = vdwg.mxu0
    %2065 = vmatprep.subr.mxu0 %v148
    %2066 = vmatpush1.msra.mxu0 %v147
    %2067 = vmatprep.subr.mxu0 %v152
    %2068 = vmatpush1.msra.mxu0 %v151
    %2069 = vmatprep.subr.mxu0 %v156
    %2070 = vmatpush1.msra.mxu0 %v155
    %2071 = vmatprep.subr.mxu0 %v160
    %2072 = vmatpush1.msra.mxu0 %v159
    %2073 = vmatprep.subr.mxu0 %v164
    %2074 = vmatpush1.msra.mxu0 %v163
    %2075 = vmatprep.subr.mxu0 %v168
    %2076 = vmatpush1.msra.mxu0 %v167
    %2077 = vmatprep.subr.mxu0 %v172
    %2078 = vmatpush1.msra.mxu0 %v171
    %2079 = vmatprep.subr.mxu0 %v176
    %2080 = vmatpush1.msra.mxu0 %v175
    %2081 = vmatprep.subr.mxu0 %v180
    %2082 = vmatpush1.msra.mxu0 %v179
    %2083 = vmatprep.subr.mxu0 %v184
    %2084 = vmatpush1.msra.mxu0 %v183
    %2085 = vmatprep.subr.mxu0 %v188
    %2086 = vmatpush1.msra.mxu0 %v187
    %2087 = vmatprep.subr.mxu0 %v192
    %2088 = vmatpush1.msra.mxu0 %v191
    %2089 = vmatprep.subr.mxu0 %v196
    %2090 = vmatpush1.msra.mxu0 %v195
    %2091 = vmatprep.subr.mxu0 %v200
    %2092 = vmatpush1.msra.mxu0 %v199
    %2093 = vmatprep.subr.mxu0 %v204
    %2094 = vmatpush1.msra.mxu0 %v203
    %2095 = vmatprep.subr.mxu0 %v208
    %2096 = vmatpush1.msra.mxu0 %v207
    %2097 = vmatprep.subr.mxu0 0.0
    %2098 = vmatpush1.msra.mxu0 0.0
    %2099 = vmatprep.subr.mxu0 0.0
    %2100 = vmatpush1.msra.mxu0 0.0
    %2101 = vmatprep.subr.mxu0 0.0
    %2102 = vmatpush1.msra.mxu0 0.0
    %2103 = vmatprep.subr.mxu0 0.0
    %2104 = vmatpush1.msra.mxu0 0.0
    %2105 = vmatprep.subr.mxu0 0.0
    %2106 = vmatpush1.msra.mxu0 0.0
    %2107 = vmatprep.subr.mxu0 0.0
    %2108 = vmatpush1.msra.mxu0 0.0
    %2109 = vmatprep.subr.mxu0 0.0
    %2110 = vmatpush1.msra.mxu0 0.0
    %2111 = vmatprep.subr.mxu0 0.0
    %2112 = vmatpush1.msra.mxu0 0.0
    %2113 = vmatprep.subr.mxu0 0.0
    %2114 = vmatpush1.msra.mxu0 0.0
    %2115 = vmatprep.subr.mxu0 0.0
    %2116 = vmatpush1.msra.mxu0 0.0
    %2117 = vmatprep.subr.mxu0 0.0
    %2118 = vmatpush1.msra.mxu0 0.0
    %2119 = vmatprep.subr.mxu0 0.0
    %2120 = vmatpush1.msra.mxu0 0.0
    %2121 = vmatprep.subr.mxu0 0.0
    %2122 = vmatpush1.msra.mxu0 0.0
    %2123 = vmatprep.subr.mxu0 0.0
    %2124 = vmatpush1.msra.mxu0 0.0
    %2125 = vmatprep.subr.mxu0 0.0
    %2126 = vmatpush1.msra.mxu0 0.0
    %2127 = vmatprep.subr.mxu0 0.0
    %2128 = vmatpush1.msra.mxu0 0.0
    %2129 = vmatprep.mubr.f32.mxu0 0.0
    %2130 = vmatmul.mubr.f32.gmra.mrb[0].mxu0 %v1991
    %v2131 = vpop.f32.mrb[0].mxu0
    %v2132 = vadd.f32 0.0, %v2131
    %v2133 = vpop.f32.mrb[0].mxu0
    %v2134 = vadd.f32 0.0, %v2133
    %2135 = vdwg.mxu0
    %2136 = vmatprep.subr.mxu0 0.0
    %2137 = vmatpush1.msra.mxu0 %v209
    %2138 = vmatprep.subr.mxu0 0.0
    %2139 = vmatpush1.msra.mxu0 %v210
    %2140 = vmatprep.subr.mxu0 0.0
    %2141 = vmatpush1.msra.mxu0 %v211
    %2142 = vmatprep.subr.mxu0 0.0
    %2143 = vmatpush1.msra.mxu0 %v212
    %2144 = vmatprep.subr.mxu0 0.0
    %2145 = vmatpush1.msra.mxu0 %v213
    %2146 = vmatprep.subr.mxu0 0.0
    %2147 = vmatpush1.msra.mxu0 %v214
    %2148 = vmatprep.subr.mxu0 0.0
    %2149 = vmatpush1.msra.mxu0 %v215
    %2150 = vmatprep.subr.mxu0 0.0
    %2151 = vmatpush1.msra.mxu0 %v216
    %2152 = vmatprep.subr.mxu0 0.0
    %2153 = vmatpush1.msra.mxu0 %v217
    %2154 = vmatprep.subr.mxu0 0.0
    %2155 = vmatpush1.msra.mxu0 %v218
    %2156 = vmatprep.subr.mxu0 0.0
    %2157 = vmatpush1.msra.mxu0 %v219
    %2158 = vmatprep.subr.mxu0 0.0
    %2159 = vmatpush1.msra.mxu0 %v220
    %2160 = vmatprep.subr.mxu0 0.0
    %2161 = vmatpush1.msra.mxu0 %v221
    %2162 = vmatprep.subr.mxu0 0.0
    %2163 = vmatpush1.msra.mxu0 %v222
    %2164 = vmatprep.subr.mxu0 0.0
    %2165 = vmatpush1.msra.mxu0 %v223
    %2166 = vmatprep.subr.mxu0 0.0
    %2167 = vmatpush1.msra.mxu0 %v224
    %2168 = vmatprep.subr.mxu0 0.0
    %2169 = vmatpush1.msra.mxu0 0.0
    %2170 = vmatprep.subr.mxu0 0.0
    %2171 = vmatpush1.msra.mxu0 0.0
    %2172 = vmatprep.subr.mxu0 0.0
    %2173 = vmatpush1.msra.mxu0 0.0
    %2174 = vmatprep.subr.mxu0 0.0
    %2175 = vmatpush1.msra.mxu0 0.0
    %2176 = vmatprep.subr.mxu0 0.0
    %2177 = vmatpush1.msra.mxu0 0.0
    %2178 = vmatprep.subr.mxu0 0.0
    %2179 = vmatpush1.msra.mxu0 0.0
    %2180 = vmatprep.subr.mxu0 0.0
    %2181 = vmatpush1.msra.mxu0 0.0
    %2182 = vmatprep.subr.mxu0 0.0
    %2183 = vmatpush1.msra.mxu0 0.0
    %2184 = vmatprep.subr.mxu0 0.0
    %2185 = vmatpush1.msra.mxu0 0.0
    %2186 = vmatprep.subr.mxu0 0.0
    %2187 = vmatpush1.msra.mxu0 0.0
    %2188 = vmatprep.subr.mxu0 0.0
    %2189 = vmatpush1.msra.mxu0 0.0
    %2190 = vmatprep.subr.mxu0 0.0
    %2191 = vmatpush1.msra.mxu0 0.0
    %2192 = vmatprep.subr.mxu0 0.0
    %2193 = vmatpush1.msra.mxu0 0.0
    %2194 = vmatprep.subr.mxu0 0.0
    %2195 = vmatpush1.msra.mxu0 0.0
    %2196 = vmatprep.subr.mxu0 0.0
    %2197 = vmatpush1.msra.mxu0 0.0
    %2198 = vmatprep.subr.mxu0 0.0
    %2199 = vmatpush1.msra.mxu0 0.0
    %2200 = vmatprep.mubr.f32.mxu0 0.0
    %2201 = vmatmul.mubr.f32.gmra.mrb[0].mxu0 %v1989
    %v2202 = vpop.f32.mrb[0].mxu0
    %v2203 = vadd.f32 %v373, %v2202
    %v2204 = vpop.f32.mrb[0].mxu0
    %2205 = vdwg.mxu0
    %v2206 = vtanh.pop %v2203
    %s2207 = scalar_lea.vmem [#allocation2], 56
    %v2208 = vld [vmem:[%s2207] sm:$0xff]
    %v2209 = vmul.f32 %v2208, %v2206
    %v2210 = vadd.f32 %v1989, %v2209
    %s2211 = scalar_lea.vmem [#allocation3], 224
    %v2212 = vld [vmem:[%s2211] sm:$0xff]
    %v2213 = vld [vmem:[%s2211 + $0x8] sm:$0xff]
    %v2214 = vld [vmem:[%s2211 + $0x10] sm:$0xff]
    %v2215 = vld [vmem:[%s2211 + $0x18] sm:$0xff]
    %v2216 = vadd.f32 %v2212, %v2061
    %v2217 = vadd.f32 %v2213, %v2063
    %v2218 = vadd.f32 %v2214, %v2132
    %v2219 = vadd.f32 %v2215, %v2134
    %v2220 = vxor.u32 %v2216, 2147483648
    %v2221 = vmul.f32 %v2220, 1.442695
    %v2222 = vpow.pop %v2221
    %v2223 = vadd.f32 %v2222, 1.0
    %v2224 = vrcp.pop %v2223
    %v2225 = vmul.f32 1.0, %v2224
    %v2226 = vxor.u32 %v2217, 2147483648
    %v2227 = vmul.f32 %v2226, 1.442695
    %v2228 = vpow.pop %v2227
    %v2229 = vadd.f32 %v2228, 1.0
    %v2230 = vrcp.pop %v2229
    %v2231 = vmul.f32 1.0, %v2230
    %v2232 = vxor.u32 %v2218, 2147483648
    %v2233 = vmul.f32 %v2232, 1.442695
    %v2234 = vpow.pop %v2233
    %v2235 = vadd.f32 %v2234, 1.0
    %v2236 = vrcp.pop %v2235
    %v2237 = vmul.f32 1.0, %v2236
    %v2238 = vtanh.pop %v2219
    %v2239 = vmul.f32 %v2231, %v2210
    %v2240 = vmul.f32 %v2225, %v2238
    %v2241 = vadd.f32 %v2239, %v2240
    %v2242 = vtanh.pop %v2241
    %v2243 = vmul.f32 %v2237, %v2242
    %s2244 = scalar_lea.vmem [#allocation9], 56
    %2245 = vst [vmem:[%s2244] sm:$0xff] %v2243
    %2246 = vst [vmem:[#allocation10] sm:$0xff] %v2243
    %2247 = vst [vmem:[#allocation12] sm:$0xff] %v2241
    // Predicated region
    $region46: #{tpu_custom_call.1} parent=1 // pred_check
      _
    $region47: #{tpu_custom_call.1} parent=1 // pred_check_branch
      %2249 = sbr.rel (0) target = $region49
    $region48: #{tpu_custom_call.1} parent=1 // pred_region
      %s2251 = ssub.s32 1024, 1024
      %2252 = vsyncadd [#allocation5], %s2251
      %s2253 = sshll.u32 [#allocation9], 4
      %s2254 = int_to_ptr.vmem [resolvable:$true] %s2253
      %2259 = dma.vmem_to_hbm [thread:$0]  %s2254, 1024, %s7, [#allocation5], 128, 128, 8
    $region49: #{tpu_custom_call.1} parent=1 // pred_fallthru
      _
    // Predicated region
    $region50: #{tpu_custom_call.1} parent=1 // pred_check
      _
    $region51: #{tpu_custom_call.1} parent=1 // pred_check_branch
      %2261 = sbr.rel (0) target = $region53
    $region52: #{tpu_custom_call.1} parent=1 // pred_region
      %s2263 = ssub.s32 128, 128
      %2264 = vsyncadd [#allocation11], %s2263
      %s2266 = sshll.u32 [#allocation10], 4
      %s2267 = int_to_ptr.vmem [resolvable:$true] %s2266
      %2269 = dma.vmem_to_hbm [thread:$0]  %s2267, 128, %s8, [#allocation11]
    $region53: #{tpu_custom_call.1} parent=1 // pred_fallthru
      _
    // Predicated region
    $region54: #{tpu_custom_call.1} parent=1 // pred_check
      _
    $region55: #{tpu_custom_call.1} parent=1 // pred_check_branch
      %2271 = sbr.rel (0) target = $region57
    $region56: #{tpu_custom_call.1} parent=1 // pred_region
      %s2273 = ssub.s32 128, 128
      %2274 = vsyncadd [#allocation11], %s2273
      %s2276 = sshll.u32 [#allocation12], 4
      %s2277 = int_to_ptr.vmem [resolvable:$true] %s2276
      %2279 = dma.vmem_to_hbm [thread:$0]  %s2277, 128, %s9, [#allocation11]
    $region57: #{tpu_custom_call.1} parent=1 // pred_fallthru
      _
    // Predicated region
    $region58: #{tpu_custom_call.1} parent=1 // pred_check
      _
    $region59: #{tpu_custom_call.1} parent=1 // pred_check_branch
      %2281 = sbr.rel (0) target = $region61
    $region60: #{tpu_custom_call.1} parent=1 // pred_region
      %2282 = dma.done [#allocation5], 1024
    $region61: #{tpu_custom_call.1} parent=1 // pred_fallthru
      _
    // Predicated region
    $region62: #{tpu_custom_call.1} parent=1 // pred_check
      _
    $region63: #{tpu_custom_call.1} parent=1 // pred_check_branch
      %2284 = sbr.rel (0) target = $region65
    $region64: #{tpu_custom_call.1} parent=1 // pred_region
      %2285 = dma.done [#allocation11], 128
    $region65: #{tpu_custom_call.1} parent=1 // pred_fallthru
      _
    // Predicated region
    $region66: #{tpu_custom_call.1} parent=1 // pred_check
      _
    $region67: #{tpu_custom_call.1} parent=1 // pred_check_branch
      %2287 = sbr.rel (0) target = $region69
    $region68: #{tpu_custom_call.1} parent=1 // pred_region
      %2288 = dma.done [#allocation11], 128
    $region69: #{tpu_custom_call.1} parent=1 // pred_fallthru
      _
    %2289 = vsyncpa [#allocation4], 1
    %2290 = vsyncpa [#allocation7], 1
    %2291 = vsyncpa [#allocation5], 1
    %2292 = vsyncpa [#allocation11], 1

// kernel: tpu_custom_call.1
$region0: #{tpu_custom_call.1}
  #allocation0 [shape = 'u32[]', space=smem, size = 0x4, offset = 0x4, fixed_abs, tag = 'smem constant byte address 0x4 - core index']
  #allocation1 [shape = 'u32[144,128]{1,0:T(1,128)}', space=vmem, size = 0x12000, scoped, tag = 'internal scratch']
  #allocation2 [shape = 'f32[8,8,128]{2,1,0:T(8,128)}', space=vmem, size = 0x8000, scoped, tag = 'scratch operand']
  %s0 = inlined_call_operand.hbm [shape: f32[8,8,512], index: 0, kind: input, shape index: {}]
  %s1 = inlined_call_operand.vmem [shape: f32[8,8,1], index: 1, kind: input, shape index: {}]
  %s2 = inlined_call_operand.vmem [shape: f32[8,128], index: 2, kind: input, shape index: {}]
  %s3 = inlined_call_operand.vmem [shape: f32[8,128], index: 3, kind: input, shape index: {}]
  %s4 = inlined_call_operand.hbm [shape: f32[128,512], index: 4, kind: input, shape index: {}]
  %s5 = inlined_call_operand.hbm [shape: f32[128,128], index: 5, kind: input, shape index: {}]
  %s6 = inlined_call_operand.vmem [shape: f32[1,128], index: 6, kind: input, shape index: {}]
  %s7 = inlined_call_operand.hbm [shape: f32[8,8,128], index: 7, kind: output, shape index: {0}]
  %s8 = inlined_call_operand.hbm [shape: f32[8,128], index: 8, kind: output, shape index: {1}]
  %s9 = inlined_call_operand.hbm [shape: f32[8,128], index: 9, kind: output, shape index: {2}]
  %10 = xla_tuple %s7, %s8, %s9
  %s11 = sld [smem:[#allocation0]]
  $region70: #{tpu_custom_call.1} parent=0
    _
  %s13 = ssub.s32 1, %s11
  %s14 = scalar_select 0, %s13, %s11
  $region1: #{tpu_custom_call.1} parent=0
    #allocation3 [shape = 'u8[131072]{0}', space=vmem, size = 0x20000, scoped, tag = 'input window, operand 0, single buffered']
    #allocation4 [shape = 's32[1]{0}', space=sflag, size = 0x4, scoped, tag = 'scoped memory for tpu_custom_call.1']
    #allocation5 [shape = 's32[1]{0}', space=sflag, size = 0x4, scoped, tag = 'scoped memory for tpu_custom_call.1']
    #allocation6 [shape = 'u8[262144]{0}', space=vmem, size = 0x40000, scoped, tag = 'input window, operand 4, single buffered']
    #allocation7 [shape = 's32[1]{0}', space=sflag, size = 0x4, scoped, tag = 'scoped memory for tpu_custom_call.1']
    #allocation8 [shape = 'u8[65536]{0}', space=vmem, size = 0x10000, scoped, tag = 'input window, operand 5, single buffered']
    #allocation9 [shape = 'u8[32768]{0}', space=vmem, size = 0x8000, scoped, tag = 'output window, operand 0, single buffered']
    #allocation10 [shape = 'u8[4096]{0}', space=vmem, size = 0x1000, scoped, tag = 'output window, operand 1, single buffered']
    #allocation11 [shape = 's32[1]{0}', space=sflag, size = 0x4, scoped, tag = 'scoped memory for tpu_custom_call.1']
    #allocation12 [shape = 'u8[4096]{0}', space=vmem, size = 0x1000, scoped, tag = 'output window, operand 2, single buffered']
    %15 = vsyncpa [#allocation4], 0
    %16 = vsyncpa [#allocation7], 0
    %17 = vsyncpa [#allocation5], 0
    %18 = vsyncpa [#allocation11], 0
    // Predicated region
    $region2: #{tpu_custom_call.1} parent=1 // pred_check
      _
    $region3: #{tpu_custom_call.1} parent=1 // pred_check_branch
      %20 = sbr.rel (0) target = $region5
    $region4: #{tpu_custom_call.1} parent=1 // pred_region
      %s22 = ssub.s32 4096, 4096
      %23 = vsyncadd [#allocation4], %s22
      %s24 = sshll.u32 [#allocation3], 4
      %s25 = int_to_ptr.vmem [resolvable:$true] %s24
      %30 = dma.hbm_to_vmem [thread:$0]  %s0, 4096, %s25, [#allocation4], 512, 512, 32
    $region5: #{tpu_custom_call.1} parent=1 // pred_fallthru
      _
    // Predicated region
    $region6: #{tpu_custom_call.1} parent=1 // pred_check
      _
    $region7: #{tpu_custom_call.1} parent=1 // pred_check_branch
      %32 = sbr.rel (0) target = $region9
    $region8: #{tpu_custom_call.1} parent=1 // pred_region
      _
    $region9: #{tpu_custom_call.1} parent=1 // pred_fallthru
      _
    // Predicated region
    $region10: #{tpu_custom_call.1} parent=1 // pred_check
      _
    $region11: #{tpu_custom_call.1} parent=1 // pred_check_branch
      %34 = sbr.rel (0) target = $region13
    $region12: #{tpu_custom_call.1} parent=1 // pred_region
      _
    $region13: #{tpu_custom_call.1} parent=1 // pred_fallthru
      _
    // Predicated region
    $region14: #{tpu_custom_call.1} parent=1 // pred_check
      _
    $region15: #{tpu_custom_call.1} parent=1 // pred_check_branch
      %36 = sbr.rel (0) target = $region17
    $region16: #{tpu_custom_call.1} parent=1 // pred_region
      _
    $region17: #{tpu_custom_call.1} parent=1 // pred_fallthru
      _
    // Predicated region
    $region18: #{tpu_custom_call.1} parent=1 // pred_check
      _
    $region19: #{tpu_custom_call.1} parent=1 // pred_check_branch
      %38 = sbr.rel (0) target = $region21
    $region20: #{tpu_custom_call.1} parent=1 // pred_region
      %s40 = ssub.s32 8192, 8192
      %41 = vsyncadd [#allocation7], %s40
      %s42 = sshll.u32 [#allocation6], 4
      %s43 = int_to_ptr.vmem [resolvable:$true] %s42
      %48 = dma.hbm_to_vmem [thread:$0]  %s4, 8192, %s43, [#allocation7], 512, 512, 32
    $region21: #{tpu_custom_call.1} parent=1 // pred_fallthru
      _
    // Predicated region
    $region22: #{tpu_custom_call.1} parent=1 // pred_check
      _
    $region23: #{tpu_custom_call.1} parent=1 // pred_check_branch
      %50 = sbr.rel (0) target = $region25
    $region24: #{tpu_custom_call.1} parent=1 // pred_region
      %s52 = ssub.s32 2048, 2048
      %53 = vsyncadd [#allocation7], %s52
      %s54 = sshll.u32 [#allocation8], 4
      %s55 = int_to_ptr.vmem [resolvable:$true] %s54
      %60 = dma.hbm_to_vmem [thread:$0]  %s5, 2048, %s55, [#allocation7], 128, 128, 8
    $region25: #{tpu_custom_call.1} parent=1 // pred_fallthru
      _
    // Predicated region
    $region26: #{tpu_custom_call.1} parent=1 // pred_check
      _
    $region27: #{tpu_custom_call.1} parent=1 // pred_check_branch
      %62 = sbr.rel (0) target = $region29
    $region28: #{tpu_custom_call.1} parent=1 // pred_region
      _
    $region29: #{tpu_custom_call.1} parent=1 // pred_fallthru
      _
    // Predicated region
    $region30: #{tpu_custom_call.1} parent=1 // pred_check
      _
    $region31: #{tpu_custom_call.1} parent=1 // pred_check_branch
      %64 = sbr.rel (0) target = $region33
    $region32: #{tpu_custom_call.1} parent=1 // pred_region
      %65 = dma.done [#allocation4], 4096
    $region33: #{tpu_custom_call.1} parent=1 // pred_fallthru
      _
    // Predicated region
    $region34: #{tpu_custom_call.1} parent=1 // pred_check
      _
    $region35: #{tpu_custom_call.1} parent=1 // pred_check_branch
      %67 = sbr.rel (0) target = $region37
    $region36: #{tpu_custom_call.1} parent=1 // pred_region
      %68 = dma.done [#allocation7], 8192
    $region37: #{tpu_custom_call.1} parent=1 // pred_fallthru
      _
    // Predicated region
    $region38: #{tpu_custom_call.1} parent=1 // pred_check
      _
    $region39: #{tpu_custom_call.1} parent=1 // pred_check_branch
      %70 = sbr.rel (0) target = $region41
    $region40: #{tpu_custom_call.1} parent=1 // pred_region
      %71 = dma.done [#allocation7], 2048
    $region41: #{tpu_custom_call.1} parent=1 // pred_fallthru
      _
    %p72 = scmp.eq.s32.totalorder 0, 0
    // Predicated region
    $region42: #{tpu_custom_call.1} parent=1 // pred_check
      %p73 = pneg %p72
    $region43: #{tpu_custom_call.1} parent=1 // pred_check_branch
      %75 = sbr.rel (%p73) target = $region45
    $region44: #{tpu_custom_call.1} parent=1 // pred_region
      %v76 = vld [vmem:[%s2] sm:$0xff]
      %77 = vst [vmem:[#allocation10] sm:$0xff] %v76
      %v78 = vld [vmem:[%s3] sm:$0xff]
      %79 = vst [vmem:[#allocation12] sm:$0xff] %v78
    $region45: #{tpu_custom_call.1} parent=1 // pred_fallthru
      _
    %v80 = vld [vmem:[%s1] sm:$0xff]
    %v81 = vld [vmem:[%s1 + $0x8] sm:$0xff]
    %v82 = vld [vmem:[%s1 + $0x10] sm:$0xff]
    %v83 = vld [vmem:[%s1 + $0x18] sm:$0xff]
    %v84 = vld [vmem:[%s1 + $0x20] sm:$0xff]
    %v85 = vld [vmem:[%s1 + $0x28] sm:$0xff]
    %v86 = vld [vmem:[%s1 + $0x30] sm:$0xff]
    %v87 = vld [vmem:[%s1 + $0x38] sm:$0xff]
    %89 = vset.pattern.permute.xlu0 0
    %90 = vperm.xlu0 %89, %v80
    %v91 = vpop.permute.xlu0 %90
    %94 = vset.pattern.permute.xlu0 0
    %95 = vperm.xlu0 %94, %v81
    %v96 = vpop.permute.xlu0 %95
    %99 = vset.pattern.permute.xlu0 0
    %100 = vperm.xlu0 %99, %v82
    %v101 = vpop.permute.xlu0 %100
    %104 = vset.pattern.permute.xlu0 0
    %105 = vperm.xlu0 %104, %v83
    %v106 = vpop.permute.xlu0 %105
    %109 = vset.pattern.permute.xlu0 0
    %110 = vperm.xlu0 %109, %v84
    %v111 = vpop.permute.xlu0 %110
    %114 = vset.pattern.permute.xlu0 0
    %115 = vperm.xlu0 %114, %v85
    %v116 = vpop.permute.xlu0 %115
    %119 = vset.pattern.permute.xlu0 0
    %120 = vperm.xlu0 %119, %v86
    %v121 = vpop.permute.xlu0 %120
    %124 = vset.pattern.permute.xlu0 0
    %125 = vperm.xlu0 %124, %v87
    %v126 = vpop.permute.xlu0 %125
    %v128 = vsub.f32 %v91, 1.0
    %v129 = vsub.f32 %v96, 1.0
    %v130 = vsub.f32 %v101, 1.0
    %v131 = vsub.f32 %v106, 1.0
    %v132 = vsub.f32 %v111, 1.0
    %v133 = vsub.f32 %v116, 1.0
    %v134 = vsub.f32 %v121, 1.0
    %v135 = vsub.f32 %v126, 1.0
    %136 = vst [vmem:[#allocation2] sm:$0xff] %v128
    %137 = vst [vmem:[#allocation2 + $0x8] sm:$0xff] %v129
    %138 = vst [vmem:[#allocation2 + $0x10] sm:$0xff] %v130
    %139 = vst [vmem:[#allocation2 + $0x18] sm:$0xff] %v131
    %140 = vst [vmem:[#allocation2 + $0x20] sm:$0xff] %v132
    %141 = vst [vmem:[#allocation2 + $0x28] sm:$0xff] %v133
    %142 = vst [vmem:[#allocation2 + $0x30] sm:$0xff] %v134
    %143 = vst [vmem:[#allocation2 + $0x38] sm:$0xff] %v135
    %v144 = vld [vmem:[%s6] sm:$0x1]
    %v145 = vld [vmem:[#allocation6] sm:$0xff]
    %v146 = vld [vmem:[#allocation6 + $0x8] sm:$0xff]
    %v147 = vld [vmem:[#allocation6 + $0x10] sm:$0xff]
    %v148 = vld [vmem:[#allocation6 + $0x18] sm:$0xff]
    %v149 = vld [vmem:[#allocation6 + $0x20] sm:$0xff]
    %v150 = vld [vmem:[#allocation6 + $0x28] sm:$0xff]
    %v151 = vld [vmem:[#allocation6 + $0x30] sm:$0xff]
    %v152 = vld [vmem:[#allocation6 + $0x38] sm:$0xff]
    %v153 = vld [vmem:[#allocation6 + $0x40] sm:$0xff]
    %v154 = vld [vmem:[#allocation6 + $0x48] sm:$0xff]
    %v155 = vld [vmem:[#allocation6 + $0x50] sm:$0xff]
    %v156 = vld [vmem:[#allocation6 + $0x58] sm:$0xff]
    %v157 = vld [vmem:[#allocation6 + $0x60] sm:$0xff]
    %v158 = vld [vmem:[#allocation6 + $0x68] sm:$0xff]
    %v159 = vld [vmem:[#allocation6 + $0x70] sm:$0xff]
    %v160 = vld [vmem:[#allocation6 + $0x78] sm:$0xff]
    %v161 = vld [vmem:[#allocation6 + $0x80] sm:$0xff]
    %v162 = vld [vmem:[#allocation6 + $0x88] sm:$0xff]
    %v163 = vld [vmem:[#allocation6 + $0x90] sm:$0xff]
    %v164 = vld [vmem:[#allocation6 + $0x98] sm:$0xff]
    %v165 = vld [vmem:[#allocation6 + $0xa0] sm:$0xff]
    %v166 = vld [vmem:[#allocation6 + $0xa8] sm:$0xff]
    %v167 = vld [vmem:[#allocation6 + $0xb0] sm:$0xff]
    %v168 = vld [vmem:[#allocation6 + $0xb8] sm:$0xff]
    %v169 = vld [vmem:[#allocation6 + $0xc0] sm:$0xff]
    %v170 = vld [vmem:[#allocation6 + $0xc8] sm:$0xff]
    %v171 = vld [vmem:[#allocation6 + $0xd0] sm:$0xff]
    %v172 = vld [vmem:[#allocation6 + $0xd8] sm:$0xff]
    %v173 = vld [vmem:[#allocation6 + $0xe0] sm:$0xff]
    %v174 = vld [vmem:[#allocation6 + $0xe8] sm:$0xff]
    %v175 = vld [vmem:[#allocation6 + $0xf0] sm:$0xff]
    %v176 = vld [vmem:[#allocation6 + $0xf8] sm:$0xff]
    %v177 = vld [vmem:[#allocation6 + $0x100] sm:$0xff]
    %v178 = vld [vmem:[#allocation6 + $0x108] sm:$0xff]
    %v179 = vld [vmem:[#allocation6 + $0x110] sm:$0xff]
    %v180 = vld [vmem:[#allocation6 + $0x118] sm:$0xff]
    %v181 = vld [vmem:[#allocation6 + $0x120] sm:$0xff]
    %v182 = vld [vmem:[#allocation6 + $0x128] sm:$0xff]
    %v183 = vld [vmem:[#allocation6 + $0x130] sm:$0xff]
    %v184 = vld [vmem:[#allocation6 + $0x138] sm:$0xff]
    %v185 = vld [vmem:[#allocation6 + $0x140] sm:$0xff]
    %v186 = vld [vmem:[#allocation6 + $0x148] sm:$0xff]
    %v187 = vld [vmem:[#allocation6 + $0x150] sm:$0xff]
    %v188 = vld [vmem:[#allocation6 + $0x158] sm:$0xff]
    %v189 = vld [vmem:[#allocation6 + $0x160] sm:$0xff]
    %v190 = vld [vmem:[#allocation6 + $0x168] sm:$0xff]
    %v191 = vld [vmem:[#allocation6 + $0x170] sm:$0xff]
    %v192 = vld [vmem:[#allocation6 + $0x178] sm:$0xff]
    %v193 = vld [vmem:[#allocation6 + $0x180] sm:$0xff]
    %v194 = vld [vmem:[#allocation6 + $0x188] sm:$0xff]
    %v195 = vld [vmem:[#allocation6 + $0x190] sm:$0xff]
    %v196 = vld [vmem:[#allocation6 + $0x198] sm:$0xff]
    %v197 = vld [vmem:[#allocation6 + $0x1a0] sm:$0xff]
    %v198 = vld [vmem:[#allocation6 + $0x1a8] sm:$0xff]
    %v199 = vld [vmem:[#allocation6 + $0x1b0] sm:$0xff]
    %v200 = vld [vmem:[#allocation6 + $0x1b8] sm:$0xff]
    %v201 = vld [vmem:[#allocation6 + $0x1c0] sm:$0xff]
    %v202 = vld [vmem:[#allocation6 + $0x1c8] sm:$0xff]
    %v203 = vld [vmem:[#allocation6 + $0x1d0] sm:$0xff]
    %v204 = vld [vmem:[#allocation6 + $0x1d8] sm:$0xff]
    %v205 = vld [vmem:[#allocation6 + $0x1e0] sm:$0xff]
    %v206 = vld [vmem:[#allocation6 + $0x1e8] sm:$0xff]
    %v207 = vld [vmem:[#allocation6 + $0x1f0] sm:$0xff]
    %v208 = vld [vmem:[#allocation6 + $0x1f8] sm:$0xff]
    %v209 = vld [vmem:[#allocation8] sm:$0xff]
    %v210 = vld [vmem:[#allocation8 + $0x8] sm:$0xff]
    %v211 = vld [vmem:[#allocation8 + $0x10] sm:$0xff]
    %v212 = vld [vmem:[#allocation8 + $0x18] sm:$0xff]
    %v213 = vld [vmem:[#allocation8 + $0x20] sm:$0xff]
    %v214 = vld [vmem:[#allocation8 + $0x28] sm:$0xff]
    %v215 = vld [vmem:[#allocation8 + $0x30] sm:$0xff]
    %v216 = vld [vmem:[#allocation8 + $0x38] sm:$0xff]
    %v217 = vld [vmem:[#allocation8 + $0x40] sm:$0xff]
    %v218 = vld [vmem:[#allocation8 + $0x48] sm:$0xff]
    %v219 = vld [vmem:[#allocation8 + $0x50] sm:$0xff]
    %v220 = vld [vmem:[#allocation8 + $0x58] sm:$0xff]
    %v221 = vld [vmem:[#allocation8 + $0x60] sm:$0xff]
    %v222 = vld [vmem:[#allocation8 + $0x68] sm:$0xff]
    %v223 = vld [vmem:[#allocation8 + $0x70] sm:$0xff]
    %v224 = vld [vmem:[#allocation8 + $0x78] sm:$0xff]
    %v225 = vld [vmem:[#allocation10] sm:$0xff]
    %v226 = vld [vmem:[#allocation12] sm:$0xff]
    %227 = vmatprep.subr.mxu0 %v146
    %228 = vmatpush1.msra.mxu0 %v145
    %229 = vmatprep.subr.mxu0 %v150
    %230 = vmatpush1.msra.mxu0 %v149
    %231 = vmatprep.subr.mxu0 %v154
    %232 = vmatpush1.msra.mxu0 %v153
    %233 = vmatprep.subr.mxu0 %v158
    %234 = vmatpush1.msra.mxu0 %v157
    %235 = vmatprep.subr.mxu0 %v162
    %236 = vmatpush1.msra.mxu0 %v161
    %237 = vmatprep.subr.mxu0 %v166
    %238 = vmatpush1.msra.mxu0 %v165
    %239 = vmatprep.subr.mxu0 %v170
    %240 = vmatpush1.msra.mxu0 %v169
    %241 = vmatprep.subr.mxu0 %v174
    %242 = vmatpush1.msra.mxu0 %v173
    %243 = vmatprep.subr.mxu0 %v178
    %244 = vmatpush1.msra.mxu0 %v177
    %245 = vmatprep.subr.mxu0 %v182
    %246 = vmatpush1.msra.mxu0 %v181
    %247 = vmatprep.subr.mxu0 %v186
    %248 = vmatpush1.msra.mxu0 %v185
    %249 = vmatprep.subr.mxu0 %v190
    %250 = vmatpush1.msra.mxu0 %v189
    %251 = vmatprep.subr.mxu0 %v194
    %252 = vmatpush1.msra.mxu0 %v193
    %253 = vmatprep.subr.mxu0 %v198
    %254 = vmatpush1.msra.mxu0 %v197
    %255 = vmatprep.subr.mxu0 %v202
    %256 = vmatpush1.msra.mxu0 %v201
    %257 = vmatprep.subr.mxu0 %v206
    %258 = vmatpush1.msra.mxu0 %v205
    %259 = vmatprep.subr.mxu0 0.0
    %260 = vmatpush1.msra.mxu0 0.0
    %261 = vmatprep.subr.mxu0 0.0
    %262 = vmatpush1.msra.mxu0 0.0
    %263 = vmatprep.subr.mxu0 0.0
    %264 = vmatpush1.msra.mxu0 0.0
    %265 = vmatprep.subr.mxu0 0.0
    %266 = vmatpush1.msra.mxu0 0.0
    %267 = vmatprep.subr.mxu0 0.0
    %268 = vmatpush1.msra.mxu0 0.0
    %269 = vmatprep.subr.mxu0 0.0
    %270 = vmatpush1.msra.mxu0 0.0
    %271 = vmatprep.subr.mxu0 0.0
    %272 = vmatpush1.msra.mxu0 0.0
    %273 = vmatprep.subr.mxu0 0.0
    %274 = vmatpush1.msra.mxu0 0.0
    %275 = vmatprep.subr.mxu0 0.0
    %276 = vmatpush1.msra.mxu0 0.0
    %277 = vmatprep.subr.mxu0 0.0
    %278 = vmatpush1.msra.mxu0 0.0
    %279 = vmatprep.subr.mxu0 0.0
    %280 = vmatpush1.msra.mxu0 0.0
    %281 = vmatprep.subr.mxu0 0.0
    %282 = vmatpush1.msra.mxu0 0.0
    %283 = vmatprep.subr.mxu0 0.0
    %284 = vmatpush1.msra.mxu0 0.0
    %285 = vmatprep.subr.mxu0 0.0
    %286 = vmatpush1.msra.mxu0 0.0
    %287 = vmatprep.subr.mxu0 0.0
    %288 = vmatpush1.msra.mxu0 0.0
    %289 = vmatprep.subr.mxu0 0.0
    %290 = vmatpush1.msra.mxu0 0.0
    %291 = vmatprep.mubr.f32.mxu0 0.0
    %292 = vmatmul.mubr.f32.gmra.mrb[0].mxu0 %v225
    %v293 = vpop.f32.mrb[0].mxu0
    %v294 = vadd.f32 0.0, %v293
    %v295 = vpop.f32.mrb[0].mxu0
    %v296 = vadd.f32 0.0, %v295
    %297 = vdwg.mxu0
    %298 = vmatprep.subr.mxu0 %v148
    %299 = vmatpush1.msra.mxu0 %v147
    %300 = vmatprep.subr.mxu0 %v152
    %301 = vmatpush1.msra.mxu0 %v151
    %302 = vmatprep.subr.mxu0 %v156
    %303 = vmatpush1.msra.mxu0 %v155
    %304 = vmatprep.subr.mxu0 %v160
    %305 = vmatpush1.msra.mxu0 %v159
    %306 = vmatprep.subr.mxu0 %v164
    %307 = vmatpush1.msra.mxu0 %v163
    %308 = vmatprep.subr.mxu0 %v168
    %309 = vmatpush1.msra.mxu0 %v167
    %310 = vmatprep.subr.mxu0 %v172
    %311 = vmatpush1.msra.mxu0 %v171
    %312 = vmatprep.subr.mxu0 %v176
    %313 = vmatpush1.msra.mxu0 %v175
    %314 = vmatprep.subr.mxu0 %v180
    %315 = vmatpush1.msra.mxu0 %v179
    %316 = vmatprep.subr.mxu0 %v184
    %317 = vmatpush1.msra.mxu0 %v183
    %318 = vmatprep.subr.mxu0 %v188
    %319 = vmatpush1.msra.mxu0 %v187
    %320 = vmatprep.subr.mxu0 %v192
    %321 = vmatpush1.msra.mxu0 %v191
    %322 = vmatprep.subr.mxu0 %v196
    %323 = vmatpush1.msra.mxu0 %v195
    %324 = vmatprep.subr.mxu0 %v200
    %325 = vmatpush1.msra.mxu0 %v199
    %326 = vmatprep.subr.mxu0 %v204
    %327 = vmatpush1.msra.mxu0 %v203
    %328 = vmatprep.subr.mxu0 %v208
    %329 = vmatpush1.msra.mxu0 %v207
    %330 = vmatprep.subr.mxu0 0.0
    %331 = vmatpush1.msra.mxu0 0.0
    %332 = vmatprep.subr.mxu0 0.0
    %333 = vmatpush1.msra.mxu0 0.0
    %334 = vmatprep.subr.mxu0 0.0
    %335 = vmatpush1.msra.mxu0 0.0
    %336 = vmatprep.subr.mxu0 0.0
    %337 = vmatpush1.msra.mxu0 0.0
    %338 = vmatprep.subr.mxu0 0.0
    %339 = vmatpush1.msra.mxu0 0.0
    %340 = vmatprep.subr.mxu0 0.0
    %341 = vmatpush1.msra.mxu0 0.0
    %342 = vmatprep.subr.mxu0 0.0
    %343 = vmatpush1.msra.mxu0 0.0
    %344 = vmatprep.subr.mxu0 0.0
    %345 = vmatpush1.msra.mxu0 0.0
    %346 = vmatprep.subr.mxu0 0.0
    %347 = vmatpush1.msra.mxu0 0.0
    %348 = vmatprep.subr.mxu0 0.0
    %349 = vmatpush1.msra.mxu0 0.0
    %350 = vmatprep.subr.mxu0 0.0
    %351 = vmatpush1.msra.mxu0 0.0
    %352 = vmatprep.subr.mxu0 0.0
    %353 = vmatpush1.msra.mxu0 0.0
    %354 = vmatprep.subr.mxu0 0.0
    %355 = vmatpush1.msra.mxu0 0.0
    %356 = vmatprep.subr.mxu0 0.0
    %357 = vmatpush1.msra.mxu0 0.0
    %358 = vmatprep.subr.mxu0 0.0
    %359 = vmatpush1.msra.mxu0 0.0
    %360 = vmatprep.subr.mxu0 0.0
    %361 = vmatpush1.msra.mxu0 0.0
    %362 = vmatprep.mubr.f32.mxu0 0.0
    %363 = vmatmul.mubr.f32.gmra.mrb[0].mxu0 %v225
    %v364 = vpop.f32.mrb[0].mxu0
    %v365 = vadd.f32 0.0, %v364
    %v366 = vpop.f32.mrb[0].mxu0
    %v367 = vadd.f32 0.0, %v366
    %368 = vdwg.mxu0
    %v370 = vlaneseq
    %v371 = vshrl.u32 %v370, 7
    %v372 = vsub.s32 0, %v371
    %v373 = vrot.slane %v144, %v372
    %375 = vmatprep.subr.mxu0 0.0
    %376 = vmatpush1.msra.mxu0 %v209
    %377 = vmatprep.subr.mxu0 0.0
    %378 = vmatpush1.msra.mxu0 %v210
    %379 = vmatprep.subr.mxu0 0.0
    %380 = vmatpush1.msra.mxu0 %v211
    %381 = vmatprep.subr.mxu0 0.0
    %382 = vmatpush1.msra.mxu0 %v212
    %383 = vmatprep.subr.mxu0 0.0
    %384 = vmatpush1.msra.mxu0 %v213
    %385 = vmatprep.subr.mxu0 0.0
    %386 = vmatpush1.msra.mxu0 %v214
    %387 = vmatprep.subr.mxu0 0.0
    %388 = vmatpush1.msra.mxu0 %v215
    %389 = vmatprep.subr.mxu0 0.0
    %390 = vmatpush1.msra.mxu0 %v216
    %391 = vmatprep.subr.mxu0 0.0
    %392 = vmatpush1.msra.mxu0 %v217
    %393 = vmatprep.subr.mxu0 0.0
    %394 = vmatpush1.msra.mxu0 %v218
    %395 = vmatprep.subr.mxu0 0.0
    %396 = vmatpush1.msra.mxu0 %v219
    %397 = vmatprep.subr.mxu0 0.0
    %398 = vmatpush1.msra.mxu0 %v220
    %399 = vmatprep.subr.mxu0 0.0
    %400 = vmatpush1.msra.mxu0 %v221
    %401 = vmatprep.subr.mxu0 0.0
    %402 = vmatpush1.msra.mxu0 %v222
    %403 = vmatprep.subr.mxu0 0.0
    %404 = vmatpush1.msra.mxu0 %v223
    %405 = vmatprep.subr.mxu0 0.0
    %406 = vmatpush1.msra.mxu0 %v224
    %407 = vmatprep.subr.mxu0 0.0
    %408 = vmatpush1.msra.mxu0 0.0
    %409 = vmatprep.subr.mxu0 0.0
    %410 = vmatpush1.msra.mxu0 0.0
    %411 = vmatprep.subr.mxu0 0.0
    %412 = vmatpush1.msra.mxu0 0.0
    %413 = vmatprep.subr.mxu0 0.0
    %414 = vmatpush1.msra.mxu0 0.0
    %415 = vmatprep.subr.mxu0 0.0
    %416 = vmatpush1.msra.mxu0 0.0
    %417 = vmatprep.subr.mxu0 0.0
    %418 = vmatpush1.msra.mxu0 0.0
    %419 = vmatprep.subr.mxu0 0.0
    %420 = vmatpush1.msra.mxu0 0.0
    %421 = vmatprep.subr.mxu0 0.0
    %422 = vmatpush1.msra.mxu0 0.0
    %423 = vmatprep.subr.mxu0 0.0
    %424 = vmatpush1.msra.mxu0 0.0
    %425 = vmatprep.subr.mxu0 0.0
    %426 = vmatpush1.msra.mxu0 0.0
    %427 = vmatprep.subr.mxu0 0.0
    %428 = vmatpush1.msra.mxu0 0.0
    %429 = vmatprep.subr.mxu0 0.0
    %430 = vmatpush1.msra.mxu0 0.0
    %431 = vmatprep.subr.mxu0 0.0
    %432 = vmatpush1.msra.mxu0 0.0
    %433 = vmatprep.subr.mxu0 0.0
    %434 = vmatpush1.msra.mxu0 0.0
    %435 = vmatprep.subr.mxu0 0.0
    %436 = vmatpush1.msra.mxu0 0.0
    %437 = vmatprep.subr.mxu0 0.0
    %438 = vmatpush1.msra.mxu0 0.0
    %439 = vmatprep.mubr.f32.mxu0 0.0
    %440 = vmatmul.mubr.f32.gmra.mrb[0].mxu0 %v226
    %v441 = vpop.f32.mrb[0].mxu0
    %v442 = vadd.f32 %v373, %v441
    %v443 = vpop.f32.mrb[0].mxu0
    %444 = vdwg.mxu0
    %v445 = vtanh.pop %v442
    %v446 = vld [vmem:[#allocation2] sm:$0xff]
    %v447 = vmul.f32 %v446, %v445
    %v448 = vadd.f32 %v226, %v447
    %v449 = vld [vmem:[#allocation3] sm:$0xff]
    %v450 = vld [vmem:[#allocation3 + $0x8] sm:$0xff]
    %v451 = vld [vmem:[#allocation3 + $0x10] sm:$0xff]
    %v452 = vld [vmem:[#allocation3 + $0x18] sm:$0xff]
    %v453 = vadd.f32 %v449, %v294
    %v454 = vadd.f32 %v450, %v296
    %v455 = vadd.f32 %v451, %v365
    %v456 = vadd.f32 %v452, %v367
    %v457 = vxor.u32 %v453, 2147483648
    %v458 = vmul.f32 %v457, 1.442695
    %v459 = vpow.pop %v458
    %v460 = vadd.f32 %v459, 1.0
    %v461 = vrcp.pop %v460
    %v462 = vmul.f32 1.0, %v461
    %v463 = vxor.u32 %v454, 2147483648
    %v464 = vmul.f32 %v463, 1.442695
    %v465 = vpow.pop %v464
    %v466 = vadd.f32 %v465, 1.0
    %v467 = vrcp.pop %v466
    %v468 = vmul.f32 1.0, %v467
    %v469 = vxor.u32 %v455, 2147483648
    %v470 = vmul.f32 %v469, 1.442695
    %v471 = vpow.pop %v470
    %v472 = vadd.f32 %v471, 1.0
    %v473 = vrcp.pop %v472
    %v474 = vmul.f32 1.0, %v473
    %v475 = vtanh.pop %v456
    %v476 = vmul.f32 %v468, %v448
    %v477 = vmul.f32 %v462, %v475
    %v478 = vadd.f32 %v476, %v477
    %v479 = vtanh.pop %v478
    %v480 = vmul.f32 %v474, %v479
    %481 = vst [vmem:[#allocation9] sm:$0xff] %v480
    %482 = vmatprep.subr.mxu0 %v146
    %483 = vmatpush1.msra.mxu0 %v145
    %484 = vmatprep.subr.mxu0 %v150
    %485 = vmatpush1.msra.mxu0 %v149
    %486 = vmatprep.subr.mxu0 %v154
    %487 = vmatpush1.msra.mxu0 %v153
    %488 = vmatprep.subr.mxu0 %v158
    %489 = vmatpush1.msra.mxu0 %v157
    %490 = vmatprep.subr.mxu0 %v162
    %491 = vmatpush1.msra.mxu0 %v161
    %492 = vmatprep.subr.mxu0 %v166
    %493 = vmatpush1.msra.mxu0 %v165
    %494 = vmatprep.subr.mxu0 %v170
    %495 = vmatpush1.msra.mxu0 %v169
    %496 = vmatprep.subr.mxu0 %v174
    %497 = vmatpush1.msra.mxu0 %v173
    %498 = vmatprep.subr.mxu0 %v178
    %499 = vmatpush1.msra.mxu0 %v177
    %500 = vmatprep.subr.mxu0 %v182
    %501 = vmatpush1.msra.mxu0 %v181
    %502 = vmatprep.subr.mxu0 %v186
    %503 = vmatpush1.msra.mxu0 %v185
    %504 = vmatprep.subr.mxu0 %v190
    %505 = vmatpush1.msra.mxu0 %v189
    %506 = vmatprep.subr.mxu0 %v194
    %507 = vmatpush1.msra.mxu0 %v193
    %508 = vmatprep.subr.mxu0 %v198
    %509 = vmatpush1.msra.mxu0 %v197
    %510 = vmatprep.subr.mxu0 %v202
    %511 = vmatpush1.msra.mxu0 %v201
    %512 = vmatprep.subr.mxu0 %v206
    %513 = vmatpush1.msra.mxu0 %v205
    %514 = vmatprep.subr.mxu0 0.0
    %515 = vmatpush1.msra.mxu0 0.0
    %516 = vmatprep.subr.mxu0 0.0
    %517 = vmatpush1.msra.mxu0 0.0
    %518 = vmatprep.subr.mxu0 0.0
    %519 = vmatpush1.msra.mxu0 0.0
    %520 = vmatprep.subr.mxu0 0.0
    %521 = vmatpush1.msra.mxu0 0.0
    %522 = vmatprep.subr.mxu0 0.0
    %523 = vmatpush1.msra.mxu0 0.0
    %524 = vmatprep.subr.mxu0 0.0
    %525 = vmatpush1.msra.mxu0 0.0
    %526 = vmatprep.subr.mxu0 0.0
    %527 = vmatpush1.msra.mxu0 0.0
    %528 = vmatprep.subr.mxu0 0.0
    %529 = vmatpush1.msra.mxu0 0.0
    %530 = vmatprep.subr.mxu0 0.0
    %531 = vmatpush1.msra.mxu0 0.0
    %532 = vmatprep.subr.mxu0 0.0
    %533 = vmatpush1.msra.mxu0 0.0
    %534 = vmatprep.subr.mxu0 0.0
    %535 = vmatpush1.msra.mxu0 0.0
    %536 = vmatprep.subr.mxu0 0.0
    %537 = vmatpush1.msra.mxu0 0.0
    %538 = vmatprep.subr.mxu0 0.0
    %539 = vmatpush1.msra.mxu0 0.0
    %540 = vmatprep.subr.mxu0 0.0
    %541 = vmatpush1.msra.mxu0 0.0
    %542 = vmatprep.subr.mxu0 0.0
    %543 = vmatpush1.msra.mxu0 0.0
    %544 = vmatprep.subr.mxu0 0.0
    %545 = vmatpush1.msra.mxu0 0.0
    %546 = vmatprep.mubr.f32.mxu0 0.0
    %547 = vmatmul.mubr.f32.gmra.mrb[0].mxu0 %v480
    %v548 = vpop.f32.mrb[0].mxu0
    %v549 = vadd.f32 0.0, %v548
    %v550 = vpop.f32.mrb[0].mxu0
    %v551 = vadd.f32 0.0, %v550
    %552 = vdwg.mxu0
    %553 = vmatprep.subr.mxu0 %v148
    %554 = vmatpush1.msra.mxu0 %v147
    %555 = vmatprep.subr.mxu0 %v152
    %556 = vmatpush1.msra.mxu0 %v151
    %557 = vmatprep.subr.mxu0 %v156
    %558 = vmatpush1.msra.mxu0 %v155
    %559 = vmatprep.subr.mxu0 %v160
    %560 = vmatpush1.msra.mxu0 %v159
    %561 = vmatprep.subr.mxu0 %v164
    %562 = vmatpush1.msra.mxu0 %v163
    %563 = vmatprep.subr.mxu0 %v168
    %564 = vmatpush1.msra.mxu0 %v167
    %565 = vmatprep.subr.mxu0 %v172
    %566 = vmatpush1.msra.mxu0 %v171
    %567 = vmatprep.subr.mxu0 %v176
    %568 = vmatpush1.msra.mxu0 %v175
    %569 = vmatprep.subr.mxu0 %v180
    %570 = vmatpush1.msra.mxu0 %v179
    %571 = vmatprep.subr.mxu0 %v184
    %572 = vmatpush1.msra.mxu0 %v183
    %573 = vmatprep.subr.mxu0 %v188
    %574 = vmatpush1.msra.mxu0 %v187
    %575 = vmatprep.subr.mxu0 %v192
    %576 = vmatpush1.msra.mxu0 %v191
    %577 = vmatprep.subr.mxu0 %v196
    %578 = vmatpush1.msra.mxu0 %v195
    %579 = vmatprep.subr.mxu0 %v200
    %580 = vmatpush1.msra.mxu0 %v199
    %581 = vmatprep.subr.mxu0 %v204
    %582 = vmatpush1.msra.mxu0 %v203
    %583 = vmatprep.subr.mxu0 %v208
    %584 = vmatpush1.msra.mxu0 %v207
    %585 = vmatprep.subr.mxu0 0.0
    %586 = vmatpush1.msra.mxu0 0.0
    %587 = vmatprep.subr.mxu0 0.0
    %588 = vmatpush1.msra.mxu0 0.0
    %589 = vmatprep.subr.mxu0 0.0
    %590 = vmatpush1.msra.mxu0 0.0
    %591 = vmatprep.subr.mxu0 0.0
    %592 = vmatpush1.msra.mxu0 0.0
    %593 = vmatprep.subr.mxu0 0.0
    %594 = vmatpush1.msra.mxu0 0.0
    %595 = vmatprep.subr.mxu0 0.0
    %596 = vmatpush1.msra.mxu0 0.0
    %597 = vmatprep.subr.mxu0 0.0
    %598 = vmatpush1.msra.mxu0 0.0
    %599 = vmatprep.subr.mxu0 0.0
    %600 = vmatpush1.msra.mxu0 0.0
    %601 = vmatprep.subr.mxu0 0.0
    %602 = vmatpush1.msra.mxu0 0.0
    %603 = vmatprep.subr.mxu0 0.0
    %604 = vmatpush1.msra.mxu0 0.0
    %605 = vmatprep.subr.mxu0 0.0
    %606 = vmatpush1.msra.mxu0 0.0
    %607 = vmatprep.subr.mxu0 0.0
    %608 = vmatpush1.msra.mxu0 0.0
    %609 = vmatprep.subr.mxu0 0.0
    %610 = vmatpush1.msra.mxu0 0.0
    %611 = vmatprep.subr.mxu0 0.0
    %612 = vmatpush1.msra.mxu0 0.0
    %613 = vmatprep.subr.mxu0 0.0
    %614 = vmatpush1.msra.mxu0 0.0
    %615 = vmatprep.subr.mxu0 0.0
    %616 = vmatpush1.msra.mxu0 0.0
    %617 = vmatprep.mubr.f32.mxu0 0.0
    %618 = vmatmul.mubr.f32.gmra.mrb[0].mxu0 %v480
    %v619 = vpop.f32.mrb[0].mxu0
    %v620 = vadd.f32 0.0, %v619
    %v621 = vpop.f32.mrb[0].mxu0
    %v622 = vadd.f32 0.0, %v621
    %623 = vdwg.mxu0
    %624 = vmatprep.subr.mxu0 0.0
    %625 = vmatpush1.msra.mxu0 %v209
    %626 = vmatprep.subr.mxu0 0.0
    %627 = vmatpush1.msra.mxu0 %v210
    %628 = vmatprep.subr.mxu0 0.0
    %629 = vmatpush1.msra.mxu0 %v211
    %630 = vmatprep.subr.mxu0 0.0
    %631 = vmatpush1.msra.mxu0 %v212
    %632 = vmatprep.subr.mxu0 0.0
    %633 = vmatpush1.msra.mxu0 %v213
    %634 = vmatprep.subr.mxu0 0.0
    %635 = vmatpush1.msra.mxu0 %v214
    %636 = vmatprep.subr.mxu0 0.0
    %637 = vmatpush1.msra.mxu0 %v215
    %638 = vmatprep.subr.mxu0 0.0
    %639 = vmatpush1.msra.mxu0 %v216
    %640 = vmatprep.subr.mxu0 0.0
    %641 = vmatpush1.msra.mxu0 %v217
    %642 = vmatprep.subr.mxu0 0.0
    %643 = vmatpush1.msra.mxu0 %v218
    %644 = vmatprep.subr.mxu0 0.0
    %645 = vmatpush1.msra.mxu0 %v219
    %646 = vmatprep.subr.mxu0 0.0
    %647 = vmatpush1.msra.mxu0 %v220
    %648 = vmatprep.subr.mxu0 0.0
    %649 = vmatpush1.msra.mxu0 %v221
    %650 = vmatprep.subr.mxu0 0.0
    %651 = vmatpush1.msra.mxu0 %v222
    %652 = vmatprep.subr.mxu0 0.0
    %653 = vmatpush1.msra.mxu0 %v223
    %654 = vmatprep.subr.mxu0 0.0
    %655 = vmatpush1.msra.mxu0 %v224
    %656 = vmatprep.subr.mxu0 0.0
    %657 = vmatpush1.msra.mxu0 0.0
    %658 = vmatprep.subr.mxu0 0.0
    %659 = vmatpush1.msra.mxu0 0.0
    %660 = vmatprep.subr.mxu0 0.0
    %661 = vmatpush1.msra.mxu0 0.0
    %662 = vmatprep.subr.mxu0 0.0
    %663 = vmatpush1.msra.mxu0 0.0
    %664 = vmatprep.subr.mxu0 0.0
    %665 = vmatpush1.msra.mxu0 0.0
    %666 = vmatprep.subr.mxu0 0.0
    %667 = vmatpush1.msra.mxu0 0.0
    %668 = vmatprep.subr.mxu0 0.0
    %669 = vmatpush1.msra.mxu0 0.0
    %670 = vmatprep.subr.mxu0 0.0
    %671 = vmatpush1.msra.mxu0 0.0
    %672 = vmatprep.subr.mxu0 0.0
    %673 = vmatpush1.msra.mxu0 0.0
    %674 = vmatprep.subr.mxu0 0.0
    %675 = vmatpush1.msra.mxu0 0.0
    %676 = vmatprep.subr.mxu0 0.0
    %677 = vmatpush1.msra.mxu0 0.0
    %678 = vmatprep.subr.mxu0 0.0
    %679 = vmatpush1.msra.mxu0 0.0
    %680 = vmatprep.subr.mxu0 0.0
    %681 = vmatpush1.msra.mxu0 0.0
    %682 = vmatprep.subr.mxu0 0.0
    %683 = vmatpush1.msra.mxu0 0.0
    %684 = vmatprep.subr.mxu0 0.0
    %685 = vmatpush1.msra.mxu0 0.0
    %686 = vmatprep.subr.mxu0 0.0
    %687 = vmatpush1.msra.mxu0 0.0
    %688 = vmatprep.mubr.f32.mxu0 0.0
    %689 = vmatmul.mubr.f32.gmra.mrb[0].mxu0 %v478
    %v690 = vpop.f32.mrb[0].mxu0
    %v691 = vadd.f32 %v373, %v690
    %v692 = vpop.f32.mrb[0].mxu0
    %693 = vdwg.mxu0
    %v694 = vtanh.pop %v691
    %s695 = scalar_lea.vmem [#allocation2], 8
    %v696 = vld [vmem:[%s695] sm:$0xff]
    %v697 = vmul.f32 %v696, %v694
    %v698 = vadd.f32 %v478, %v697
    %s699 = scalar_lea.vmem [#allocation3], 32
    %v700 = vld [vmem:[%s699] sm:$0xff]
    %v701 = vld [vmem:[%s699 + $0x8] sm:$0xff]
    %v702 = vld [vmem:[%s699 + $0x10] sm:$0xff]
    %v703 = vld [vmem:[%s699 + $0x18] sm:$0xff]
    %v704 = vadd.f32 %v700, %v549
    %v705 = vadd.f32 %v701, %v551
    %v706 = vadd.f32 %v702, %v620
    %v707 = vadd.f32 %v703, %v622
    %v708 = vxor.u32 %v704, 2147483648
    %v709 = vmul.f32 %v708, 1.442695
    %v710 = vpow.pop %v709
    %v711 = vadd.f32 %v710, 1.0
    %v712 = vrcp.pop %v711
    %v713 = vmul.f32 1.0, %v712
    %v714 = vxor.u32 %v705, 2147483648
    %v715 = vmul.f32 %v714, 1.442695
    %v716 = vpow.pop %v715
    %v717 = vadd.f32 %v716, 1.0
    %v718 = vrcp.pop %v717
    %v719 = vmul.f32 1.0, %v718
    %v720 = vxor.u32 %v706, 2147483648
    %v721 = vmul.f32 %v720, 1.442695
    %v722 = vpow.pop %v721
    %v723 = vadd.f32 %v722, 1.0
    %v724 = vrcp.pop %v723
    %v725 = vmul.f32 1.0, %v724
    %v726 = vtanh.pop %v707
    %v727 = vmul.f32 %v719, %v698
    %v728 = vmul.f32 %v713, %v726
    %v729 = vadd.f32 %v727, %v728
    %v730 = vtanh.pop %v729
    %v731 = vmul.f32 %v725, %v730
    %s732 = scalar_lea.vmem [#allocation9], 8
    %733 = vst [vmem:[%s732] sm:$0xff] %v731
    %734 = vmatprep.subr.mxu0 %v146
    %735 = vmatpush1.msra.mxu0 %v145
    %736 = vmatprep.subr.mxu0 %v150
    %737 = vmatpush1.msra.mxu0 %v149
    %738 = vmatprep.subr.mxu0 %v154
    %739 = vmatpush1.msra.mxu0 %v153
    %740 = vmatprep.subr.mxu0 %v158
    %741 = vmatpush1.msra.mxu0 %v157
    %742 = vmatprep.subr.mxu0 %v162
    %743 = vmatpush1.msra.mxu0 %v161
    %744 = vmatprep.subr.mxu0 %v166
    %745 = vmatpush1.msra.mxu0 %v165
    %746 = vmatprep.subr.mxu0 %v170
    %747 = vmatpush1.msra.mxu0 %v169
    %748 = vmatprep.subr.mxu0 %v174
    %749 = vmatpush1.msra.mxu0 %v173
    %750 = vmatprep.subr.mxu0 %v178
    %751 = vmatpush1.msra.mxu0 %v177
    %752 = vmatprep.subr.mxu0 %v182
    %753 = vmatpush1.msra.mxu0 %v181
    %754 = vmatprep.subr.mxu0 %v186
    %755 = vmatpush1.msra.mxu0 %v185
    %756 = vmatprep.subr.mxu0 %v190
    %757 = vmatpush1.msra.mxu0 %v189
    %758 = vmatprep.subr.mxu0 %v194
    %759 = vmatpush1.msra.mxu0 %v193
    %760 = vmatprep.subr.mxu0 %v198
    %761 = vmatpush1.msra.mxu0 %v197
    %762 = vmatprep.subr.mxu0 %v202
    %763 = vmatpush1.msra.mxu0 %v201
    %764 = vmatprep.subr.mxu0 %v206
    %765 = vmatpush1.msra.mxu0 %v205
    %766 = vmatprep.subr.mxu0 0.0
    %767 = vmatpush1.msra.mxu0 0.0
    %768 = vmatprep.subr.mxu0 0.0
    %769 = vmatpush1.msra.mxu0 0.0
    %770 = vmatprep.subr.mxu0 0.0
    %771 = vmatpush1.msra.mxu0 0.0
    %772 = vmatprep.subr.mxu0 0.0
    %773 = vmatpush1.msra.mxu0 0.0
    %774 = vmatprep.subr.mxu0 0.0
    %775 = vmatpush1.msra.mxu0 0.0
    %776 = vmatprep.subr.mxu0 0.0
    %777 = vmatpush1.msra.mxu0 0.0
    %778 = vmatprep.subr.mxu0 0.0
    %779 = vmatpush1.msra.mxu0 0.0
    %780 = vmatprep.subr.mxu0 0.0
    %781 = vmatpush1.msra.mxu0 0.0
    %782 = vmatprep.subr.mxu0 0.0
    %783 = vmatpush1.msra.mxu0 0.0
    %784 = vmatprep.subr.mxu0 0.0
    %785 = vmatpush1.msra.mxu0 0.0
    %786 = vmatprep.subr.mxu0 0.0
    %787 = vmatpush1.msra.mxu0 0.0
    %788 = vmatprep.subr.mxu0 0.0
    %789 = vmatpush1.msra.mxu0 0.0
    %790 = vmatprep.subr.mxu0 0.0
    %791 = vmatpush1.msra.mxu0 0.0
    %792 = vmatprep.subr.mxu0 0.0
    %793 = vmatpush1.msra.mxu0 0.0
    %794 = vmatprep.subr.mxu0 0.0
    %795 = vmatpush1.msra.mxu0 0.0
    %796 = vmatprep.subr.mxu0 0.0
    %797 = vmatpush1.msra.mxu0 0.0
    %798 = vmatprep.mubr.f32.mxu0 0.0
    %799 = vmatmul.mubr.f32.gmra.mrb[0].mxu0 %v731
    %v800 = vpop.f32.mrb[0].mxu0
    %v801 = vadd.f32 0.0, %v800
    %v802 = vpop.f32.mrb[0].mxu0
    %v803 = vadd.f32 0.0, %v802
    %804 = vdwg.mxu0
    %805 = vmatprep.subr.mxu0 %v148
    %806 = vmatpush1.msra.mxu0 %v147
    %807 = vmatprep.subr.mxu0 %v152
    %808 = vmatpush1.msra.mxu0 %v151
    %809 = vmatprep.subr.mxu0 %v156
    %810 = vmatpush1.msra.mxu0 %v155
    %811 = vmatprep.subr.mxu0 %v160
    %812 = vmatpush1.msra.mxu0 %v159
    %813 = vmatprep.subr.mxu0 %v164
    %814 = vmatpush1.msra.mxu0 %v163
    %815 = vmatprep.subr.mxu0 %v168
    %816 = vmatpush1.msra.mxu0 %v167
    %817 = vmatprep.subr.mxu0 %v172
    %818 = vmatpush1.msra.mxu0 %v171
    %819 = vmatprep.subr.mxu0 %v176
    %820 = vmatpush1.msra.mxu0 %v175
    %821 = vmatprep.subr.mxu0 %v180
    %822 = vmatpush1.msra.mxu0 %v179
    %823 = vmatprep.subr.mxu0 %v184
    %824 = vmatpush1.msra.mxu0 %v183
    %825 = vmatprep.subr.mxu0 %v188
    %826 = vmatpush1.msra.mxu0 %v187
    %827 = vmatprep.subr.mxu0 %v192
    %828 = vmatpush1.msra.mxu0 %v191
    %829 = vmatprep.subr.mxu0 %v196
    %830 = vmatpush1.msra.mxu0 %v195
    %831 = vmatprep.subr.mxu0 %v200
    %832 = vmatpush1.msra.mxu0 %v199
    %833 = vmatprep.subr.mxu0 %v204
    %834 = vmatpush1.msra.mxu0 %v203
    %835 = vmatprep.subr.mxu0 %v208
    %836 = vmatpush1.msra.mxu0 %v207
    %837 = vmatprep.subr.mxu0 0.0
    %838 = vmatpush1.msra.mxu0 0.0
    %839 = vmatprep.subr.mxu0 0.0
    %840 = vmatpush1.msra.mxu0 0.0
    %841 = vmatprep.subr.mxu0 0.0
    %842 = vmatpush1.msra.mxu0 0.0
    %843 = vmatprep.subr.mxu0 0.0
    %844 = vmatpush1.msra.mxu0 0.0
    %845 = vmatprep.subr.mxu0 0.0
    %846 = vmatpush1.msra.mxu0 0.0
    %847 = vmatprep.subr.mxu0 0.0
    %848 = vmatpush1.msra.mxu0 0.0
    %849 = vmatprep.subr.mxu0 0.0
    %850 = vmatpush1.msra.mxu0 0.0
    %851 = vmatprep.subr.mxu0 0.0
    %852 = vmatpush1.msra.mxu0 0.0
    %853 = vmatprep.subr.mxu0 0.0
    %854 = vmatpush1.msra.mxu0 0.0
    %855 = vmatprep.subr.mxu0 0.0
    %856 = vmatpush1.msra.mxu0 0.0
    %857 = vmatprep.subr.mxu0 0.0
    %858 = vmatpush1.msra.mxu0 0.0
    %859 = vmatprep.subr.mxu0 0.0
    %860 = vmatpush1.msra.mxu0 0.0
    %861 = vmatprep.subr.mxu0 0.0
    %862 = vmatpush1.msra.mxu0 0.0
    %863 = vmatprep.subr.mxu0 0.0
    %864 = vmatpush1.msra.mxu0 0.0
    %865 = vmatprep.subr.mxu0 0.0
    %866 = vmatpush1.msra.mxu0 0.0
    %867 = vmatprep.subr.mxu0 0.0
    %868 = vmatpush1.msra.mxu0 0.0
    %869 = vmatprep.mubr.f32.mxu0 0.0
    %870 = vmatmul.mubr.f32.gmra.mrb[0].mxu0 %v731
    %v871 = vpop.f32.mrb[0].mxu0
    %v872 = vadd.f32 0.0, %v871
    %v873 = vpop.f32.mrb[0].mxu0
    %v874 = vadd.f32 0.0, %v873
    %875 = vdwg.mxu0
    %876 = vmatprep.subr.mxu0 0.0
    %877 = vmatpush1.msra.mxu0 %v209
    %878 = vmatprep.subr.mxu0 0.0
    %879 = vmatpush1.msra.mxu0 %v210
    %880 = vmatprep.subr.mxu0 0.0
    %881 = vmatpush1.msra.mxu0 %v211
    %882 = vmatprep.subr.mxu0 0.0
    %883 = vmatpush1.msra.mxu0 %v212
    %884 = vmatprep.subr.mxu0 0.0
    %885 = vmatpush1.msra.mxu0 %v213
    %886 = vmatprep.subr.mxu0 0.0
    %887 = vmatpush1.msra.mxu0 %v214
    %888 = vmatprep.subr.mxu0 0.0
    %889 = vmatpush1.msra.mxu0 %v215
    %890 = vmatprep.subr.mxu0 0.0
    %891 = vmatpush1.msra.mxu0 %v216
    %892 = vmatprep.subr.mxu0 0.0
    %893 = vmatpush1.msra.mxu0 %v217
    %894 = vmatprep.subr.mxu0 0.0
    %895 = vmatpush1.msra.mxu0 %v218
    %896 = vmatprep.subr.mxu0 0.0
    %897 = vmatpush1.msra.mxu0 %v219
    %898 = vmatprep.subr.mxu0 0.0
    %899 = vmatpush1.msra.mxu0 %v220
    %900 = vmatprep.subr.mxu0 0.0
    %901 = vmatpush1.msra.mxu0 %v221
    %902 = vmatprep.subr.mxu0 0.0
    %903 = vmatpush1.msra.mxu0 %v222
    %904 = vmatprep.subr.mxu0 0.0
    %905 = vmatpush1.msra.mxu0 %v223
    %906 = vmatprep.subr.mxu0 0.0
    %907 = vmatpush1.msra.mxu0 %v224
    %908 = vmatprep.subr.mxu0 0.0
    %909 = vmatpush1.msra.mxu0 0.0
    %910 = vmatprep.subr.mxu0 0.0
    %911 = vmatpush1.msra.mxu0 0.0
    %912 = vmatprep.subr.mxu0 0.0
    %913 = vmatpush1.msra.mxu0 0.0
    %914 = vmatprep.subr.mxu0 0.0
    %915 = vmatpush1.msra.mxu0 0.0
    %916 = vmatprep.subr.mxu0 0.0
    %917 = vmatpush1.msra.mxu0 0.0
    %918 = vmatprep.subr.mxu0 0.0
    %919 = vmatpush1.msra.mxu0 0.0
    %920 = vmatprep.subr.mxu0 0.0
    %921 = vmatpush1.msra.mxu0 0.0
    %922 = vmatprep.subr.mxu0 0.0
    %923 = vmatpush1.msra.mxu0 0.0
    %924 = vmatprep.subr.mxu0 0.0
    %925 = vmatpush1.msra.mxu0 0.0
    %926 = vmatprep.subr.mxu0 0.0
    %927 = vmatpush1.msra.mxu0 0.0
    %928 = vmatprep.subr.mxu0 0.0
    %929 = vmatpush1.msra.mxu0 0.0
    %930 = vmatprep.subr.mxu0 0.0
    %931 = vmatpush1.msra.mxu0 0.0
    %932 = vmatprep.subr.mxu0 0.0
    %933 = vmatpush1.msra.mxu0 0.0
    %934 = vmatprep.subr.mxu0 0.0
    %935 = vmatpush1.msra.mxu0 0.0
    %936 = vmatprep.subr.mxu0 0.0
    %937 = vmatpush1.msra.mxu0 0.0
    %938 = vmatprep.subr.mxu0 0.0
    %939 = vmatpush1.msra.mxu0 0.0
    %940 = vmatprep.mubr.f32.mxu0 0.0
    %941 = vmatmul.mubr.f32.gmra.mrb[0].mxu0 %v729
    %v942 = vpop.f32.mrb[0].mxu0
    %v943 = vadd.f32 %v373, %v942
    %v944 = vpop.f32.mrb[0].mxu0
    %945 = vdwg.mxu0
    %v946 = vtanh.pop %v943
    %s947 = scalar_lea.vmem [#allocation2], 16
    %v948 = vld [vmem:[%s947] sm:$0xff]
    %v949 = vmul.f32 %v948, %v946
    %v950 = vadd.f32 %v729, %v949
    %s951 = scalar_lea.vmem [#allocation3], 64
    %v952 = vld [vmem:[%s951] sm:$0xff]
    %v953 = vld [vmem:[%s951 + $0x8] sm:$0xff]
    %v954 = vld [vmem:[%s951 + $0x10] sm:$0xff]
    %v955 = vld [vmem:[%s951 + $0x18] sm:$0xff]
    %v956 = vadd.f32 %v952, %v801
    %v957 = vadd.f32 %v953, %v803
    %v958 = vadd.f32 %v954, %v872
    %v959 = vadd.f32 %v955, %v874
    %v960 = vxor.u32 %v956, 2147483648
    %v961 = vmul.f32 %v960, 1.442695
    %v962 = vpow.pop %v961
    %v963 = vadd.f32 %v962, 1.0
    %v964 = vrcp.pop %v963
    %v965 = vmul.f32 1.0, %v964
    %v966 = vxor.u32 %v957, 2147483648
    %v967 = vmul.f32 %v966, 1.442695
    %v968 = vpow.pop %v967
    %v969 = vadd.f32 %v968, 1.0
    %v970 = vrcp.pop %v969
    %v971 = vmul.f32 1.0, %v970
    %v972 = vxor.u32 %v958, 2147483648
    %v973 = vmul.f32 %v972, 1.442695
    %v974 = vpow.pop %v973
    %v975 = vadd.f32 %v974, 1.0
    %v976 = vrcp.pop %v975
    %v977 = vmul.f32 1.0, %v976
    %v978 = vtanh.pop %v959
    %v979 = vmul.f32 %v971, %v950
    %v980 = vmul.f32 %v965, %v978
    %v981 = vadd.f32 %v979, %v980
    %v982 = vtanh.pop %v981
    %v983 = vmul.f32 %v977, %v982
    %s984 = scalar_lea.vmem [#allocation9], 16
    %985 = vst [vmem:[%s984] sm:$0xff] %v983
    %986 = vmatprep.subr.mxu0 %v146
    %987 = vmatpush1.msra.mxu0 %v145
    %988 = vmatprep.subr.mxu0 %v150
    %989 = vmatpush1.msra.mxu0 %v149
    %990 = vmatprep.subr.mxu0 %v154
    %991 = vmatpush1.msra.mxu0 %v153
    %992 = vmatprep.subr.mxu0 %v158
    %993 = vmatpush1.msra.mxu0 %v157
    %994 = vmatprep.subr.mxu0 %v162
    %995 = vmatpush1.msra.mxu0 %v161
    %996 = vmatprep.subr.mxu0 %v166
    %997 = vmatpush1.msra.mxu0 %v165
    %998 = vmatprep.subr.mxu0 %v170
    %999 = vmatpush1.msra.mxu0 %v169
    %1000 = vmatprep.subr.mxu0 %v174
    %1001 = vmatpush1.msra.mxu0 %v173
    %1002 = vmatprep.subr.mxu0 %v178
    %1003 = vmatpush1.msra.mxu0 %v177
    %1004 = vmatprep.subr.mxu0 %v182
    %1005 = vmatpush1.msra.mxu0 %v181
    %1006 = vmatprep.subr.mxu0 %v186
    %1007 = vmatpush1.msra.mxu0 %v185
    %1008 = vmatprep.subr.mxu0 %v190
    %1009 = vmatpush1.msra.mxu0 %v189
    %1010 = vmatprep.subr.mxu0 %v194
    %1011 = vmatpush1.msra.mxu0 %v193
    %1012 = vmatprep.subr.mxu0 %v198
    %1013 = vmatpush1.msra.mxu0 %v197
    %1014 = vmatprep.subr.mxu0 %v202
    %1015 = vmatpush1.msra.mxu0 %v201
    %1016 = vmatprep.subr.mxu0 %v206
    %1017 = vmatpush1.msra.mxu0 %v205
    %1018 = vmatprep.subr.mxu0 0.0
    %1019 = vmatpush1.msra.mxu0 0.0
    %1020 = vmatprep.subr.mxu0 0.0
    %1021 = vmatpush1.msra.mxu0 0.0
    %1022 = vmatprep.subr.mxu0 0.0
    %1023 = vmatpush1.msra.mxu0 0.0
    %1024 = vmatprep.subr.mxu0 0.0
    %1025 = vmatpush1.msra.mxu0 0.0
    %1026 = vmatprep.subr.mxu0 0.0
    %1027 = vmatpush1.msra.mxu0 0.0
    %1028 = vmatprep.subr.mxu0 0.0
    %1029 = vmatpush1.msra.mxu0 0.0
    %1030 = vmatprep.subr.mxu0 0.0
    %1031 = vmatpush1.msra.mxu0 0.0
    %1032 = vmatprep.subr.mxu0 0.0
    %1033 = vmatpush1.msra.mxu0 0.0
    %1034 = vmatprep.subr.mxu0 0.0
    %1035 = vmatpush1.msra.mxu0 0.0
    %1036 = vmatprep.subr.mxu0 0.0
    %1037 = vmatpush1.msra.mxu0 0.0
    %1038 = vmatprep.subr.mxu0 0.0
    %1039 = vmatpush1.msra.mxu0 0.0
    %1040 = vmatprep.subr.mxu0 0.0
    %1041 = vmatpush1.msra.mxu0 0.0
    %1042 = vmatprep.subr.mxu0 0.0
    %1043 = vmatpush1.msra.mxu0 0.0
    %1044 = vmatprep.subr.mxu0 0.0
    %1045 = vmatpush1.msra.mxu0 0.0
    %1046 = vmatprep.subr.mxu0 0.0
    %1047 = vmatpush1.msra.mxu0 0.0
    %1048 = vmatprep.subr.mxu0 0.0
    %1049 = vmatpush1.msra.mxu0 0.0
    %1050 = vmatprep.mubr.f32.mxu0 0.0
    %1051 = vmatmul.mubr.f32.gmra.mrb[0].mxu0 %v983
    %v1052 = vpop.f32.mrb[0].mxu0
    %v1053 = vadd.f32 0.0, %v1052
    %v1054 = vpop.f32.mrb[0].mxu0
    %v1055 = vadd.f32 0.0, %v1054
    %1056 = vdwg.mxu0
    %1057 = vmatprep.subr.mxu0 %v148
    %1058 = vmatpush1.msra.mxu0 %v147
    %1059 = vmatprep.subr.mxu0 %v152
    %1060 = vmatpush1.msra.mxu0 %v151
    %1061 = vmatprep.subr.mxu0 %v156
    %1062 = vmatpush1.msra.mxu0 %v155
    %1063 = vmatprep.subr.mxu0 %v160
    %1064 = vmatpush1.msra.mxu0 %v159
    %1065 = vmatprep.subr.mxu0 %v164
    %1066 = vmatpush1.msra.mxu0 %v163
    %1067 = vmatprep.subr.mxu0 %v168
    %1068 = vmatpush1.msra.mxu0 %v167
    %1069 = vmatprep.subr.mxu0 %v172
    %1070 = vmatpush1.msra.mxu0 %v171
    %1071 = vmatprep.subr.mxu0 %v176
    %1072 = vmatpush1.msra.mxu0 %v175
    %1073 = vmatprep.subr.mxu0 %v180
    %1074 = vmatpush1.msra.mxu0 %v179
    %1075 = vmatprep.subr.mxu0 %v184
    %1076 = vmatpush1.msra.mxu0 %v183
    %1077 = vmatprep.subr.mxu0 %v188
    %1078 = vmatpush1.msra.mxu0 %v187
    %1079 = vmatprep.subr.mxu0 %v192
    %1080 = vmatpush1.msra.mxu0 %v191
    %1081 = vmatprep.subr.mxu0 %v196
    %1082 = vmatpush1.msra.mxu0 %v195
    %1083 = vmatprep.subr.mxu0 %v200
    %1084 = vmatpush1.msra.mxu0 %v199
    %1085 = vmatprep.subr.mxu0 %v204
    %1086 = vmatpush1.msra.mxu0 %v203
    %1087 = vmatprep.subr.mxu0 %v208
    %1088 = vmatpush1.msra.mxu0 %v207
    %1089 = vmatprep.subr.mxu0 0.0
    %1090 = vmatpush1.msra.mxu0 0.0
    %1091 = vmatprep.subr.mxu0 0.0
    %1092 = vmatpush1.msra.mxu0 0.0
    %1093 = vmatprep.subr.mxu0 0.0
    %1094 = vmatpush1.msra.mxu0 0.0
    %1095 = vmatprep.subr.mxu0 0.0
    %1096 = vmatpush1.msra.mxu0 0.0
    %1097 = vmatprep.subr.mxu0 0.0
    %1098 = vmatpush1.msra.mxu0 0.0
    %1099 = vmatprep.subr.mxu0 0.0
    %1100 = vmatpush1.msra.mxu0 0.0
    %1101 = vmatprep.subr.mxu0 0.0
    %1102 = vmatpush1.msra.mxu0 0.0
    %1103 = vmatprep.subr.mxu0 0.0
    %1104 = vmatpush1.msra.mxu0 0.0
    %1105 = vmatprep.subr.mxu0 0.0
    %1106 = vmatpush1.msra.mxu0 0.0
    %1107 = vmatprep.subr.mxu0 0.0
    %1108 = vmatpush1.msra.mxu0 0.0
    %1109 = vmatprep.subr.mxu0 0.0
    %1110 = vmatpush1.msra.mxu0 0.0
    %1111 = vmatprep.subr.mxu0 0.0
    %1112 = vmatpush1.msra.mxu0 0.0
    %1113 = vmatprep.subr.mxu0 0.0
    %1114 = vmatpush1.msra.mxu0 0.0
    %1115 = vmatprep.subr.mxu0 0.0
    %1116 = vmatpush1.msra.mxu0 0.0
    %1117 = vmatprep.subr.mxu0 0.0
    %1118 = vmatpush1.msra.mxu0 0.0
    %1119 = vmatprep.subr.mxu0 0.0
    %1120 = vmatpush1.msra.mxu0 0.0
    %1121 = vmatprep.mubr.f32.mxu0 0.0
    %1122 = vmatmul.mubr.f32.gmra.mrb[0].mxu0 %v983
    %v1123 = vpop.f32.mrb[0].mxu0
    %v1124 = vadd.f32 0.0, %v1123
    %v1125 = vpop.f32.mrb[0].mxu0
    %v1126 = vadd.f32 0.0, %v1125
    %1127 = vdwg.mxu0
    %1128 = vmatprep.subr.mxu0 0.0
    %1129 = vmatpush1.msra.mxu0 %v209
    %1130 = vmatprep.subr.mxu0 0.0
    %1131 = vmatpush1.msra.mxu0 %v210
    %1132 = vmatprep.subr.mxu0 0.0
    %1133 = vmatpush1.msra.mxu0 %v211
    %1134 = vmatprep.subr.mxu0 0.0
    %1135 = vmatpush1.msra.mxu0 %v212
    %1136 = vmatprep.subr.mxu0 0.0
    %1137 = vmatpush1.msra.mxu0 %v213
    %1138 = vmatprep.subr.mxu0 0.0
    %1139 = vmatpush1.msra.mxu0 %v214
    %1140 = vmatprep.subr.mxu0 0.0
    %1141 = vmatpush1.msra.mxu0 %v215
    %1142 = vmatprep.subr.mxu0 0.0
    %1143 = vmatpush1.msra.mxu0 %v216
    %1144 = vmatprep.subr.mxu0 0.0
    %1145 = vmatpush1.msra.mxu0 %v217
    %1146 = vmatprep.subr.mxu0 0.0
    %1147 = vmatpush1.msra.mxu0 %v218
    %1148 = vmatprep.subr.mxu0 0.0
    %1149 = vmatpush1.msra.mxu0 %v219
    %1150 = vmatprep.subr.mxu0 0.0
    %1151 = vmatpush1.msra.mxu0 %v220
    %1152 = vmatprep.subr.mxu0 0.0
    %1153 = vmatpush1.msra.mxu0 %v221
    %1154 = vmatprep.subr.mxu0 0.0
    %1155 = vmatpush1.msra.mxu0 %v222
    %1156 = vmatprep.subr.mxu0 0.0
    %1157 = vmatpush1.msra.mxu0 %v223
    %1158 = vmatprep.subr.mxu0 0.0
    %1159 = vmatpush1.msra.mxu0 %v224
    %1160 = vmatprep.subr.mxu0 0.0
    %1161 = vmatpush1.msra.mxu0 0.0
    %1162 = vmatprep.subr.mxu0 0.0
    %1163 = vmatpush1.msra.mxu0 0.0
    %1164 = vmatprep.subr.mxu0 0.0
    %1165 = vmatpush1.msra.mxu0 0.0
    %1166 = vmatprep.subr.mxu0 0.0
    %1167 = vmatpush1.msra.mxu0 0.0
    %1168 = vmatprep.subr.mxu0 0.0
    %1169 = vmatpush1.msra.mxu0 0.0
    %1170 = vmatprep.subr.mxu0 0.0
    %1171 = vmatpush1.msra.mxu0 0.0
    %1172 = vmatprep.subr.mxu0 0.0
    %1173 = vmatpush1.msra.mxu0 0.0
    %1174 = vmatprep.subr.mxu0 0.0
    %1175 = vmatpush1.msra.mxu0 0.0
    %1176 = vmatprep.subr.mxu0 0.0
    %1177 = vmatpush1.msra.mxu0 0.0
    %1178 = vmatprep.subr.mxu0 0.0
    %1179 = vmatpush1.msra.mxu0 0.0
    %1180 = vmatprep.subr.mxu0 0.0
    %1181 = vmatpush1.msra.mxu0 0.0
    %1182 = vmatprep.subr.mxu0 0.0
    %1183 = vmatpush1.msra.mxu0 0.0
    %1184 = vmatprep.subr.mxu0 0.0
    %1185 = vmatpush1.msra.mxu0 0.0
    %1186 = vmatprep.subr.mxu0 0.0
    %1187 = vmatpush1.msra.mxu0 0.0
    %1188 = vmatprep.subr.mxu0 0.0
    %1189 = vmatpush1.msra.mxu0 0.0
    %1190 = vmatprep.subr.mxu0 0.0
    %1191 = vmatpush1.msra.mxu0 0.0
    %1192 = vmatprep.mubr.f32.mxu0 0.0
    %1193 = vmatmul.mubr.f32.gmra.mrb[0].mxu0 %v981
    %v1194 = vpop.f32.mrb[0].mxu0
    %v1195 = vadd.f32 %v373, %v1194
    %v1196 = vpop.f32.mrb[0].mxu0
    %1197 = vdwg.mxu0
    %v1198 = vtanh.pop %v1195
    %s1199 = scalar_lea.vmem [#allocation2], 24
    %v1200 = vld [vmem:[%s1199] sm:$0xff]
    %v1201 = vmul.f32 %v1200, %v1198
    %v1202 = vadd.f32 %v981, %v1201
    %s1203 = scalar_lea.vmem [#allocation3], 96
    %v1204 = vld [vmem:[%s1203] sm:$0xff]
    %v1205 = vld [vmem:[%s1203 + $0x8] sm:$0xff]
    %v1206 = vld [vmem:[%s1203 + $0x10] sm:$0xff]
    %v1207 = vld [vmem:[%s1203 + $0x18] sm:$0xff]
    %v1208 = vadd.f32 %v1204, %v1053
    %v1209 = vadd.f32 %v1205, %v1055
    %v1210 = vadd.f32 %v1206, %v1124
    %v1211 = vadd.f32 %v1207, %v1126
    %v1212 = vxor.u32 %v1208, 2147483648
    %v1213 = vmul.f32 %v1212, 1.442695
    %v1214 = vpow.pop %v1213
    %v1215 = vadd.f32 %v1214, 1.0
    %v1216 = vrcp.pop %v1215
    %v1217 = vmul.f32 1.0, %v1216
    %v1218 = vxor.u32 %v1209, 2147483648
    %v1219 = vmul.f32 %v1218, 1.442695
    %v1220 = vpow.pop %v1219
    %v1221 = vadd.f32 %v1220, 1.0
    %v1222 = vrcp.pop %v1221
    %v1223 = vmul.f32 1.0, %v1222
    %v1224 = vxor.u32 %v1210, 2147483648
    %v1225 = vmul.f32 %v1224, 1.442695
    %v1226 = vpow.pop %v1225
    %v1227 = vadd.f32 %v1226, 1.0
    %v1228 = vrcp.pop %v1227
    %v1229 = vmul.f32 1.0, %v1228
    %v1230 = vtanh.pop %v1211
    %v1231 = vmul.f32 %v1223, %v1202
    %v1232 = vmul.f32 %v1217, %v1230
    %v1233 = vadd.f32 %v1231, %v1232
    %v1234 = vtanh.pop %v1233
    %v1235 = vmul.f32 %v1229, %v1234
    %s1236 = scalar_lea.vmem [#allocation9], 24
    %1237 = vst [vmem:[%s1236] sm:$0xff] %v1235
    %1238 = vmatprep.subr.mxu0 %v146
    %1239 = vmatpush1.msra.mxu0 %v145
    %1240 = vmatprep.subr.mxu0 %v150
    %1241 = vmatpush1.msra.mxu0 %v149
    %1242 = vmatprep.subr.mxu0 %v154
    %1243 = vmatpush1.msra.mxu0 %v153
    %1244 = vmatprep.subr.mxu0 %v158
    %1245 = vmatpush1.msra.mxu0 %v157
    %1246 = vmatprep.subr.mxu0 %v162
    %1247 = vmatpush1.msra.mxu0 %v161
    %1248 = vmatprep.subr.mxu0 %v166
    %1249 = vmatpush1.msra.mxu0 %v165
    %1250 = vmatprep.subr.mxu0 %v170
    %1251 = vmatpush1.msra.mxu0 %v169
    %1252 = vmatprep.subr.mxu0 %v174
    %1253 = vmatpush1.msra.mxu0 %v173
    %1254 = vmatprep.subr.mxu0 %v178
    %1255 = vmatpush1.msra.mxu0 %v177
    %1256 = vmatprep.subr.mxu0 %v182
    %1257 = vmatpush1.msra.mxu0 %v181
    %1258 = vmatprep.subr.mxu0 %v186
    %1259 = vmatpush1.msra.mxu0 %v185
    %1260 = vmatprep.subr.mxu0 %v190
    %1261 = vmatpush1.msra.mxu0 %v189
    %1262 = vmatprep.subr.mxu0 %v194
    %1263 = vmatpush1.msra.mxu0 %v193
    %1264 = vmatprep.subr.mxu0 %v198
    %1265 = vmatpush1.msra.mxu0 %v197
    %1266 = vmatprep.subr.mxu0 %v202
    %1267 = vmatpush1.msra.mxu0 %v201
    %1268 = vmatprep.subr.mxu0 %v206
    %1269 = vmatpush1.msra.mxu0 %v205
    %1270 = vmatprep.subr.mxu0 0.0
    %1271 = vmatpush1.msra.mxu0 0.0
    %1272 = vmatprep.subr.mxu0 0.0
    %1273 = vmatpush1.msra.mxu0 0.0
    %1274 = vmatprep.subr.mxu0 0.0
    %1275 = vmatpush1.msra.mxu0 0.0
    %1276 = vmatprep.subr.mxu0 0.0
    %1277 = vmatpush1.msra.mxu0 0.0
    %1278 = vmatprep.subr.mxu0 0.0
    %1279 = vmatpush1.msra.mxu0 0.0
    %1280 = vmatprep.subr.mxu0 0.0
    %1281 = vmatpush1.msra.mxu0 0.0
    %1282 = vmatprep.subr.mxu0 0.0
    %1283 = vmatpush1.msra.mxu0 0.0
    %1284 = vmatprep.subr.mxu0 0.0
    %1285 = vmatpush1.msra.mxu0 0.0
    %1286 = vmatprep.subr.mxu0 0.0
    %1287 = vmatpush1.msra.mxu0 0.0
    %1288 = vmatprep.subr.mxu0 0.0
    %1289 = vmatpush1.msra.mxu0 0.0
    %1290 = vmatprep.subr.mxu0 0.0
    %1291 = vmatpush1.msra.mxu0 0.0
    %1292 = vmatprep.subr.mxu0 0.0
    %1293 = vmatpush1.msra.mxu0 0.0
    %1294 = vmatprep.subr.mxu0 0.0
    %1295 = vmatpush1.msra.mxu0 0.0
    %1296 = vmatprep.subr.mxu0 0.0
    %1297 = vmatpush1.msra.mxu0 0.0
    %1298 = vmatprep.subr.mxu0 0.0
    %1299 = vmatpush1.msra.mxu0 0.0
    %1300 = vmatprep.subr.mxu0 0.0
    %1301 = vmatpush1.msra.mxu0 0.0
    %1302 = vmatprep.mubr.f32.mxu0 0.0
    %1303 = vmatmul.mubr.f32.gmra.mrb[0].mxu0 %v1235
    %v1304 = vpop.f32.mrb[0].mxu0
    %v1305 = vadd.f32 0.0, %v1304
    %v1306 = vpop.f32.mrb[0].mxu0
    %v1307 = vadd.f32 0.0, %v1306
    %1308 = vdwg.mxu0
    %1309 = vmatprep.subr.mxu0 %v148
    %1310 = vmatpush1.msra.mxu0 %v147
    %1311 = vmatprep.subr.mxu0 %v152
    %1312 = vmatpush1.msra.mxu0 %v151
    %1313 = vmatprep.subr.mxu0 %v156
    %1314 = vmatpush1.msra.mxu0 %v155
    %1315 = vmatprep.subr.mxu0 %v160
    %1316 = vmatpush1.msra.mxu0 %v159
    %1317 = vmatprep.subr.mxu0 %v164
    %1318 = vmatpush1.msra.mxu0 %v163
    %1319 = vmatprep.subr.mxu0 %v168
    %1320 = vmatpush1.msra.mxu0 %v167
    %1321 = vmatprep.subr.mxu0 %v172
    %1322 = vmatpush1.msra.mxu0 %v171
    %1323 = vmatprep.subr.mxu0 %v176
    %1324 = vmatpush1.msra.mxu0 %v175
    %1325 = vmatprep.subr.mxu0 %v180
    %1326 = vmatpush1.msra.mxu0 %v179
    %1327 = vmatprep.subr.mxu0 %v184
    %1328 = vmatpush1.msra.mxu0 %v183
    %1329 = vmatprep.subr.mxu0 %v188
    %1330 = vmatpush1.msra.mxu0 %v187
    %1331 = vmatprep.subr.mxu0 %v192
    %1332 = vmatpush1.msra.mxu0 %v191
    %1333 = vmatprep.subr.mxu0 %v196
    %1334 = vmatpush1.msra.mxu0 %v195
    %1335 = vmatprep.subr.mxu0 %v200
    %1336 = vmatpush1.msra.mxu0 %v199
    %1337 = vmatprep.subr.mxu0 %v204
    %1338 = vmatpush1.msra.mxu0 %v203
    %1339 = vmatprep.subr.mxu0 %v208
    %1340 = vmatpush1.msra.mxu0 %v207
    %1341 = vmatprep.subr.mxu0 0.0
    %1342 = vmatpush1.msra.mxu0 0.0
    %1343 = vmatprep.subr.mxu0 0.0
    %1344 = vmatpush1.msra.mxu0 0.0
    %1345 = vmatprep.subr.mxu0 0.0
    %1346 = vmatpush1.msra.mxu0 0.0
    %1347 = vmatprep.subr.mxu0 0.0
    %1348 = vmatpush1.msra.mxu0 0.0
    %1349 = vmatprep.subr.mxu0 0.0
    %1350 = vmatpush1.msra.mxu0 0.0
    %1351 = vmatprep.subr.mxu0 0.0
    %1352 = vmatpush1.msra.mxu0 0.0
    %1353 = vmatprep.subr.mxu0 0.0
    %1354 = vmatpush1.msra.mxu0 0.0
    %1355 = vmatprep.subr.mxu0 0.0
    %1356 = vmatpush1.msra.mxu0 0.0
    %1357 = vmatprep.subr.mxu0 0.0
    %1358 = vmatpush1.msra.mxu0 0.0
    %1359 = vmatprep.subr.mxu0 0.0
    %1360 = vmatpush1.msra.mxu0 0.0
    %1361 = vmatprep.subr.mxu0 0.0
    %1362 = vmatpush1.msra.mxu0 0.0
    %1363 = vmatprep.subr.mxu0 0.0
    %1364 = vmatpush1.msra.mxu0 0.0
    %1365 = vmatprep.subr.mxu0 0.0
    %1366 = vmatpush1.msra.mxu0 0.0
    %1367 = vmatprep.subr.mxu0 0.0
    %1368 = vmatpush1.msra.mxu0 0.0
    %1369 = vmatprep.subr.mxu0 0.0
    %1370 = vmatpush1.msra.mxu0 0.0
    %1371 = vmatprep.subr.mxu0 0.0
    %1372 = vmatpush1.msra.mxu0 0.0
    %1373 = vmatprep.mubr.f32.mxu0 0.0
    %1374 = vmatmul.mubr.f32.gmra.mrb[0].mxu0 %v1235
    %v1375 = vpop.f32.mrb[0].mxu0
    %v1376 = vadd.f32 0.0, %v1375
    %v1377 = vpop.f32.mrb[0].mxu0
    %v1378 = vadd.f32 0.0, %v1377
    %1379 = vdwg.mxu0
    %1380 = vmatprep.subr.mxu0 0.0
    %1381 = vmatpush1.msra.mxu0 %v209
    %1382 = vmatprep.subr.mxu0 0.0
    %1383 = vmatpush1.msra.mxu0 %v210
    %1384 = vmatprep.subr.mxu0 0.0
    %1385 = vmatpush1.msra.mxu0 %v211
    %1386 = vmatprep.subr.mxu0 0.0
    %1387 = vmatpush1.msra.mxu0 %v212
    %1388 = vmatprep.subr.mxu0 0.0
    %1389 = vmatpush1.msra.mxu0 %v213
    %1390 = vmatprep.subr.mxu0 0.0
    %1391 = vmatpush1.msra.mxu0 %v214
    %1392 = vmatprep.subr.mxu0 0.0
    %1393 = vmatpush1.msra.mxu0 %v215
    %1394 = vmatprep.subr.mxu0 0.0
    %1395 = vmatpush1.msra.mxu0 %v216
    %1396 = vmatprep.subr.mxu0 0.0
    %1397 = vmatpush1.msra.mxu0 %v217
    %1398 = vmatprep.subr.mxu0 0.0
    %1399 = vmatpush1.msra.mxu0 %v218
    %1400 = vmatprep.subr.mxu0 0.0
    %1401 = vmatpush1.msra.mxu0 %v219
    %1402 = vmatprep.subr.mxu0 0.0
    %1403 = vmatpush1.msra.mxu0 %v220
    %1404 = vmatprep.subr.mxu0 0.0
    %1405 = vmatpush1.msra.mxu0 %v221
    %1406 = vmatprep.subr.mxu0 0.0
    %1407 = vmatpush1.msra.mxu0 %v222
    %1408 = vmatprep.subr.mxu0 0.0
    %1409 = vmatpush1.msra.mxu0 %v223
    %1410 = vmatprep.subr.mxu0 0.0
    %1411 = vmatpush1.msra.mxu0 %v224
    %1412 = vmatprep.subr.mxu0 0.0
    %1413 = vmatpush1.msra.mxu0 0.0
    %1414 = vmatprep.subr.mxu0 0.0
    %1415 = vmatpush1.msra.mxu0 0.0
    %1416 = vmatprep.subr.mxu0 0.0
    %1417 = vmatpush1.msra.mxu0 0.0
    %1418 = vmatprep.subr.mxu0 0.0
    %1419 = vmatpush1.msra.mxu0 0.0
    %1420 = vmatprep.subr.mxu0 0.0
    %1421 = vmatpush1.msra.mxu0 0.0
    %1422 = vmatprep.subr.mxu0 0.0
    %1423 = vmatpush1.msra.mxu0 0.0
    %1424 = vmatprep.subr.mxu0 0.0
    %1425 = vmatpush1.msra.mxu0 0.0
    %1426 = vmatprep.subr.mxu0 0.0
    %1427 = vmatpush1.msra.mxu0 0.0
    %1428 = vmatprep.subr.mxu0 0.0
    %1429 = vmatpush1.msra.mxu0 0.0
    %1430 = vmatprep.subr.mxu0 0.0
    %1431 = vmatpush1.msra.mxu0 0.0
    %1432 = vmatprep.subr.mxu0 0.0
    %1433 = vmatpush1.msra.mxu0 0.0
    %1434 = vmatprep.subr.mxu0 0.0
    %1435 = vmatpush1.msra.mxu0 0.0
    %1436 = vmatprep.subr.mxu0 0.0
    %1437 = vmatpush1.msra.mxu0 0.0
    %1438 = vmatprep.subr.mxu0 0.0
    %1439 = vmatpush1.msra.mxu0 0.0
    %1440 = vmatprep.subr.mxu0 0.0
    %1441 = vmatpush1.msra.mxu0 0.0
    %1442 = vmatprep.subr.mxu0 0.0
    %1443 = vmatpush1.msra.mxu0 0.0
    %1444 = vmatprep.mubr.f32.mxu0 0.0
    %1445 = vmatmul.mubr.f32.gmra.mrb[0].mxu0 %v1233
    %v1446 = vpop.f32.mrb[0].mxu0
    %v1447 = vadd.f32 %v373, %v1446
    %v1448 = vpop.f32.mrb[0].mxu0
    %1449 = vdwg.mxu0
    %v1450 = vtanh.pop %v1447
    %s1451 = scalar_lea.vmem [#allocation2], 32
    %v1452 = vld [vmem:[%s1451] sm:$0xff]
    %v1453 = vmul.f32 %v1452, %v1450
    %v1454 = vadd.f32 %v1233, %v1453
    %s1455 = scalar_lea.vmem [#allocation3], 128
    %v1456 = vld [vmem:[%s1455] sm:$0xff]
    %v1457 = vld [vmem:[%s1455 + $0x8] sm:$0xff]
    %v1458 = vld [vmem:[%s1455 + $0x10] sm:$0xff]
    %v1459 = vld [vmem:[%s1455 + $0x18] sm:$0xff]
    %v1460 = vadd.f32 %v1456, %v1305
    %v1461 = vadd.f32 %v1457, %v1307
    %v1462 = vadd.f32 %v1458, %v1376
    %v1463 = vadd.f32 %v1459, %v1378
    %v1464 = vxor.u32 %v1460, 2147483648
    %v1465 = vmul.f32 %v1464, 1.442695
    %v1466 = vpow.pop %v1465
    %v1467 = vadd.f32 %v1466, 1.0
    %v1468 = vrcp.pop %v1467
    %v1469 = vmul.f32 1.0, %v1468
    %v1470 = vxor.u32 %v1461, 2147483648
    %v1471 = vmul.f32 %v1470, 1.442695
    %v1472 = vpow.pop %v1471
    %v1473 = vadd.f32 %v1472, 1.0
    %v1474 = vrcp.pop %v1473
    %v1475 = vmul.f32 1.0, %v1474
    %v1476 = vxor.u32 %v1462, 2147483648
    %v1477 = vmul.f32 %v1476, 1.442695
    %v1478 = vpow.pop %v1477
    %v1479 = vadd.f32 %v1478, 1.0
    %v1480 = vrcp.pop %v1479
    %v1481 = vmul.f32 1.0, %v1480
    %v1482 = vtanh.pop %v1463
    %v1483 = vmul.f32 %v1475, %v1454
    %v1484 = vmul.f32 %v1469, %v1482
    %v1485 = vadd.f32 %v1483, %v1484
    %v1486 = vtanh.pop %v1485
    %v1487 = vmul.f32 %v1481, %v1486
    %s1488 = scalar_lea.vmem [#allocation9], 32
    %1489 = vst [vmem:[%s1488] sm:$0xff] %v1487
    %1490 = vmatprep.subr.mxu0 %v146
    %1491 = vmatpush1.msra.mxu0 %v145
    %1492 = vmatprep.subr.mxu0 %v150
    %1493 = vmatpush1.msra.mxu0 %v149
    %1494 = vmatprep.subr.mxu0 %v154
    %1495 = vmatpush1.msra.mxu0 %v153
    %1496 = vmatprep.subr.mxu0 %v158
    %1497 = vmatpush1.msra.mxu0 %v157
    %1498 = vmatprep.subr.mxu0 %v162
    %1499 = vmatpush1.msra.mxu0 %v161
    %1500 = vmatprep.subr.mxu0 %v166
    %1501 = vmatpush1.msra.mxu0 %v165
    %1502 = vmatprep.subr.mxu0 %v170
    %1503 = vmatpush1.msra.mxu0 %v169
    %1504 = vmatprep.subr.mxu0 %v174
    %1505 = vmatpush1.msra.mxu0 %v173
    %1506 = vmatprep.subr.mxu0 %v178
    %1507 = vmatpush1.msra.mxu0 %v177
    %1508 = vmatprep.subr.mxu0 %v182
    %1509 = vmatpush1.msra.mxu0 %v181
    %1510 = vmatprep.subr.mxu0 %v186
    %1511 = vmatpush1.msra.mxu0 %v185
    %1512 = vmatprep.subr.mxu0 %v190
    %1513 = vmatpush1.msra.mxu0 %v189
    %1514 = vmatprep.subr.mxu0 %v194
    %1515 = vmatpush1.msra.mxu0 %v193
    %1516 = vmatprep.subr.mxu0 %v198
    %1517 = vmatpush1.msra.mxu0 %v197
    %1518 = vmatprep.subr.mxu0 %v202
    %1519 = vmatpush1.msra.mxu0 %v201
    %1520 = vmatprep.subr.mxu0 %v206
    %1521 = vmatpush1.msra.mxu0 %v205
    %1522 = vmatprep.subr.mxu0 0.0
    %1523 = vmatpush1.msra.mxu0 0.0
    %1524 = vmatprep.subr.mxu0 0.0
    %1525 = vmatpush1.msra.mxu0 0.0
    %1526 = vmatprep.subr.mxu0 0.0
    %1527 = vmatpush1.msra.mxu0 0.0
    %1528 = vmatprep.subr.mxu0 0.0
    %1529 = vmatpush1.msra.mxu0 0.0
    %1530 = vmatprep.subr.mxu0 0.0
    %1531 = vmatpush1.msra.mxu0 0.0
    %1532 = vmatprep.subr.mxu0 0.0
    %1533 = vmatpush1.msra.mxu0 0.0
    %1534 = vmatprep.subr.mxu0 0.0
    %1535 = vmatpush1.msra.mxu0 0.0
    %1536 = vmatprep.subr.mxu0 0.0
    %1537 = vmatpush1.msra.mxu0 0.0
    %1538 = vmatprep.subr.mxu0 0.0
    %1539 = vmatpush1.msra.mxu0 0.0
    %1540 = vmatprep.subr.mxu0 0.0
    %1541 = vmatpush1.msra.mxu0 0.0
    %1542 = vmatprep.subr.mxu0 0.0
    %1543 = vmatpush1.msra.mxu0 0.0
    %1544 = vmatprep.subr.mxu0 0.0
    %1545 = vmatpush1.msra.mxu0 0.0
    %1546 = vmatprep.subr.mxu0 0.0
    %1547 = vmatpush1.msra.mxu0 0.0
    %1548 = vmatprep.subr.mxu0 0.0
    %1549 = vmatpush1.msra.mxu0 0.0
    %1550 = vmatprep.subr.mxu0 0.0
    %1551 = vmatpush1.msra.mxu0 0.0
    %1552 = vmatprep.subr.mxu0 0.0
    %1553 = vmatpush1.msra.mxu0 0.0
    %1554 = vmatprep.mubr.f32.mxu0 0.0
    %1555 = vmatmul.mubr.f32.gmra.mrb[0].mxu0 %v1487
    %v1556 = vpop.f32.mrb[0].mxu0
    %v1557 = vadd.f32 0.0, %v1556
    %v1558 = vpop.f32.mrb[0].mxu0
    %v1559 = vadd.f32 0.0, %v1558
    %1560 = vdwg.mxu0
    %1561 = vmatprep.subr.mxu0 %v148
    %1562 = vmatpush1.msra.mxu0 %v147
    %1563 = vmatprep.subr.mxu0 %v152
    %1564 = vmatpush1.msra.mxu0 %v151
    %1565 = vmatprep.subr.mxu0 %v156
    %1566 = vmatpush1.msra.mxu0 %v155
    %1567 = vmatprep.subr.mxu0 %v160
    %1568 = vmatpush1.msra.mxu0 %v159
    %1569 = vmatprep.subr.mxu0 %v164
    %1570 = vmatpush1.msra.mxu0 %v163
    %1571 = vmatprep.subr.mxu0 %v168
    %1572 = vmatpush1.msra.mxu0 %v167
    %1573 = vmatprep.subr.mxu0 %v172
    %1574 = vmatpush1.msra.mxu0 %v171
    %1575 = vmatprep.subr.mxu0 %v176
    %1576 = vmatpush1.msra.mxu0 %v175
    %1577 = vmatprep.subr.mxu0 %v180
    %1578 = vmatpush1.msra.mxu0 %v179
    %1579 = vmatprep.subr.mxu0 %v184
    %1580 = vmatpush1.msra.mxu0 %v183
    %1581 = vmatprep.subr.mxu0 %v188
    %1582 = vmatpush1.msra.mxu0 %v187
    %1583 = vmatprep.subr.mxu0 %v192
    %1584 = vmatpush1.msra.mxu0 %v191
    %1585 = vmatprep.subr.mxu0 %v196
    %1586 = vmatpush1.msra.mxu0 %v195
    %1587 = vmatprep.subr.mxu0 %v200
    %1588 = vmatpush1.msra.mxu0 %v199
    %1589 = vmatprep.subr.mxu0 %v204
    %1590 = vmatpush1.msra.mxu0 %v203
    %1591 = vmatprep.subr.mxu0 %v208
    %1592 = vmatpush1.msra.mxu0 %v207
    %1593 = vmatprep.subr.mxu0 0.0
    %1594 = vmatpush1.msra.mxu0 0.0
    %1595 = vmatprep.subr.mxu0 0.0
    %1596 = vmatpush1.msra.mxu0 0.0
    %1597 = vmatprep.subr.mxu0 0.0
    %1598 = vmatpush1.msra.mxu0 0.0
    %1599 = vmatprep.subr.mxu0 0.0
    %1600 = vmatpush1.msra.mxu0 0.0
    %1601 = vmatprep.subr.mxu0 0.0
    %1602 = vmatpush1.msra.mxu0 0.0
    %1603 = vmatprep.subr.mxu0 0.0
    %1604 = vmatpush1.msra.mxu0 0.0
    %1605 = vmatprep.subr.mxu0 0.0
    %1606 = vmatpush1.msra.mxu0 0.0
    %1607 = vmatprep.subr.mxu0 0.0
    %1608 = vmatpush1.msra.mxu0 0.0
    %1609 = vmatprep.subr.mxu0 0.0
    %1610 = vmatpush1.msra.mxu0 0.0
    %1611 = vmatprep.subr.mxu0 0.0
    %1612 = vmatpush1.msra.mxu0 0.0
    %1613 = vmatprep.subr.mxu0 0.0
    %1614 = vmatpush1.msra.mxu0 0.0
    %1615 = vmatprep.subr.mxu0 0.0
    %1616 = vmatpush1.msra.mxu0 0.0
    %1617 = vmatprep.subr.mxu0 0.0
    %1618 = vmatpush1.msra.mxu0 0.0
    %1619 = vmatprep.subr.mxu0 0.0
    %1620 = vmatpush1.msra.mxu0 0.0
    %1621 = vmatprep.subr.mxu0 0.0
    %1622 = vmatpush1.msra.mxu0 0.0
    %1623 = vmatprep.subr.mxu0 0.0
    %1624 = vmatpush1.msra.mxu0 0.0
    %1625 = vmatprep.mubr.f32.mxu0 0.0
    %1626 = vmatmul.mubr.f32.gmra.mrb[0].mxu0 %v1487
    %v1627 = vpop.f32.mrb[0].mxu0
    %v1628 = vadd.f32 0.0, %v1627
    %v1629 = vpop.f32.mrb[0].mxu0
    %v1630 = vadd.f32 0.0, %v1629
    %1631 = vdwg.mxu0
    %1632 = vmatprep.subr.mxu0 0.0
    %1633 = vmatpush1.msra.mxu0 %v209
    %1634 = vmatprep.subr.mxu0 0.0
    %1635 = vmatpush1.msra.mxu0 %v210
    %1636 = vmatprep.subr.mxu0 0.0
    %1637 = vmatpush1.msra.mxu0 %v211
    %1638 = vmatprep.subr.mxu0 0.0
    %1639 = vmatpush1.msra.mxu0 %v212
    %1640 = vmatprep.subr.mxu0 0.0
    %1641 = vmatpush1.msra.mxu0 %v213
    %1642 = vmatprep.subr.mxu0 0.0
    %1643 = vmatpush1.msra.mxu0 %v214
    %1644 = vmatprep.subr.mxu0 0.0
    %1645 = vmatpush1.msra.mxu0 %v215
    %1646 = vmatprep.subr.mxu0 0.0
    %1647 = vmatpush1.msra.mxu0 %v216
    %1648 = vmatprep.subr.mxu0 0.0
    %1649 = vmatpush1.msra.mxu0 %v217
    %1650 = vmatprep.subr.mxu0 0.0
    %1651 = vmatpush1.msra.mxu0 %v218
    %1652 = vmatprep.subr.mxu0 0.0
    %1653 = vmatpush1.msra.mxu0 %v219
    %1654 = vmatprep.subr.mxu0 0.0
    %1655 = vmatpush1.msra.mxu0 %v220
    %1656 = vmatprep.subr.mxu0 0.0
    %1657 = vmatpush1.msra.mxu0 %v221
    %1658 = vmatprep.subr.mxu0 0.0
    %1659 = vmatpush1.msra.mxu0 %v222
    %1660 = vmatprep.subr.mxu0 0.0
    %1661 = vmatpush1.msra.mxu0 %v223
    %1662 = vmatprep.subr.mxu0 0.0
    %1663 = vmatpush1.msra.mxu0 %v224
    %1664 = vmatprep.subr.mxu0 0.0
    %1665 = vmatpush1.msra.mxu0 0.0
    %1666 = vmatprep.subr.mxu0 0.0
    %1667 = vmatpush1.msra.mxu0 0.0
    %1668 = vmatprep.subr.mxu0 0.0
    %1669 = vmatpush1.msra.mxu0 0.0
    %1670 = vmatprep.subr.mxu0 0.0
    %1671 = vmatpush1.msra.mxu0 0.0
    %1672 = vmatprep.subr.mxu0 0.0
    %1673 = vmatpush1.msra.mxu0 0.0
    %1674 = vmatprep.subr.mxu0 0.0
    %1675 = vmatpush1.msra.mxu0 0.0
    %1676 = vmatprep.subr.mxu0 0.0
    %1677 = vmatpush1.msra.mxu0 0.0
    %1678 = vmatprep.subr.mxu0 0.0
    %1679 = vmatpush1.msra.mxu0 0.0
    %1680 = vmatprep.subr.mxu0 0.0
    %1681 = vmatpush1.msra.mxu0 0.0
    %1682 = vmatprep.subr.mxu0 0.0
    %1683 = vmatpush1.msra.mxu0 0.0
    %1684 = vmatprep.subr.mxu0 0.0
    %1685 = vmatpush1.msra.mxu0 0.0
    %1686 = vmatprep.subr.mxu0 0.0
    %1687 = vmatpush1.msra.mxu0 0.0
    %1688 = vmatprep.subr.mxu0 0.0
    %1689 = vmatpush1.msra.mxu0 0.0
    %1690 = vmatprep.subr.mxu0 0.0
    %1691 = vmatpush1.msra.mxu0 0.0
    %1692 = vmatprep.subr.mxu0 0.0
    %1693 = vmatpush1.msra.mxu0 0.0
    %1694 = vmatprep.subr.mxu0 0.0
    %1695 = vmatpush1.msra.mxu0 0.0
    %1696 = vmatprep.mubr.f32.mxu0 0.0
    %1697 = vmatmul.mubr.f32.gmra.mrb[0].mxu0 %v1485
    %v1698 = vpop.f32.mrb[0].mxu0
    %v1699 = vadd.f32 %v373, %v1698
    %v1700 = vpop.f32.mrb[0].mxu0
    %1701 = vdwg.mxu0
    %v1702 = vtanh.pop %v1699
    %s1703 = scalar_lea.vmem [#allocation2], 40
    %v1704 = vld [vmem:[%s1703] sm:$0xff]
    %v1705 = vmul.f32 %v1704, %v1702
    %v1706 = vadd.f32 %v1485, %v1705
    %s1707 = scalar_lea.vmem [#allocation3], 160
    %v1708 = vld [vmem:[%s1707] sm:$0xff]
    %v1709 = vld [vmem:[%s1707 + $0x8] sm:$0xff]
    %v1710 = vld [vmem:[%s1707 + $0x10] sm:$0xff]
    %v1711 = vld [vmem:[%s1707 + $0x18] sm:$0xff]
    %v1712 = vadd.f32 %v1708, %v1557
    %v1713 = vadd.f32 %v1709, %v1559
    %v1714 = vadd.f32 %v1710, %v1628
    %v1715 = vadd.f32 %v1711, %v1630
    %v1716 = vxor.u32 %v1712, 2147483648
    %v1717 = vmul.f32 %v1716, 1.442695
    %v1718 = vpow.pop %v1717
    %v1719 = vadd.f32 %v1718, 1.0
    %v1720 = vrcp.pop %v1719
    %v1721 = vmul.f32 1.0, %v1720
    %v1722 = vxor.u32 %v1713, 2147483648
    %v1723 = vmul.f32 %v1722, 1.442695
    %v1724 = vpow.pop %v1723
    %v1725 = vadd.f32 %v1724, 1.0
    %v1726 = vrcp.pop %v1725
    %v1727 = vmul.f32 1.0, %v1726
    %v1728 = vxor.u32 %v1714, 2147483648
    %v1729 = vmul.f32 %v1728, 1.442695
    %v1730 = vpow.pop %v1729
    %v1731 = vadd.f32 %v1730, 1.0
    %v1732 = vrcp.pop %v1731
    %v1733 = vmul.f32 1.0, %v1732
    %v1734 = vtanh.pop %v1715
    %v1735 = vmul.f32 %v1727, %v1706
    %v1736 = vmul.f32 %v1721, %v1734
    %v1737 = vadd.f32 %v1735, %v1736
    %v1738 = vtanh.pop %v1737
    %v1739 = vmul.f32 %v1733, %v1738
    %s1740 = scalar_lea.vmem [#allocation9], 40
    %1741 = vst [vmem:[%s1740] sm:$0xff] %v1739
    %1742 = vmatprep.subr.mxu0 %v146
    %1743 = vmatpush1.msra.mxu0 %v145
    %1744 = vmatprep.subr.mxu0 %v150
    %1745 = vmatpush1.msra.mxu0 %v149
    %1746 = vmatprep.subr.mxu0 %v154
    %1747 = vmatpush1.msra.mxu0 %v153
    %1748 = vmatprep.subr.mxu0 %v158
    %1749 = vmatpush1.msra.mxu0 %v157
    %1750 = vmatprep.subr.mxu0 %v162
    %1751 = vmatpush1.msra.mxu0 %v161
    %1752 = vmatprep.subr.mxu0 %v166
    %1753 = vmatpush1.msra.mxu0 %v165
    %1754 = vmatprep.subr.mxu0 %v170
    %1755 = vmatpush1.msra.mxu0 %v169
    %1756 = vmatprep.subr.mxu0 %v174
    %1757 = vmatpush1.msra.mxu0 %v173
    %1758 = vmatprep.subr.mxu0 %v178
    %1759 = vmatpush1.msra.mxu0 %v177
    %1760 = vmatprep.subr.mxu0 %v182
    %1761 = vmatpush1.msra.mxu0 %v181
    %1762 = vmatprep.subr.mxu0 %v186
    %1763 = vmatpush1.msra.mxu0 %v185
    %1764 = vmatprep.subr.mxu0 %v190
    %1765 = vmatpush1.msra.mxu0 %v189
    %1766 = vmatprep.subr.mxu0 %v194
    %1767 = vmatpush1.msra.mxu0 %v193
    %1768 = vmatprep.subr.mxu0 %v198
    %1769 = vmatpush1.msra.mxu0 %v197
    %1770 = vmatprep.subr.mxu0 %v202
    %1771 = vmatpush1.msra.mxu0 %v201
    %1772 = vmatprep.subr.mxu0 %v206
    %1773 = vmatpush1.msra.mxu0 %v205
    %1774 = vmatprep.subr.mxu0 0.0
    %1775 = vmatpush1.msra.mxu0 0.0
    %1776 = vmatprep.subr.mxu0 0.0
    %1777 = vmatpush1.msra.mxu0 0.0
    %1778 = vmatprep.subr.mxu0 0.0
    %1779 = vmatpush1.msra.mxu0 0.0
    %1780 = vmatprep.subr.mxu0 0.0
    %1781 = vmatpush1.msra.mxu0 0.0
    %1782 = vmatprep.subr.mxu0 0.0
    %1783 = vmatpush1.msra.mxu0 0.0
    %1784 = vmatprep.subr.mxu0 0.0
    %1785 = vmatpush1.msra.mxu0 0.0
    %1786 = vmatprep.subr.mxu0 0.0
    %1787 = vmatpush1.msra.mxu0 0.0
    %1788 = vmatprep.subr.mxu0 0.0
    %1789 = vmatpush1.msra.mxu0 0.0
    %1790 = vmatprep.subr.mxu0 0.0
    %1791 = vmatpush1.msra.mxu0 0.0
    %1792 = vmatprep.subr.mxu0 0.0
    %1793 = vmatpush1.msra.mxu0 0.0
    %1794 = vmatprep.subr.mxu0 0.0
    %1795 = vmatpush1.msra.mxu0 0.0
    %1796 = vmatprep.subr.mxu0 0.0
    %1797 = vmatpush1.msra.mxu0 0.0
    %1798 = vmatprep.subr.mxu0 0.0
    %1799 = vmatpush1.msra.mxu0 0.0
    %1800 = vmatprep.subr.mxu0 0.0
    %1801 = vmatpush1.msra.mxu0 0.0
    %1802 = vmatprep.subr.mxu0 0.0
    %1803 = vmatpush1.msra.mxu0 0.0
    %1804 = vmatprep.subr.mxu0 0.0
    %1805 = vmatpush1.msra.mxu0 0.0
    %1806 = vmatprep.mubr.f32.mxu0 0.0
    %1807 = vmatmul.mubr.f32.gmra.mrb[0].mxu0 %v1739
    %v1808 = vpop.f32.mrb[0].mxu0
    %v1809 = vadd.f32 0.0, %v1808
    %v1810 = vpop.f32.mrb[0].mxu0
    %v1811 = vadd.f32 0.0, %v1810
    %1812 = vdwg.mxu0
    %1813 = vmatprep.subr.mxu0 %v148
    %1814 = vmatpush1.msra.mxu0 %v147
    %1815 = vmatprep.subr.mxu0 %v152
    %1816 = vmatpush1.msra.mxu0 %v151
    %1817 = vmatprep.subr.mxu0 %v156
    %1818 = vmatpush1.msra.mxu0 %v155
    %1819 = vmatprep.subr.mxu0 %v160
    %1820 = vmatpush1.msra.mxu0 %v159
    %1821 = vmatprep.subr.mxu0 %v164
    %1822 = vmatpush1.msra.mxu0 %v163
    %1823 = vmatprep.subr.mxu0 %v168
    %1824 = vmatpush1.msra.mxu0 %v167
    %1825 = vmatprep.subr.mxu0 %v172
    %1826 = vmatpush1.msra.mxu0 %v171
    %1827 = vmatprep.subr.mxu0 %v176
    %1828 = vmatpush1.msra.mxu0 %v175
    %1829 = vmatprep.subr.mxu0 %v180
    %1830 = vmatpush1.msra.mxu0 %v179
    %1831 = vmatprep.subr.mxu0 %v184
    %1832 = vmatpush1.msra.mxu0 %v183
    %1833 = vmatprep.subr.mxu0 %v188
    %1834 = vmatpush1.msra.mxu0 %v187
    %1835 = vmatprep.subr.mxu0 %v192
    %1836 = vmatpush1.msra.mxu0 %v191
    %1837 = vmatprep.subr.mxu0 %v196
    %1838 = vmatpush1.msra.mxu0 %v195
    %1839 = vmatprep.subr.mxu0 %v200
    %1840 = vmatpush1.msra.mxu0 %v199
    %1841 = vmatprep.subr.mxu0 %v204
    %1842 = vmatpush1.msra.mxu0 %v203
    %1843 = vmatprep.subr.mxu0 %v208
    %1844 = vmatpush1.msra.mxu0 %v207
    %1845 = vmatprep.subr.mxu0 0.0
    %1846 = vmatpush1.msra.mxu0 0.0
    %1847 = vmatprep.subr.mxu0 0.0
    %1848 = vmatpush1.msra.mxu0 0.0
    %1849 = vmatprep.subr.mxu0 0.0
    %1850 = vmatpush1.msra.mxu0 0.0
    %1851 = vmatprep.subr.mxu0 0.0
    %1852 = vmatpush1.msra.mxu0 0.0
    %1853 = vmatprep.subr.mxu0 0.0
    %1854 = vmatpush1.msra.mxu0 0.0
    %1855 = vmatprep.subr.mxu0 0.0
    %1856 = vmatpush1.msra.mxu0 0.0
    %1857 = vmatprep.subr.mxu0 0.0
    %1858 = vmatpush1.msra.mxu0 0.0
    %1859 = vmatprep.subr.mxu0 0.0
    %1860 = vmatpush1.msra.mxu0 0.0
    %1861 = vmatprep.subr.mxu0 0.0
    %1862 = vmatpush1.msra.mxu0 0.0
    %1863 = vmatprep.subr.mxu0 0.0
    %1864 = vmatpush1.msra.mxu0 0.0
    %1865 = vmatprep.subr.mxu0 0.0
    %1866 = vmatpush1.msra.mxu0 0.0
    %1867 = vmatprep.subr.mxu0 0.0
    %1868 = vmatpush1.msra.mxu0 0.0
    %1869 = vmatprep.subr.mxu0 0.0
    %1870 = vmatpush1.msra.mxu0 0.0
    %1871 = vmatprep.subr.mxu0 0.0
    %1872 = vmatpush1.msra.mxu0 0.0
    %1873 = vmatprep.subr.mxu0 0.0
    %1874 = vmatpush1.msra.mxu0 0.0
    %1875 = vmatprep.subr.mxu0 0.0
    %1876 = vmatpush1.msra.mxu0 0.0
    %1877 = vmatprep.mubr.f32.mxu0 0.0
    %1878 = vmatmul.mubr.f32.gmra.mrb[0].mxu0 %v1739
    %v1879 = vpop.f32.mrb[0].mxu0
    %v1880 = vadd.f32 0.0, %v1879
    %v1881 = vpop.f32.mrb[0].mxu0
    %v1882 = vadd.f32 0.0, %v1881
    %1883 = vdwg.mxu0
    %1884 = vmatprep.subr.mxu0 0.0
    %1885 = vmatpush1.msra.mxu0 %v209
    %1886 = vmatprep.subr.mxu0 0.0
    %1887 = vmatpush1.msra.mxu0 %v210
    %1888 = vmatprep.subr.mxu0 0.0
    %1889 = vmatpush1.msra.mxu0 %v211
    %1890 = vmatprep.subr.mxu0 0.0
    %1891 = vmatpush1.msra.mxu0 %v212
    %1892 = vmatprep.subr.mxu0 0.0
    %1893 = vmatpush1.msra.mxu0 %v213
    %1894 = vmatprep.subr.mxu0 0.0
    %1895 = vmatpush1.msra.mxu0 %v214
    %1896 = vmatprep.subr.mxu0 0.0
    %1897 = vmatpush1.msra.mxu0 %v215
    %1898 = vmatprep.subr.mxu0 0.0
    %1899 = vmatpush1.msra.mxu0 %v216
    %1900 = vmatprep.subr.mxu0 0.0
    %1901 = vmatpush1.msra.mxu0 %v217
    %1902 = vmatprep.subr.mxu0 0.0
    %1903 = vmatpush1.msra.mxu0 %v218
    %1904 = vmatprep.subr.mxu0 0.0
    %1905 = vmatpush1.msra.mxu0 %v219
    %1906 = vmatprep.subr.mxu0 0.0
    %1907 = vmatpush1.msra.mxu0 %v220
    %1908 = vmatprep.subr.mxu0 0.0
    %1909 = vmatpush1.msra.mxu0 %v221
    %1910 = vmatprep.subr.mxu0 0.0
    %1911 = vmatpush1.msra.mxu0 %v222
    %1912 = vmatprep.subr.mxu0 0.0
    %1913 = vmatpush1.msra.mxu0 %v223
    %1914 = vmatprep.subr.mxu0 0.0
    %1915 = vmatpush1.msra.mxu0 %v224
    %1916 = vmatprep.subr.mxu0 0.0
    %1917 = vmatpush1.msra.mxu0 0.0
    %1918 = vmatprep.subr.mxu0 0.0
    %1919 = vmatpush1.msra.mxu0 0.0
    %1920 = vmatprep.subr.mxu0 0.0
    %1921 = vmatpush1.msra.mxu0 0.0
    %1922 = vmatprep.subr.mxu0 0.0
    %1923 = vmatpush1.msra.mxu0 0.0
    %1924 = vmatprep.subr.mxu0 0.0
    %1925 = vmatpush1.msra.mxu0 0.0
    %1926 = vmatprep.subr.mxu0 0.0
    %1927 = vmatpush1.msra.mxu0 0.0
    %1928 = vmatprep.subr.mxu0 0.0
    %1929 = vmatpush1.msra.mxu0 0.0
    %1930 = vmatprep.subr.mxu0 0.0
    %1931 = vmatpush1.msra.mxu0 0.0
    %1932 = vmatprep.subr.mxu0 0.0
    %1933 = vmatpush1.msra.mxu0 0.0
    %1934 = vmatprep.subr.mxu0 0.0
    %1935 = vmatpush1.msra.mxu0 0.0
    %1936 = vmatprep.subr.mxu0 0.0
    %1937 = vmatpush1.msra.mxu0 0.0
    %1938 = vmatprep.subr.mxu0 0.0
    %1939 = vmatpush1.msra.mxu0 0.0
    %1940 = vmatprep.subr.mxu0 0.0
    %1941 = vmatpush1.msra.mxu0 0.0
    %1942 = vmatprep.subr.mxu0 0.0
    %1943 = vmatpush1.msra.mxu0 0.0
    %1944 = vmatprep.subr.mxu0 0.0
    %1945 = vmatpush1.msra.mxu0 0.0
    %1946 = vmatprep.subr.mxu0 0.0
    %1947 = vmatpush1.msra.mxu0 0.0
    %1948 = vmatprep.mubr.f32.mxu0 0.0
    %1949 = vmatmul.mubr.f32.gmra.mrb[0].mxu0 %v1737
    %v1950 = vpop.f32.mrb[0].mxu0
    %v1951 = vadd.f32 %v373, %v1950
    %v1952 = vpop.f32.mrb[0].mxu0
    %1953 = vdwg.mxu0
    %v1954 = vtanh.pop %v1951
    %s1955 = scalar_lea.vmem [#allocation2], 48
    %v1956 = vld [vmem:[%s1955] sm:$0xff]
    %v1957 = vmul.f32 %v1956, %v1954
    %v1958 = vadd.f32 %v1737, %v1957
    %s1959 = scalar_lea.vmem [#allocation3], 192
    %v1960 = vld [vmem:[%s1959] sm:$0xff]
    %v1961 = vld [vmem:[%s1959 + $0x8] sm:$0xff]
    %v1962 = vld [vmem:[%s1959 + $0x10] sm:$0xff]
    %v1963 = vld [vmem:[%s1959 + $0x18] sm:$0xff]
    %v1964 = vadd.f32 %v1960, %v1809
    %v1965 = vadd.f32 %v1961, %v1811
    %v1966 = vadd.f32 %v1962, %v1880
    %v1967 = vadd.f32 %v1963, %v1882
    %v1968 = vxor.u32 %v1964, 2147483648
    %v1969 = vmul.f32 %v1968, 1.442695
    %v1970 = vpow.pop %v1969
    %v1971 = vadd.f32 %v1970, 1.0
    %v1972 = vrcp.pop %v1971
    %v1973 = vmul.f32 1.0, %v1972
    %v1974 = vxor.u32 %v1965, 2147483648
    %v1975 = vmul.f32 %v1974, 1.442695
    %v1976 = vpow.pop %v1975
    %v1977 = vadd.f32 %v1976, 1.0
    %v1978 = vrcp.pop %v1977
    %v1979 = vmul.f32 1.0, %v1978
    %v1980 = vxor.u32 %v1966, 2147483648
    %v1981 = vmul.f32 %v1980, 1.442695
    %v1982 = vpow.pop %v1981
    %v1983 = vadd.f32 %v1982, 1.0
    %v1984 = vrcp.pop %v1983
    %v1985 = vmul.f32 1.0, %v1984
    %v1986 = vtanh.pop %v1967
    %v1987 = vmul.f32 %v1979, %v1958
    %v1988 = vmul.f32 %v1973, %v1986
    %v1989 = vadd.f32 %v1987, %v1988
    %v1990 = vtanh.pop %v1989
    %v1991 = vmul.f32 %v1985, %v1990
    %s1992 = scalar_lea.vmem [#allocation9], 48
    %1993 = vst [vmem:[%s1992] sm:$0xff] %v1991
    %1994 = vmatprep.subr.mxu0 %v146
    %1995 = vmatpush1.msra.mxu0 %v145
    %1996 = vmatprep.subr.mxu0 %v150
    %1997 = vmatpush1.msra.mxu0 %v149
    %1998 = vmatprep.subr.mxu0 %v154
    %1999 = vmatpush1.msra.mxu0 %v153
    %2000 = vmatprep.subr.mxu0 %v158
    %2001 = vmatpush1.msra.mxu0 %v157
    %2002 = vmatprep.subr.mxu0 %v162
    %2003 = vmatpush1.msra.mxu0 %v161
    %2004 = vmatprep.subr.mxu0 %v166
    %2005 = vmatpush1.msra.mxu0 %v165
    %2006 = vmatprep.subr.mxu0 %v170
    %2007 = vmatpush1.msra.mxu0 %v169
    %2008 = vmatprep.subr.mxu0 %v174
    %2009 = vmatpush1.msra.mxu0 %v173
    %2010 = vmatprep.subr.mxu0 %v178
    %2011 = vmatpush1.msra.mxu0 %v177
    %2012 = vmatprep.subr.mxu0 %v182
    %2013 = vmatpush1.msra.mxu0 %v181
    %2014 = vmatprep.subr.mxu0 %v186
    %2015 = vmatpush1.msra.mxu0 %v185
    %2016 = vmatprep.subr.mxu0 %v190
    %2017 = vmatpush1.msra.mxu0 %v189
    %2018 = vmatprep.subr.mxu0 %v194
    %2019 = vmatpush1.msra.mxu0 %v193
    %2020 = vmatprep.subr.mxu0 %v198
    %2021 = vmatpush1.msra.mxu0 %v197
    %2022 = vmatprep.subr.mxu0 %v202
    %2023 = vmatpush1.msra.mxu0 %v201
    %2024 = vmatprep.subr.mxu0 %v206
    %2025 = vmatpush1.msra.mxu0 %v205
    %2026 = vmatprep.subr.mxu0 0.0
    %2027 = vmatpush1.msra.mxu0 0.0
    %2028 = vmatprep.subr.mxu0 0.0
    %2029 = vmatpush1.msra.mxu0 0.0
    %2030 = vmatprep.subr.mxu0 0.0
    %2031 = vmatpush1.msra.mxu0 0.0
    %2032 = vmatprep.subr.mxu0 0.0
    %2033 = vmatpush1.msra.mxu0 0.0
    %2034 = vmatprep.subr.mxu0 0.0
    %2035 = vmatpush1.msra.mxu0 0.0
    %2036 = vmatprep.subr.mxu0 0.0
    %2037 = vmatpush1.msra.mxu0 0.0
    %2038 = vmatprep.subr.mxu0 0.0
    %2039 = vmatpush1.msra.mxu0 0.0
    %2040 = vmatprep.subr.mxu0 0.0
    %2041 = vmatpush1.msra.mxu0 0.0
    %2042 = vmatprep.subr.mxu0 0.0
    %2043 = vmatpush1.msra.mxu0 0.0
    %2044 = vmatprep.subr.mxu0 0.0
    %2045 = vmatpush1.msra.mxu0 0.0
    %2046 = vmatprep.subr.mxu0 0.0
    %2047 = vmatpush1.msra.mxu0 0.0
    %2048 = vmatprep.subr.mxu0 0.0
    %2049 = vmatpush1.msra.mxu0 0.0
    %2050 = vmatprep.subr.mxu0 0.0
    %2051 = vmatpush1.msra.mxu0 0.0
    %2052 = vmatprep.subr.mxu0 0.0
    %2053 = vmatpush1.msra.mxu0 0.0
    %2054 = vmatprep.subr.mxu0 0.0
    %2055 = vmatpush1.msra.mxu0 0.0
    %2056 = vmatprep.subr.mxu0 0.0
    %2057 = vmatpush1.msra.mxu0 0.0
    %2058 = vmatprep.mubr.f32.mxu0 0.0
    %2059 = vmatmul.mubr.f32.gmra.mrb[0].mxu0 %v1991
    %v2060 = vpop.f32.mrb[0].mxu0
    %v2061 = vadd.f32 0.0, %v2060
    %v2062 = vpop.f32.mrb[0].mxu0
    %v2063 = vadd.f32 0.0, %v2062
    %2064 = vdwg.mxu0
    %2065 = vmatprep.subr.mxu0 %v148
    %2066 = vmatpush1.msra.mxu0 %v147
    %2067 = vmatprep.subr.mxu0 %v152
    %2068 = vmatpush1.msra.mxu0 %v151
    %2069 = vmatprep.subr.mxu0 %v156
    %2070 = vmatpush1.msra.mxu0 %v155
    %2071 = vmatprep.subr.mxu0 %v160
    %2072 = vmatpush1.msra.mxu0 %v159
    %2073 = vmatprep.subr.mxu0 %v164
    %2074 = vmatpush1.msra.mxu0 %v163
    %2075 = vmatprep.subr.mxu0 %v168
    %2076 = vmatpush1.msra.mxu0 %v167
    %2077 = vmatprep.subr.mxu0 %v172
    %2078 = vmatpush1.msra.mxu0 %v171
    %2079 = vmatprep.subr.mxu0 %v176
    %2080 = vmatpush1.msra.mxu0 %v175
    %2081 = vmatprep.subr.mxu0 %v180
    %2082 = vmatpush1.msra.mxu0 %v179
    %2083 = vmatprep.subr.mxu0 %v184
    %2084 = vmatpush1.msra.mxu0 %v183
    %2085 = vmatprep.subr.mxu0 %v188
    %2086 = vmatpush1.msra.mxu0 %v187
    %2087 = vmatprep.subr.mxu0 %v192
    %2088 = vmatpush1.msra.mxu0 %v191
    %2089 = vmatprep.subr.mxu0 %v196
    %2090 = vmatpush1.msra.mxu0 %v195
    %2091 = vmatprep.subr.mxu0 %v200
    %2092 = vmatpush1.msra.mxu0 %v199
    %2093 = vmatprep.subr.mxu0 %v204
    %2094 = vmatpush1.msra.mxu0 %v203
    %2095 = vmatprep.subr.mxu0 %v208
    %2096 = vmatpush1.msra.mxu0 %v207
    %2097 = vmatprep.subr.mxu0 0.0
    %2098 = vmatpush1.msra.mxu0 0.0
    %2099 = vmatprep.subr.mxu0 0.0
    %2100 = vmatpush1.msra.mxu0 0.0
    %2101 = vmatprep.subr.mxu0 0.0
    %2102 = vmatpush1.msra.mxu0 0.0
    %2103 = vmatprep.subr.mxu0 0.0
    %2104 = vmatpush1.msra.mxu0 0.0
    %2105 = vmatprep.subr.mxu0 0.0
    %2106 = vmatpush1.msra.mxu0 0.0
    %2107 = vmatprep.subr.mxu0 0.0
    %2108 = vmatpush1.msra.mxu0 0.0
    %2109 = vmatprep.subr.mxu0 0.0
    %2110 = vmatpush1.msra.mxu0 0.0
    %2111 = vmatprep.subr.mxu0 0.0
    %2112 = vmatpush1.msra.mxu0 0.0
    %2113 = vmatprep.subr.mxu0 0.0
    %2114 = vmatpush1.msra.mxu0 0.0
    %2115 = vmatprep.subr.mxu0 0.0
    %2116 = vmatpush1.msra.mxu0 0.0
    %2117 = vmatprep.subr.mxu0 0.0
    %2118 = vmatpush1.msra.mxu0 0.0
    %2119 = vmatprep.subr.mxu0 0.0
    %2120 = vmatpush1.msra.mxu0 0.0
    %2121 = vmatprep.subr.mxu0 0.0
    %2122 = vmatpush1.msra.mxu0 0.0
    %2123 = vmatprep.subr.mxu0 0.0
    %2124 = vmatpush1.msra.mxu0 0.0
    %2125 = vmatprep.subr.mxu0 0.0
    %2126 = vmatpush1.msra.mxu0 0.0
    %2127 = vmatprep.subr.mxu0 0.0
    %2128 = vmatpush1.msra.mxu0 0.0
    %2129 = vmatprep.mubr.f32.mxu0 0.0
    %2130 = vmatmul.mubr.f32.gmra.mrb[0].mxu0 %v1991
    %v2131 = vpop.f32.mrb[0].mxu0
    %v2132 = vadd.f32 0.0, %v2131
    %v2133 = vpop.f32.mrb[0].mxu0
    %v2134 = vadd.f32 0.0, %v2133
    %2135 = vdwg.mxu0
    %2136 = vmatprep.subr.mxu0 0.0
    %2137 = vmatpush1.msra.mxu0 %v209
    %2138 = vmatprep.subr.mxu0 0.0
    %2139 = vmatpush1.msra.mxu0 %v210
    %2140 = vmatprep.subr.mxu0 0.0
    %2141 = vmatpush1.msra.mxu0 %v211
    %2142 = vmatprep.subr.mxu0 0.0
    %2143 = vmatpush1.msra.mxu0 %v212
    %2144 = vmatprep.subr.mxu0 0.0
    %2145 = vmatpush1.msra.mxu0 %v213
    %2146 = vmatprep.subr.mxu0 0.0
    %2147 = vmatpush1.msra.mxu0 %v214
    %2148 = vmatprep.subr.mxu0 0.0
    %2149 = vmatpush1.msra.mxu0 %v215
    %2150 = vmatprep.subr.mxu0 0.0
    %2151 = vmatpush1.msra.mxu0 %v216
    %2152 = vmatprep.subr.mxu0 0.0
    %2153 = vmatpush1.msra.mxu0 %v217
    %2154 = vmatprep.subr.mxu0 0.0
    %2155 = vmatpush1.msra.mxu0 %v218
    %2156 = vmatprep.subr.mxu0 0.0
    %2157 = vmatpush1.msra.mxu0 %v219
    %2158 = vmatprep.subr.mxu0 0.0
    %2159 = vmatpush1.msra.mxu0 %v220
    %2160 = vmatprep.subr.mxu0 0.0
    %2161 = vmatpush1.msra.mxu0 %v221
    %2162 = vmatprep.subr.mxu0 0.0
    %2163 = vmatpush1.msra.mxu0 %v222
    %2164 = vmatprep.subr.mxu0 0.0
    %2165 = vmatpush1.msra.mxu0 %v223
    %2166 = vmatprep.subr.mxu0 0.0
    %2167 = vmatpush1.msra.mxu0 %v224
    %2168 = vmatprep.subr.mxu0 0.0
    %2169 = vmatpush1.msra.mxu0 0.0
    %2170 = vmatprep.subr.mxu0 0.0
    %2171 = vmatpush1.msra.mxu0 0.0
    %2172 = vmatprep.subr.mxu0 0.0
    %2173 = vmatpush1.msra.mxu0 0.0
    %2174 = vmatprep.subr.mxu0 0.0
    %2175 = vmatpush1.msra.mxu0 0.0
    %2176 = vmatprep.subr.mxu0 0.0
    %2177 = vmatpush1.msra.mxu0 0.0
    %2178 = vmatprep.subr.mxu0 0.0
    %2179 = vmatpush1.msra.mxu0 0.0
    %2180 = vmatprep.subr.mxu0 0.0
    %2181 = vmatpush1.msra.mxu0 0.0
    %2182 = vmatprep.subr.mxu0 0.0
    %2183 = vmatpush1.msra.mxu0 0.0
    %2184 = vmatprep.subr.mxu0 0.0
    %2185 = vmatpush1.msra.mxu0 0.0
    %2186 = vmatprep.subr.mxu0 0.0
    %2187 = vmatpush1.msra.mxu0 0.0
    %2188 = vmatprep.subr.mxu0 0.0
    %2189 = vmatpush1.msra.mxu0 0.0
    %2190 = vmatprep.subr.mxu0 0.0
    %2191 = vmatpush1.msra.mxu0 0.0
    %2192 = vmatprep.subr.mxu0 0.0
    %2193 = vmatpush1.msra.mxu0 0.0
    %2194 = vmatprep.subr.mxu0 0.0
    %2195 = vmatpush1.msra.mxu0 0.0
    %2196 = vmatprep.subr.mxu0 0.0
    %2197 = vmatpush1.msra.mxu0 0.0
    %2198 = vmatprep.subr.mxu0 0.0
    %2199 = vmatpush1.msra.mxu0 0.0
    %2200 = vmatprep.mubr.f32.mxu0 0.0
    %2201 = vmatmul.mubr.f32.gmra.mrb[0].mxu0 %v1989
    %v2202 = vpop.f32.mrb[0].mxu0
    %v2203 = vadd.f32 %v373, %v2202
    %v2204 = vpop.f32.mrb[0].mxu0
    %2205 = vdwg.mxu0
    %v2206 = vtanh.pop %v2203
    %s2207 = scalar_lea.vmem [#allocation2], 56
    %v2208 = vld [vmem:[%s2207] sm:$0xff]
    %v2209 = vmul.f32 %v2208, %v2206
    %v2210 = vadd.f32 %v1989, %v2209
    %s2211 = scalar_lea.vmem [#allocation3], 224
    %v2212 = vld [vmem:[%s2211] sm:$0xff]
    %v2213 = vld [vmem:[%s2211 + $0x8] sm:$0xff]
    %v2214 = vld [vmem:[%s2211 + $0x10] sm:$0xff]
    %v2215 = vld [vmem:[%s2211 + $0x18] sm:$0xff]
    %v2216 = vadd.f32 %v2212, %v2061
    %v2217 = vadd.f32 %v2213, %v2063
    %v2218 = vadd.f32 %v2214, %v2132
    %v2219 = vadd.f32 %v2215, %v2134
    %v2220 = vxor.u32 %v2216, 2147483648
    %v2221 = vmul.f32 %v2220, 1.442695
    %v2222 = vpow.pop %v2221
    %v2223 = vadd.f32 %v2222, 1.0
    %v2224 = vrcp.pop %v2223
    %v2225 = vmul.f32 1.0, %v2224
    %v2226 = vxor.u32 %v2217, 2147483648
    %v2227 = vmul.f32 %v2226, 1.442695
    %v2228 = vpow.pop %v2227
    %v2229 = vadd.f32 %v2228, 1.0
    %v2230 = vrcp.pop %v2229
    %v2231 = vmul.f32 1.0, %v2230
    %v2232 = vxor.u32 %v2218, 2147483648
    %v2233 = vmul.f32 %v2232, 1.442695
    %v2234 = vpow.pop %v2233
    %v2235 = vadd.f32 %v2234, 1.0
    %v2236 = vrcp.pop %v2235
    %v2237 = vmul.f32 1.0, %v2236
    %v2238 = vtanh.pop %v2219
    %v2239 = vmul.f32 %v2231, %v2210
    %v2240 = vmul.f32 %v2225, %v2238
    %v2241 = vadd.f32 %v2239, %v2240
    %v2242 = vtanh.pop %v2241
    %v2243 = vmul.f32 %v2237, %v2242
    %s2244 = scalar_lea.vmem [#allocation9], 56
    %2245 = vst [vmem:[%s2244] sm:$0xff] %v2243
    %2246 = vst [vmem:[#allocation10] sm:$0xff] %v2243
    %2247 = vst [vmem:[#allocation12] sm:$0xff] %v2241
    // Predicated region
    $region46: #{tpu_custom_call.1} parent=1 // pred_check
      _
    $region47: #{tpu_custom_call.1} parent=1 // pred_check_branch
      %2249 = sbr.rel (0) target = $region49
    $region48: #{tpu_custom_call.1} parent=1 // pred_region
      %s2251 = ssub.s32 1024, 1024
      %2252 = vsyncadd [#allocation5], %s2251
      %s2253 = sshll.u32 [#allocation9], 4
      %s2254 = int_to_ptr.vmem [resolvable:$true] %s2253
      %2259 = dma.vmem_to_hbm [thread:$0]  %s2254, 1024, %s7, [#allocation5], 128, 128, 8
    $region49: #{tpu_custom_call.1} parent=1 // pred_fallthru
      _
    // Predicated region
    $region50: #{tpu_custom_call.1} parent=1 // pred_check
      _
    $region51: #{tpu_custom_call.1} parent=1 // pred_check_branch
      %2261 = sbr.rel (0) target = $region53
    $region52: #{tpu_custom_call.1} parent=1 // pred_region
      %s2263 = ssub.s32 128, 128
      %2264 = vsyncadd [#allocation11], %s2263
      %s2266 = sshll.u32 [#allocation10], 4
      %s2267 = int_to_ptr.vmem [resolvable:$true] %s2266
      %2269 = dma.vmem_to_hbm [thread:$0]  %s2267, 128, %s8, [#allocation11]
    $region53: #{tpu_custom_call.1} parent=1 // pred_fallthru
      _
    // Predicated region
    $region54: #{tpu_custom_call.1} parent=1 // pred_check
      _
    $region55: #{tpu_custom_call.1} parent=1 // pred_check_branch
      %2271 = sbr.rel (0) target = $region57
    $region56: #{tpu_custom_call.1} parent=1 // pred_region
      %s2273 = ssub.s32 128, 128
      %2274 = vsyncadd [#allocation11], %s2273
      %s2276 = sshll.u32 [#allocation12], 4
      %s2277 = int_to_ptr.vmem [resolvable:$true] %s2276
      %2279 = dma.vmem_to_hbm [thread:$0]  %s2277, 128, %s9, [#allocation11]
    $region57: #{tpu_custom_call.1} parent=1 // pred_fallthru
      _
    // Predicated region
    $region58: #{tpu_custom_call.1} parent=1 // pred_check
      _
    $region59: #{tpu_custom_call.1} parent=1 // pred_check_branch
      %2281 = sbr.rel (0) target = $region61
    $region60: #{tpu_custom_call.1} parent=1 // pred_region
      %2282 = dma.done [#allocation5], 1024
    $region61: #{tpu_custom_call.1} parent=1 // pred_fallthru
      _
    // Predicated region
    $region62: #{tpu_custom_call.1} parent=1 // pred_check
      _
    $region63: #{tpu_custom_call.1} parent=1 // pred_check_branch
      %2284 = sbr.rel (0) target = $region65
    $region64: #{tpu_custom_call.1} parent=1 // pred_region
      %2285 = dma.done [#allocation11], 128
    $region65: #{tpu_custom_call.1} parent=1 // pred_fallthru
      _
    // Predicated region
    $region66: #{tpu_custom_call.1} parent=1 // pred_check
      _
    $region67: #{tpu_custom_call.1} parent=1 // pred_check_branch
      %2287 = sbr.rel (0) target = $region69
    $region68: #{tpu_custom_call.1} parent=1 // pred_region
      %2288 = dma.done [#allocation11], 128
    $region69: #{tpu_custom_call.1} parent=1 // pred_fallthru
      _
    %2289 = vsyncpa [#allocation4], 1
    %2290 = vsyncpa [#allocation7], 1
    %2291 = vsyncpa [#allocation5], 1
    %2292 = vsyncpa [#allocation11], 1

</llo_original>
